<compile_context>
chip_gen: v5e
topology: v5e:2x2
jax: 0.10.0
libtpu: 0.0.40
codegen_flags: <defaults>
</compile_context>

<pallas_src>
import functools

import jax
import jax.numpy as jnp
from jax.experimental import pallas as pl
from jax.experimental.pallas import tpu as pltpu

_VMEM_LIMIT = 32 * 1024 * 1024
_PAD = 32          # flat-layout halo for the 3x3 convs (needs >= W + 1)
_SEG = 32          # lane width of one packed attention-gate segment
_GK = 7            # attention-gate kernel size


# ---------------------------------------------------------------------------
# Fused kernel: conv3x3+BN+ReLU -> conv3x3+BN -> TripletAttention -> +x -> ReLU
# ---------------------------------------------------------------------------
def _fused_block_kernel(x_ref, mask_ref, wconv_ref, bconv_ref, gw_ref,
                        gshift_ref, o_ref, fp_ref, gbuf_ref, *, H, W, C):
    # x_ref / o_ref : (C, H*W)  one batch element, lane-dense flat layout
    # mask_ref      : (2, H*W)  [w!=0 mask, w!=W-1 mask] for column wrap-around
    # wconv_ref     : (2, C, 9*C)  folded 3x3 weights, col = (ky*3+kx)*C + ci
    # bconv_ref     : (2, C, 1)    folded conv-bias + BN shift
    # gw_ref        : (49, 2, 1, 3*_SEG) packed 7x7 gate taps [hw | cw | hc^T]
    # gshift_ref    : (1, 3*_SEG)  packed folded gate BN shifts
    # fp_ref        : VMEM (C, 2*_PAD + H*W) padded flat conv scratch
    # gbuf_ref      : VMEM (2, H+6, 4*_SEG)  packed padded ZPool maps
    HW = H * W
    GWID = 3 * _SEG

    x = x_ref[...]                         # (C, HW) lane-dense load
    mask_l = mask_ref[0:1, :]              # zero where w == 0
    mask_r = mask_ref[1:2, :]              # zero where w == W-1

    # Zero the conv halo once per step; both convs rewrite only the interior.
    fp_ref[...] = jnp.zeros(fp_ref.shape, jnp.float32)

    def conv3x3_bn(src, layer, relu):
        # 3x3 / stride-1 / pad-1 conv with folded BN as lane-dense VPU FMAs
        # in the flat (C, H*W) layout; register accumulation, single result.
        fp_ref[:, _PAD:_PAD + HW] = src
        wmat = wconv_ref[layer]                              # (Cout, 9*Cin)
        acc = jnp.zeros((C, HW), jnp.float32)
        for ky in range(3):
            for kx in range(3):
                off = (ky - 1) * W + (kx - 1)
                win = fp_ref[:, _PAD + off:_PAD + off + HW]  # (Cin, HW)
                if kx == 0:
                    win = win * mask_l
                elif kx == 2:
                    win = win * mask_r
                t = ky * 3 + kx
                for ci in range(C):
                    wcol = wmat[:, t * C + ci:t * C + ci + 1]     # (Cout, 1)
                    acc = acc + wcol * win[ci:ci + 1, :]          # outer-prod FMA
        y = acc + bconv_ref[layer]                           # (Cout, 1) bcast
        if relu:
            y = jnp.maximum(y, 0.0)
        return y

    y1 = conv3x3_bn(x, 0, relu=True)       # branch2a
    y2 = conv3x3_bn(y1, 1, relu=False)     # branch2b

    # ---- TripletAttention: ZPool along C / H / W + packed 7x7 gate convs ----
    y2_3d = y2.reshape(C, H, W)
    p_hw_max, p_hw_mean = jnp.max(y2_3d, axis=0), jnp.mean(y2_3d, axis=0)  # (H,W)
    p_cw_max, p_cw_mean = jnp.max(y2_3d, axis=1), jnp.mean(y2_3d, axis=1)  # (C,W)
    p_hc_max, p_hc_mean = jnp.max(y2_3d, axis=2), jnp.mean(y2_3d, axis=2)  # (C,H) = hc map transposed

    gbuf_ref[...] = jnp.zeros(gbuf_ref.shape, jnp.float32)
    gbuf_ref[0:1, 3:3 + H, 3:3 + W] = p_hw_max[None]
    gbuf_ref[1:2, 3:3 + H, 3:3 + W] = p_hw_mean[None]
    gbuf_ref[0:1, 3:3 + C, _SEG + 3:_SEG + 3 + W] = p_cw_max[None]
    gbuf_ref[1:2, 3:3 + C, _SEG + 3:_SEG + 3 + W] = p_cw_mean[None]
    gbuf_ref[0:1, 3:3 + C, 2 * _SEG + 3:2 * _SEG + 3 + H] = p_hc_max[None]
    gbuf_ref[1:2, 3:3 + C, 2 * _SEG + 3:2 * _SEG + 3 + H] = p_hc_mean[None]

    # 49 taps computing all three gates at once on a packed 96-lane operand.
    gacc = jnp.zeros((2, H, GWID), jnp.float32)
    for kh in range(_GK):
        for kw in range(_GK):
            win = gbuf_ref[:, kh:kh + H, kw:kw + GWID]       # (2, H, 96)
            gacc = gacc + win * gw_ref[kh * _GK + kw]        # (2, 1, 96) bcast
    z = gacc[0] + gacc[1] + gshift_ref[...]                  # (H, 96)
    s = pl.reciprocal(1.0 + jnp.exp(-z), approx=True)        # sigmoid (EUP)

    s_hw = s[0:H, 0:W]                      # gate over (H, W)
    s_cw = s[0:C, _SEG:_SEG + W]            # gate over (C, W)
    s_hc = s[0:C, 2 * _SEG:2 * _SEG + H]    # gate over (H, C), stored as (C, H)

    # out = relu( y2 * (s_hw + s_cw + s_hc)/3 + shortcut )
    gsum = s_hw[None, :, :] + s_cw[:, None, :] + s_hc[:, :, None]   # (C, H, W)
    out = jnp.maximum(y2 * gsum.reshape(C, HW) * (1.0 / 3.0) + x, 0.0)
    o_ref[...] = out


# ---------------------------------------------------------------------------
# Host-side BN folding / weight packing + pallas_call wrapper
# ---------------------------------------------------------------------------
def _fold_conv_bn(p, eps=1e-5):
    scale = p['gamma'] / jnp.sqrt(p['var'] + eps)               # (Cout,)
    w = p['w'] * scale[:, None, None, None]                     # (Cout,Cin,3,3)
    b = (p['b'] - p['mean']) * scale + p['beta']                # (Cout,)
    return w, b


def _fold_gate_bn(p, eps=1e-5):
    scale = p['gamma'] / jnp.sqrt(p['var'] + eps)               # (1,)
    w = p['w'][0] * scale[0]                                    # (2,7,7)
    shift = (p['beta'] - p['mean'] * scale)[0]                  # scalar
    return w, shift


def basic_block_triplet_attention(x_nchw, params, eps=1e-5):
    n, c, h, w = x_nchw.shape
    hw = h * w
    assert hw % 128 == 0, "flattened spatial dim must be lane-aligned"
    assert w + 1 <= _PAD and max(h, w, c) + _GK - 1 <= _SEG and c <= h

    # ---- fold inference-mode BN into the 3x3 convs (host side) ----
    w2a, b2a = _fold_conv_bn(params['branch2a'], eps)
    w2b, b2b = _fold_conv_bn(params['branch2b'], eps)

    def pack3x3(wf):    # (Cout,Cin,3,3) -> (Cout, 9*Cin), col = (ky*3+kx)*Cin+ci
        return jnp.transpose(wf, (0, 2, 3, 1)).reshape(c, 9 * c)

    wconv = jnp.stack([pack3x3(w2a), pack3x3(w2b)]).astype(jnp.float32)   # (2,C,9C)
    bconv = jnp.stack([b2a, b2b]).reshape(2, c, 1).astype(jnp.float32)    # (2,C,1)

    # ---- fold + pack the three 7x7 gate convs along the lane axis ----
    g_hw, sh_hw = _fold_gate_bn(params['hw'], eps)
    g_cw, sh_cw = _fold_gate_bn(params['cw'], eps)
    g_hc, sh_hc = _fold_gate_bn(params['hc'], eps)
    hw_taps = jnp.transpose(g_hw, (1, 2, 0)).reshape(_GK * _GK, 2)   # [kh*7+kw, ic]
    cw_taps = jnp.transpose(g_cw, (1, 2, 0)).reshape(_GK * _GK, 2)
    hc_taps = jnp.transpose(g_hc, (2, 1, 0)).reshape(_GK * _GK, 2)   # kh<->kw (transposed map)
    gw = jnp.concatenate(
        [jnp.broadcast_to(t[:, :, None, None], (_GK * _GK, 2, 1, _SEG))
         for t in (hw_taps, cw_taps, hc_taps)], axis=-1).astype(jnp.float32)  # (49,2,1,96)
    gshift = jnp.concatenate(
        [jnp.full((1, _SEG), v, jnp.float32) for v in (sh_hw, sh_cw, sh_hc)],
        axis=-1)                                                              # (1,96)

    # lane masks for the flattened 3x3 shifts (column wrap-around control)
    wcoord = jnp.arange(hw, dtype=jnp.int32) % w
    masks = jnp.stack([(wcoord != 0), (wcoord != w - 1)]).astype(jnp.float32)  # (2,HW)

    x_flat = x_nchw.reshape(n, c, hw).astype(jnp.float32)

    kernel = functools.partial(_fused_block_kernel, H=h, W=w, C=c)
    cost = pl.CostEstimate(
        flops=n * (2 * 2 * 9 * c * c * hw            # two 3x3 convs
                   + 2 * 2 * _GK * _GK * h * 3 * _SEG  # packed gate convs
                   + 8 * c * hw),                     # pools + combine
        transcendentals=n * h * 3 * _SEG,
        bytes_accessed=4 * (2 * n * c * hw + wconv.size + bconv.size
                            + gw.size + gshift.size + masks.size))

    out_flat = pl.pallas_call(
        kernel,
        out_shape=jax.ShapeDtypeStruct((n, c, hw), jnp.float32),
        grid=(n,),
        in_specs=[
            pl.BlockSpec((None, c, hw), lambda i: (i, 0, 0)),
            pl.BlockSpec((2, hw), lambda i: (0, 0)),
            pl.BlockSpec((2, c, 9 * c), lambda i: (0, 0, 0)),
            pl.BlockSpec((2, c, 1), lambda i: (0, 0, 0)),
            pl.BlockSpec((_GK * _GK, 2, 1, 3 * _SEG), lambda i: (0, 0, 0, 0)),
            pl.BlockSpec((1, 3 * _SEG), lambda i: (0, 0)),
        ],
        out_specs=pl.BlockSpec((None, c, hw), lambda i: (i, 0, 0)),
        scratch_shapes=[
            pltpu.VMEM((c, 2 * _PAD + hw), jnp.float32),        # padded flat conv input
            pltpu.VMEM((2, h + _GK - 1, 4 * _SEG), jnp.float32) # packed padded ZPool maps
        ],
        compiler_params=pltpu.CompilerParams(
            dimension_semantics=("parallel",),
            vmem_limit_bytes=_VMEM_LIMIT),
        cost_estimate=cost,
    )(x_flat, masks, wconv, bconv, gw, gshift)
    return out_flat.reshape(n, c, h, w)


# ---------------------------------------------------------------------------
# Deterministic synthetic parameters
# ---------------------------------------------------------------------------
def _conv_bn_params(key, cin, cout, ksize, with_bias):
    ks = jax.random.split(key, 6)
    return {
        'w': 0.2 * jax.random.normal(ks[0], (cout, cin, ksize, ksize), jnp.float32),
        'b': (0.05 * jax.random.normal(ks[1], (cout,), jnp.float32)
              if with_bias else jnp.zeros((cout,), jnp.float32)),
        'gamma': 1.0 + 0.1 * jax.random.normal(ks[2], (cout,), jnp.float32),
        'beta': 0.05 * jax.random.normal(ks[3], (cout,), jnp.float32),
        'mean': 0.02 * jax.random.normal(ks[4], (cout,), jnp.float32),
        'var': 0.9 + 0.2 * jax.random.uniform(ks[5], (cout,), jnp.float32),
    }


if __name__ == "__main__":
    key = jax.random.PRNGKey(0)
    k_x, k1, k2, k3, k4, k5 = jax.random.split(key, 6)

    ch = 4                                     # ch_in == ch_out (shortcut=True)
    params = {
        'branch2a': _conv_bn_params(k1, ch, ch, 3, with_bias=True),
        'branch2b': _conv_bn_params(k2, ch, ch, 3, with_bias=True),
        'hw': _conv_bn_params(k3, 2, 1, 7, with_bias=False),
        'cw': _conv_bn_params(k4, 2, 1, 7, with_bias=False),
        'hc': _conv_bn_params(k5, 2, 1, 7, with_bias=False),
    }

    x = jax.random.normal(k_x, (2, ch, 16, 16), jnp.float32)   # NCHW input

    fwd = jax.jit(basic_block_triplet_attention)
    y = fwd(x, params)
    jax.block_until_ready(y)
    assert y.shape == x.shape and y.dtype == jnp.float32
    assert bool(jnp.all(jnp.isfinite(y)))
    print("KERNEL_OK")
</pallas_src>

<mosaic_0001>
module attributes {stable_mosaic.version = 11 : i64} {
  func.func @_fused_block_kernel(%arg0: i32, %arg1: memref<1x4x256xf32, #tpu.memory_space<vmem>>, %arg2: memref<2x256xf32, #tpu.memory_space<vmem>>, %arg3: memref<2x4x36xf32, #tpu.memory_space<vmem>>, %arg4: memref<2x4x1xf32, #tpu.memory_space<vmem>>, %arg5: memref<49x2x1x96xf32, #tpu.memory_space<vmem>>, %arg6: memref<1x96xf32, #tpu.memory_space<vmem>>, %arg7: memref<1x4x256xf32, #tpu.memory_space<vmem>>, %arg8: memref<4x320xf32, #tpu.memory_space<vmem>>, %arg9: memref<2x22x128xf32, #tpu.memory_space<vmem>>) attributes {dimension_semantics = [#tpu.dimension_semantics<parallel>], iteration_bounds = array<i64: 2>, scalar_prefetch = 0 : i64, scratch_operands = 2 : i64, tpu.core_type = #tpu.core_type<tc>, window_params = [{transform_indices = @transform_0, window_bounds = array<i64: 1, 4, 256>}, {pipeline_mode = #tpu.pipeline_mode<synchronous>, transform_indices = @transform_1, window_bounds = array<i64: 2, 256>}, {pipeline_mode = #tpu.pipeline_mode<synchronous>, transform_indices = @transform_2, window_bounds = array<i64: 2, 4, 36>}, {pipeline_mode = #tpu.pipeline_mode<synchronous>, transform_indices = @transform_3, window_bounds = array<i64: 2, 4, 1>}, {pipeline_mode = #tpu.pipeline_mode<synchronous>, transform_indices = @transform_4, window_bounds = array<i64: 49, 2, 1, 96>}, {pipeline_mode = #tpu.pipeline_mode<synchronous>, transform_indices = @transform_5, window_bounds = array<i64: 1, 96>}, {transform_indices = @transform_6, window_bounds = array<i64: 1, 4, 256>}]} {
    %c0 = arith.constant 0 : index
    %c0_0 = arith.constant 0 : index
    %c0_1 = arith.constant 0 : index
    %0 = vector.load %arg1[%c0, %c0_0, %c0_1] : memref<1x4x256xf32, #tpu.memory_space<vmem>>, vector<1x4x256xf32>
    %1 = vector.shape_cast %0 : vector<1x4x256xf32> to vector<4x256xf32>
    %c0_2 = arith.constant 0 : index
    %c0_3 = arith.constant 0 : index
    %2 = vector.load %arg2[%c0_2, %c0_3] : memref<2x256xf32, #tpu.memory_space<vmem>>, vector<1x256xf32>
    %c1 = arith.constant 1 : index
    %c0_4 = arith.constant 0 : index
    %3 = vector.load %arg2[%c1, %c0_4] : memref<2x256xf32, #tpu.memory_space<vmem>>, vector<1x256xf32>
    %cst = arith.constant 0.000000e+00 : f32
    %4 = vector.broadcast %cst : f32 to vector<4x320xf32>
    %c0_5 = arith.constant 0 : index
    %c0_6 = arith.constant 0 : index
    %5 = vector.load %arg8[%c0_5, %c0_6] : memref<4x320xf32, #tpu.memory_space<vmem>>, vector<4x320xf32>
    tpu.vector_store %arg8[%c0_5, %c0_6], %4 {strides = array<i32>} : memref<4x320xf32, #tpu.memory_space<vmem>>, vector<4x320xf32>,
    %c0_7 = arith.constant 0 : index
    %c32 = arith.constant 32 : index
    %6 = vector.load %arg8[%c0_7, %c32] : memref<4x320xf32, #tpu.memory_space<vmem>>, vector<4x256xf32>
    tpu.vector_store %arg8[%c0_7, %c32], %1 {strides = array<i32>} : memref<4x320xf32, #tpu.memory_space<vmem>>, vector<4x256xf32>,
    %c0_8 = arith.constant 0 : index
    %c0_9 = arith.constant 0 : index
    %c0_10 = arith.constant 0 : index
    %7 = vector.load %arg3[%c0_8, %c0_9, %c0_10] : memref<2x4x36xf32, #tpu.memory_space<vmem>>, vector<1x4x36xf32>
    %8 = vector.shape_cast %7 : vector<1x4x36xf32> to vector<4x36xf32>
    %cst_11 = arith.constant 0.000000e+00 : f32
    %9 = vector.broadcast %cst_11 : f32 to vector<4x256xf32>
    %c0_12 = arith.constant 0 : index
    %c15 = arith.constant 15 : index
    %10 = vector.load %arg8[%c0_12, %c15] : memref<4x320xf32, #tpu.memory_space<vmem>>, vector<4x256xf32>
    %11 = vector.broadcast %2 : vector<1x256xf32> to vector<4x256xf32>
    %12 = arith.mulf %10, %11 : vector<4x256xf32>
    %13 = vector.extract_strided_slice %8 {offsets = [0, 0], sizes = [4, 1], strides = [1, 1]} : vector<4x36xf32> to vector<4x1xf32>
    %14 = vector.extract_strided_slice %12 {offsets = [0, 0], sizes = [1, 256], strides = [1, 1]} : vector<4x256xf32> to vector<1x256xf32>
    %15 = vector.broadcast %13 : vector<4x1xf32> to vector<4x256xf32>
    %16 = vector.broadcast %14 : vector<1x256xf32> to vector<4x256xf32>
    %17 = arith.mulf %15, %16 : vector<4x256xf32>
    %18 = arith.addf %9, %17 : vector<4x256xf32>
    %19 = vector.extract_strided_slice %8 {offsets = [0, 1], sizes = [4, 1], strides = [1, 1]} : vector<4x36xf32> to vector<4x1xf32>
    %20 = vector.extract_strided_slice %12 {offsets = [1, 0], sizes = [1, 256], strides = [1, 1]} : vector<4x256xf32> to vector<1x256xf32>
    %21 = vector.broadcast %19 : vector<4x1xf32> to vector<4x256xf32>
    %22 = vector.broadcast %20 : vector<1x256xf32> to vector<4x256xf32>
    %23 = arith.mulf %21, %22 : vector<4x256xf32>
    %24 = arith.addf %18, %23 : vector<4x256xf32>
    %25 = vector.extract_strided_slice %8 {offsets = [0, 2], sizes = [4, 1], strides = [1, 1]} : vector<4x36xf32> to vector<4x1xf32>
    %26 = vector.extract_strided_slice %12 {offsets = [2, 0], sizes = [1, 256], strides = [1, 1]} : vector<4x256xf32> to vector<1x256xf32>
    %27 = vector.broadcast %25 : vector<4x1xf32> to vector<4x256xf32>
    %28 = vector.broadcast %26 : vector<1x256xf32> to vector<4x256xf32>
    %29 = arith.mulf %27, %28 : vector<4x256xf32>
    %30 = arith.addf %24, %29 : vector<4x256xf32>
    %31 = vector.extract_strided_slice %8 {offsets = [0, 3], sizes = [4, 1], strides = [1, 1]} : vector<4x36xf32> to vector<4x1xf32>
    %32 = vector.extract_strided_slice %12 {offsets = [3, 0], sizes = [1, 256], strides = [1, 1]} : vector<4x256xf32> to vector<1x256xf32>
    %33 = vector.broadcast %31 : vector<4x1xf32> to vector<4x256xf32>
    %34 = vector.broadcast %32 : vector<1x256xf32> to vector<4x256xf32>
    %35 = arith.mulf %33, %34 : vector<4x256xf32>
    %36 = arith.addf %30, %35 : vector<4x256xf32>
    %c0_13 = arith.constant 0 : index
    %c16 = arith.constant 16 : index
    %37 = vector.load %arg8[%c0_13, %c16] : memref<4x320xf32, #tpu.memory_space<vmem>>, vector<4x256xf32>
    %38 = vector.extract_strided_slice %8 {offsets = [0, 4], sizes = [4, 1], strides = [1, 1]} : vector<4x36xf32> to vector<4x1xf32>
    %39 = vector.extract_strided_slice %37 {offsets = [0, 0], sizes = [1, 256], strides = [1, 1]} : vector<4x256xf32> to vector<1x256xf32>
    %40 = vector.broadcast %38 : vector<4x1xf32> to vector<4x256xf32>
    %41 = vector.broadcast %39 : vector<1x256xf32> to vector<4x256xf32>
    %42 = arith.mulf %40, %41 : vector<4x256xf32>
    %43 = arith.addf %36, %42 : vector<4x256xf32>
    %44 = vector.extract_strided_slice %8 {offsets = [0, 5], sizes = [4, 1], strides = [1, 1]} : vector<4x36xf32> to vector<4x1xf32>
    %45 = vector.extract_strided_slice %37 {offsets = [1, 0], sizes = [1, 256], strides = [1, 1]} : vector<4x256xf32> to vector<1x256xf32>
    %46 = vector.broadcast %44 : vector<4x1xf32> to vector<4x256xf32>
    %47 = vector.broadcast %45 : vector<1x256xf32> to vector<4x256xf32>
    %48 = arith.mulf %46, %47 : vector<4x256xf32>
    %49 = arith.addf %43, %48 : vector<4x256xf32>
    %50 = vector.extract_strided_slice %8 {offsets = [0, 6], sizes = [4, 1], strides = [1, 1]} : vector<4x36xf32> to vector<4x1xf32>
    %51 = vector.extract_strided_slice %37 {offsets = [2, 0], sizes = [1, 256], strides = [1, 1]} : vector<4x256xf32> to vector<1x256xf32>
    %52 = vector.broadcast %50 : vector<4x1xf32> to vector<4x256xf32>
    %53 = vector.broadcast %51 : vector<1x256xf32> to vector<4x256xf32>
    %54 = arith.mulf %52, %53 : vector<4x256xf32>
    %55 = arith.addf %49, %54 : vector<4x256xf32>
    %56 = vector.extract_strided_slice %8 {offsets = [0, 7], sizes = [4, 1], strides = [1, 1]} : vector<4x36xf32> to vector<4x1xf32>
    %57 = vector.extract_strided_slice %37 {offsets = [3, 0], sizes = [1, 256], strides = [1, 1]} : vector<4x256xf32> to vector<1x256xf32>
    %58 = vector.broadcast %56 : vector<4x1xf32> to vector<4x256xf32>
    %59 = vector.broadcast %57 : vector<1x256xf32> to vector<4x256xf32>
    %60 = arith.mulf %58, %59 : vector<4x256xf32>
    %61 = arith.addf %55, %60 : vector<4x256xf32>
    %c0_14 = arith.constant 0 : index
    %c17 = arith.constant 17 : index
    %62 = vector.load %arg8[%c0_14, %c17] : memref<4x320xf32, #tpu.memory_space<vmem>>, vector<4x256xf32>
    %63 = vector.broadcast %3 : vector<1x256xf32> to vector<4x256xf32>
    %64 = arith.mulf %62, %63 : vector<4x256xf32>
    %65 = vector.extract_strided_slice %8 {offsets = [0, 8], sizes = [4, 1], strides = [1, 1]} : vector<4x36xf32> to vector<4x1xf32>
    %66 = vector.extract_strided_slice %64 {offsets = [0, 0], sizes = [1, 256], strides = [1, 1]} : vector<4x256xf32> to vector<1x256xf32>
    %67 = vector.broadcast %65 : vector<4x1xf32> to vector<4x256xf32>
    %68 = vector.broadcast %66 : vector<1x256xf32> to vector<4x256xf32>
    %69 = arith.mulf %67, %68 : vector<4x256xf32>
    %70 = arith.addf %61, %69 : vector<4x256xf32>
    %71 = vector.extract_strided_slice %8 {offsets = [0, 9], sizes = [4, 1], strides = [1, 1]} : vector<4x36xf32> to vector<4x1xf32>
    %72 = vector.extract_strided_slice %64 {offsets = [1, 0], sizes = [1, 256], strides = [1, 1]} : vector<4x256xf32> to vector<1x256xf32>
    %73 = vector.broadcast %71 : vector<4x1xf32> to vector<4x256xf32>
    %74 = vector.broadcast %72 : vector<1x256xf32> to vector<4x256xf32>
    %75 = arith.mulf %73, %74 : vector<4x256xf32>
    %76 = arith.addf %70, %75 : vector<4x256xf32>
    %77 = vector.extract_strided_slice %8 {offsets = [0, 10], sizes = [4, 1], strides = [1, 1]} : vector<4x36xf32> to vector<4x1xf32>
    %78 = vector.extract_strided_slice %64 {offsets = [2, 0], sizes = [1, 256], strides = [1, 1]} : vector<4x256xf32> to vector<1x256xf32>
    %79 = vector.broadcast %77 : vector<4x1xf32> to vector<4x256xf32>
    %80 = vector.broadcast %78 : vector<1x256xf32> to vector<4x256xf32>
    %81 = arith.mulf %79, %80 : vector<4x256xf32>
    %82 = arith.addf %76, %81 : vector<4x256xf32>
    %83 = vector.extract_strided_slice %8 {offsets = [0, 11], sizes = [4, 1], strides = [1, 1]} : vector<4x36xf32> to vector<4x1xf32>
    %84 = vector.extract_strided_slice %64 {offsets = [3, 0], sizes = [1, 256], strides = [1, 1]} : vector<4x256xf32> to vector<1x256xf32>
    %85 = vector.broadcast %83 : vector<4x1xf32> to vector<4x256xf32>
    %86 = vector.broadcast %84 : vector<1x256xf32> to vector<4x256xf32>
    %87 = arith.mulf %85, %86 : vector<4x256xf32>
    %88 = arith.addf %82, %87 : vector<4x256xf32>
    %c0_15 = arith.constant 0 : index
    %c31 = arith.constant 31 : index
    %89 = vector.load %arg8[%c0_15, %c31] : memref<4x320xf32, #tpu.memory_space<vmem>>, vector<4x256xf32>
    %90 = vector.broadcast %2 : vector<1x256xf32> to vector<4x256xf32>
    %91 = arith.mulf %89, %90 : vector<4x256xf32>
    %92 = vector.extract_strided_slice %8 {offsets = [0, 12], sizes = [4, 1], strides = [1, 1]} : vector<4x36xf32> to vector<4x1xf32>
    %93 = vector.extract_strided_slice %91 {offsets = [0, 0], sizes = [1, 256], strides = [1, 1]} : vector<4x256xf32> to vector<1x256xf32>
    %94 = vector.broadcast %92 : vector<4x1xf32> to vector<4x256xf32>
    %95 = vector.broadcast %93 : vector<1x256xf32> to vector<4x256xf32>
    %96 = arith.mulf %94, %95 : vector<4x256xf32>
    %97 = arith.addf %88, %96 : vector<4x256xf32>
    %98 = vector.extract_strided_slice %8 {offsets = [0, 13], sizes = [4, 1], strides = [1, 1]} : vector<4x36xf32> to vector<4x1xf32>
    %99 = vector.extract_strided_slice %91 {offsets = [1, 0], sizes = [1, 256], strides = [1, 1]} : vector<4x256xf32> to vector<1x256xf32>
    %100 = vector.broadcast %98 : vector<4x1xf32> to vector<4x256xf32>
    %101 = vector.broadcast %99 : vector<1x256xf32> to vector<4x256xf32>
    %102 = arith.mulf %100, %101 : vector<4x256xf32>
    %103 = arith.addf %97, %102 : vector<4x256xf32>
    %104 = vector.extract_strided_slice %8 {offsets = [0, 14], sizes = [4, 1], strides = [1, 1]} : vector<4x36xf32> to vector<4x1xf32>
    %105 = vector.extract_strided_slice %91 {offsets = [2, 0], sizes = [1, 256], strides = [1, 1]} : vector<4x256xf32> to vector<1x256xf32>
    %106 = vector.broadcast %104 : vector<4x1xf32> to vector<4x256xf32>
    %107 = vector.broadcast %105 : vector<1x256xf32> to vector<4x256xf32>
    %108 = arith.mulf %106, %107 : vector<4x256xf32>
    %109 = arith.addf %103, %108 : vector<4x256xf32>
    %110 = vector.extract_strided_slice %8 {offsets = [0, 15], sizes = [4, 1], strides = [1, 1]} : vector<4x36xf32> to vector<4x1xf32>
    %111 = vector.extract_strided_slice %91 {offsets = [3, 0], sizes = [1, 256], strides = [1, 1]} : vector<4x256xf32> to vector<1x256xf32>
    %112 = vector.broadcast %110 : vector<4x1xf32> to vector<4x256xf32>
    %113 = vector.broadcast %111 : vector<1x256xf32> to vector<4x256xf32>
    %114 = arith.mulf %112, %113 : vector<4x256xf32>
    %115 = arith.addf %109, %114 : vector<4x256xf32>
    %c0_16 = arith.constant 0 : index
    %c32_17 = arith.constant 32 : index
    %116 = vector.load %arg8[%c0_16, %c32_17] : memref<4x320xf32, #tpu.memory_space<vmem>>, vector<4x256xf32>
    %117 = vector.extract_strided_slice %8 {offsets = [0, 16], sizes = [4, 1], strides = [1, 1]} : vector<4x36xf32> to vector<4x1xf32>
    %118 = vector.extract_strided_slice %116 {offsets = [0, 0], sizes = [1, 256], strides = [1, 1]} : vector<4x256xf32> to vector<1x256xf32>
    %119 = vector.broadcast %117 : vector<4x1xf32> to vector<4x256xf32>
    %120 = vector.broadcast %118 : vector<1x256xf32> to vector<4x256xf32>
    %121 = arith.mulf %119, %120 : vector<4x256xf32>
    %122 = arith.addf %115, %121 : vector<4x256xf32>
    %123 = vector.extract_strided_slice %8 {offsets = [0, 17], sizes = [4, 1], strides = [1, 1]} : vector<4x36xf32> to vector<4x1xf32>
    %124 = vector.extract_strided_slice %116 {offsets = [1, 0], sizes = [1, 256], strides = [1, 1]} : vector<4x256xf32> to vector<1x256xf32>
    %125 = vector.broadcast %123 : vector<4x1xf32> to vector<4x256xf32>
    %126 = vector.broadcast %124 : vector<1x256xf32> to vector<4x256xf32>
    %127 = arith.mulf %125, %126 : vector<4x256xf32>
    %128 = arith.addf %122, %127 : vector<4x256xf32>
    %129 = vector.extract_strided_slice %8 {offsets = [0, 18], sizes = [4, 1], strides = [1, 1]} : vector<4x36xf32> to vector<4x1xf32>
    %130 = vector.extract_strided_slice %116 {offsets = [2, 0], sizes = [1, 256], strides = [1, 1]} : vector<4x256xf32> to vector<1x256xf32>
    %131 = vector.broadcast %129 : vector<4x1xf32> to vector<4x256xf32>
    %132 = vector.broadcast %130 : vector<1x256xf32> to vector<4x256xf32>
    %133 = arith.mulf %131, %132 : vector<4x256xf32>
    %134 = arith.addf %128, %133 : vector<4x256xf32>
    %135 = vector.extract_strided_slice %8 {offsets = [0, 19], sizes = [4, 1], strides = [1, 1]} : vector<4x36xf32> to vector<4x1xf32>
    %136 = vector.extract_strided_slice %116 {offsets = [3, 0], sizes = [1, 256], strides = [1, 1]} : vector<4x256xf32> to vector<1x256xf32>
    %137 = vector.broadcast %135 : vector<4x1xf32> to vector<4x256xf32>
    %138 = vector.broadcast %136 : vector<1x256xf32> to vector<4x256xf32>
    %139 = arith.mulf %137, %138 : vector<4x256xf32>
    %140 = arith.addf %134, %139 : vector<4x256xf32>
    %c0_18 = arith.constant 0 : index
    %c33 = arith.constant 33 : index
    %141 = vector.load %arg8[%c0_18, %c33] : memref<4x320xf32, #tpu.memory_space<vmem>>, vector<4x256xf32>
    %142 = vector.broadcast %3 : vector<1x256xf32> to vector<4x256xf32>
    %143 = arith.mulf %141, %142 : vector<4x256xf32>
    %144 = vector.extract_strided_slice %8 {offsets = [0, 20], sizes = [4, 1], strides = [1, 1]} : vector<4x36xf32> to vector<4x1xf32>
    %145 = vector.extract_strided_slice %143 {offsets = [0, 0], sizes = [1, 256], strides = [1, 1]} : vector<4x256xf32> to vector<1x256xf32>
    %146 = vector.broadcast %144 : vector<4x1xf32> to vector<4x256xf32>
    %147 = vector.broadcast %145 : vector<1x256xf32> to vector<4x256xf32>
    %148 = arith.mulf %146, %147 : vector<4x256xf32>
    %149 = arith.addf %140, %148 : vector<4x256xf32>
    %150 = vector.extract_strided_slice %8 {offsets = [0, 21], sizes = [4, 1], strides = [1, 1]} : vector<4x36xf32> to vector<4x1xf32>
    %151 = vector.extract_strided_slice %143 {offsets = [1, 0], sizes = [1, 256], strides = [1, 1]} : vector<4x256xf32> to vector<1x256xf32>
    %152 = vector.broadcast %150 : vector<4x1xf32> to vector<4x256xf32>
    %153 = vector.broadcast %151 : vector<1x256xf32> to vector<4x256xf32>
    %154 = arith.mulf %152, %153 : vector<4x256xf32>
    %155 = arith.addf %149, %154 : vector<4x256xf32>
    %156 = vector.extract_strided_slice %8 {offsets = [0, 22], sizes = [4, 1], strides = [1, 1]} : vector<4x36xf32> to vector<4x1xf32>
    %157 = vector.extract_strided_slice %143 {offsets = [2, 0], sizes = [1, 256], strides = [1, 1]} : vector<4x256xf32> to vector<1x256xf32>
    %158 = vector.broadcast %156 : vector<4x1xf32> to vector<4x256xf32>
    %159 = vector.broadcast %157 : vector<1x256xf32> to vector<4x256xf32>
    %160 = arith.mulf %158, %159 : vector<4x256xf32>
    %161 = arith.addf %155, %160 : vector<4x256xf32>
    %162 = vector.extract_strided_slice %8 {offsets = [0, 23], sizes = [4, 1], strides = [1, 1]} : vector<4x36xf32> to vector<4x1xf32>
    %163 = vector.extract_strided_slice %143 {offsets = [3, 0], sizes = [1, 256], strides = [1, 1]} : vector<4x256xf32> to vector<1x256xf32>
    %164 = vector.broadcast %162 : vector<4x1xf32> to vector<4x256xf32>
    %165 = vector.broadcast %163 : vector<1x256xf32> to vector<4x256xf32>
    %166 = arith.mulf %164, %165 : vector<4x256xf32>
    %167 = arith.addf %161, %166 : vector<4x256xf32>
    %c0_19 = arith.constant 0 : index
    %c47 = arith.constant 47 : index
    %168 = vector.load %arg8[%c0_19, %c47] : memref<4x320xf32, #tpu.memory_space<vmem>>, vector<4x256xf32>
    %169 = vector.broadcast %2 : vector<1x256xf32> to vector<4x256xf32>
    %170 = arith.mulf %168, %169 : vector<4x256xf32>
    %171 = vector.extract_strided_slice %8 {offsets = [0, 24], sizes = [4, 1], strides = [1, 1]} : vector<4x36xf32> to vector<4x1xf32>
    %172 = vector.extract_strided_slice %170 {offsets = [0, 0], sizes = [1, 256], strides = [1, 1]} : vector<4x256xf32> to vector<1x256xf32>
    %173 = vector.broadcast %171 : vector<4x1xf32> to vector<4x256xf32>
    %174 = vector.broadcast %172 : vector<1x256xf32> to vector<4x256xf32>
    %175 = arith.mulf %173, %174 : vector<4x256xf32>
    %176 = arith.addf %167, %175 : vector<4x256xf32>
    %177 = vector.extract_strided_slice %8 {offsets = [0, 25], sizes = [4, 1], strides = [1, 1]} : vector<4x36xf32> to vector<4x1xf32>
    %178 = vector.extract_strided_slice %170 {offsets = [1, 0], sizes = [1, 256], strides = [1, 1]} : vector<4x256xf32> to vector<1x256xf32>
    %179 = vector.broadcast %177 : vector<4x1xf32> to vector<4x256xf32>
    %180 = vector.broadcast %178 : vector<1x256xf32> to vector<4x256xf32>
    %181 = arith.mulf %179, %180 : vector<4x256xf32>
    %182 = arith.addf %176, %181 : vector<4x256xf32>
    %183 = vector.extract_strided_slice %8 {offsets = [0, 26], sizes = [4, 1], strides = [1, 1]} : vector<4x36xf32> to vector<4x1xf32>
    %184 = vector.extract_strided_slice %170 {offsets = [2, 0], sizes = [1, 256], strides = [1, 1]} : vector<4x256xf32> to vector<1x256xf32>
    %185 = vector.broadcast %183 : vector<4x1xf32> to vector<4x256xf32>
    %186 = vector.broadcast %184 : vector<1x256xf32> to vector<4x256xf32>
    %187 = arith.mulf %185, %186 : vector<4x256xf32>
    %188 = arith.addf %182, %187 : vector<4x256xf32>
    %189 = vector.extract_strided_slice %8 {offsets = [0, 27], sizes = [4, 1], strides = [1, 1]} : vector<4x36xf32> to vector<4x1xf32>
    %190 = vector.extract_strided_slice %170 {offsets = [3, 0], sizes = [1, 256], strides = [1, 1]} : vector<4x256xf32> to vector<1x256xf32>
    %191 = vector.broadcast %189 : vector<4x1xf32> to vector<4x256xf32>
    %192 = vector.broadcast %190 : vector<1x256xf32> to vector<4x256xf32>
    %193 = arith.mulf %191, %192 : vector<4x256xf32>
    %194 = arith.addf %188, %193 : vector<4x256xf32>
    %c0_20 = arith.constant 0 : index
    %c48 = arith.constant 48 : index
    %195 = vector.load %arg8[%c0_20, %c48] : memref<4x320xf32, #tpu.memory_space<vmem>>, vector<4x256xf32>
    %196 = vector.extract_strided_slice %8 {offsets = [0, 28], sizes = [4, 1], strides = [1, 1]} : vector<4x36xf32> to vector<4x1xf32>
    %197 = vector.extract_strided_slice %195 {offsets = [0, 0], sizes = [1, 256], strides = [1, 1]} : vector<4x256xf32> to vector<1x256xf32>
    %198 = vector.broadcast %196 : vector<4x1xf32> to vector<4x256xf32>
    %199 = vector.broadcast %197 : vector<1x256xf32> to vector<4x256xf32>
    %200 = arith.mulf %198, %199 : vector<4x256xf32>
    %201 = arith.addf %194, %200 : vector<4x256xf32>
    %202 = vector.extract_strided_slice %8 {offsets = [0, 29], sizes = [4, 1], strides = [1, 1]} : vector<4x36xf32> to vector<4x1xf32>
    %203 = vector.extract_strided_slice %195 {offsets = [1, 0], sizes = [1, 256], strides = [1, 1]} : vector<4x256xf32> to vector<1x256xf32>
    %204 = vector.broadcast %202 : vector<4x1xf32> to vector<4x256xf32>
    %205 = vector.broadcast %203 : vector<1x256xf32> to vector<4x256xf32>
    %206 = arith.mulf %204, %205 : vector<4x256xf32>
    %207 = arith.addf %201, %206 : vector<4x256xf32>
    %208 = vector.extract_strided_slice %8 {offsets = [0, 30], sizes = [4, 1], strides = [1, 1]} : vector<4x36xf32> to vector<4x1xf32>
    %209 = vector.extract_strided_slice %195 {offsets = [2, 0], sizes = [1, 256], strides = [1, 1]} : vector<4x256xf32> to vector<1x256xf32>
    %210 = vector.broadcast %208 : vector<4x1xf32> to vector<4x256xf32>
    %211 = vector.broadcast %209 : vector<1x256xf32> to vector<4x256xf32>
    %212 = arith.mulf %210, %211 : vector<4x256xf32>
    %213 = arith.addf %207, %212 : vector<4x256xf32>
    %214 = vector.extract_strided_slice %8 {offsets = [0, 31], sizes = [4, 1], strides = [1, 1]} : vector<4x36xf32> to vector<4x1xf32>
    %215 = vector.extract_strided_slice %195 {offsets = [3, 0], sizes = [1, 256], strides = [1, 1]} : vector<4x256xf32> to vector<1x256xf32>
    %216 = vector.broadcast %214 : vector<4x1xf32> to vector<4x256xf32>
    %217 = vector.broadcast %215 : vector<1x256xf32> to vector<4x256xf32>
    %218 = arith.mulf %216, %217 : vector<4x256xf32>
    %219 = arith.addf %213, %218 : vector<4x256xf32>
    %c0_21 = arith.constant 0 : index
    %c49 = arith.constant 49 : index
    %220 = vector.load %arg8[%c0_21, %c49] : memref<4x320xf32, #tpu.memory_space<vmem>>, vector<4x256xf32>
    %221 = vector.broadcast %3 : vector<1x256xf32> to vector<4x256xf32>
    %222 = arith.mulf %220, %221 : vector<4x256xf32>
    %223 = vector.extract_strided_slice %8 {offsets = [0, 32], sizes = [4, 1], strides = [1, 1]} : vector<4x36xf32> to vector<4x1xf32>
    %224 = vector.extract_strided_slice %222 {offsets = [0, 0], sizes = [1, 256], strides = [1, 1]} : vector<4x256xf32> to vector<1x256xf32>
    %225 = vector.broadcast %223 : vector<4x1xf32> to vector<4x256xf32>
    %226 = vector.broadcast %224 : vector<1x256xf32> to vector<4x256xf32>
    %227 = arith.mulf %225, %226 : vector<4x256xf32>
    %228 = arith.addf %219, %227 : vector<4x256xf32>
    %229 = vector.extract_strided_slice %8 {offsets = [0, 33], sizes = [4, 1], strides = [1, 1]} : vector<4x36xf32> to vector<4x1xf32>
    %230 = vector.extract_strided_slice %222 {offsets = [1, 0], sizes = [1, 256], strides = [1, 1]} : vector<4x256xf32> to vector<1x256xf32>
    %231 = vector.broadcast %229 : vector<4x1xf32> to vector<4x256xf32>
    %232 = vector.broadcast %230 : vector<1x256xf32> to vector<4x256xf32>
    %233 = arith.mulf %231, %232 : vector<4x256xf32>
    %234 = arith.addf %228, %233 : vector<4x256xf32>
    %235 = vector.extract_strided_slice %8 {offsets = [0, 34], sizes = [4, 1], strides = [1, 1]} : vector<4x36xf32> to vector<4x1xf32>
    %236 = vector.extract_strided_slice %222 {offsets = [2, 0], sizes = [1, 256], strides = [1, 1]} : vector<4x256xf32> to vector<1x256xf32>
    %237 = vector.broadcast %235 : vector<4x1xf32> to vector<4x256xf32>
    %238 = vector.broadcast %236 : vector<1x256xf32> to vector<4x256xf32>
    %239 = arith.mulf %237, %238 : vector<4x256xf32>
    %240 = arith.addf %234, %239 : vector<4x256xf32>
    %241 = vector.extract_strided_slice %8 {offsets = [0, 35], sizes = [4, 1], strides = [1, 1]} : vector<4x36xf32> to vector<4x1xf32>
    %242 = vector.extract_strided_slice %222 {offsets = [3, 0], sizes = [1, 256], strides = [1, 1]} : vector<4x256xf32> to vector<1x256xf32>
    %243 = vector.broadcast %241 : vector<4x1xf32> to vector<4x256xf32>
    %244 = vector.broadcast %242 : vector<1x256xf32> to vector<4x256xf32>
    %245 = arith.mulf %243, %244 : vector<4x256xf32>
    %246 = arith.addf %240, %245 : vector<4x256xf32>
    %c0_22 = arith.constant 0 : index
    %c0_23 = arith.constant 0 : index
    %c0_24 = arith.constant 0 : index
    %247 = vector.load %arg4[%c0_22, %c0_23, %c0_24] : memref<2x4x1xf32, #tpu.memory_space<vmem>>, vector<1x4x1xf32>
    %248 = vector.shape_cast %247 : vector<1x4x1xf32> to vector<4x1xf32>
    %249 = vector.broadcast %248 : vector<4x1xf32> to vector<4x256xf32>
    %250 = arith.addf %246, %249 : vector<4x256xf32>
    %cst_25 = arith.constant 0.000000e+00 : f32
    %251 = vector.broadcast %cst_25 : f32 to vector<4x256xf32>
    %252 = arith.maximumf %250, %251 : vector<4x256xf32>
    %c0_26 = arith.constant 0 : index
    %c32_27 = arith.constant 32 : index
    %253 = vector.load %arg8[%c0_26, %c32_27] : memref<4x320xf32, #tpu.memory_space<vmem>>, vector<4x256xf32>
    tpu.vector_store %arg8[%c0_26, %c32_27], %252 {strides = array<i32>} : memref<4x320xf32, #tpu.memory_space<vmem>>, vector<4x256xf32>,
    %c1_28 = arith.constant 1 : index
    %c0_29 = arith.constant 0 : index
    %c0_30 = arith.constant 0 : index
    %254 = vector.load %arg3[%c1_28, %c0_29, %c0_30] : memref<2x4x36xf32, #tpu.memory_space<vmem>>, vector<1x4x36xf32>
    %255 = vector.shape_cast %254 : vector<1x4x36xf32> to vector<4x36xf32>
    %cst_31 = arith.constant 0.000000e+00 : f32
    %256 = vector.broadcast %cst_31 : f32 to vector<4x256xf32>
    %c0_32 = arith.constant 0 : index
    %c15_33 = arith.constant 15 : index
    %257 = vector.load %arg8[%c0_32, %c15_33] : memref<4x320xf32, #tpu.memory_space<vmem>>, vector<4x256xf32>
    %258 = vector.broadcast %2 : vector<1x256xf32> to vector<4x256xf32>
    %259 = arith.mulf %257, %258 : vector<4x256xf32>
    %260 = vector.extract_strided_slice %255 {offsets = [0, 0], sizes = [4, 1], strides = [1, 1]} : vector<4x36xf32> to vector<4x1xf32>
    %261 = vector.extract_strided_slice %259 {offsets = [0, 0], sizes = [1, 256], strides = [1, 1]} : vector<4x256xf32> to vector<1x256xf32>
    %262 = vector.broadcast %260 : vector<4x1xf32> to vector<4x256xf32>
    %263 = vector.broadcast %261 : vector<1x256xf32> to vector<4x256xf32>
    %264 = arith.mulf %262, %263 : vector<4x256xf32>
    %265 = arith.addf %256, %264 : vector<4x256xf32>
    %266 = vector.extract_strided_slice %255 {offsets = [0, 1], sizes = [4, 1], strides = [1, 1]} : vector<4x36xf32> to vector<4x1xf32>
    %267 = vector.extract_strided_slice %259 {offsets = [1, 0], sizes = [1, 256], strides = [1, 1]} : vector<4x256xf32> to vector<1x256xf32>
    %268 = vector.broadcast %266 : vector<4x1xf32> to vector<4x256xf32>
    %269 = vector.broadcast %267 : vector<1x256xf32> to vector<4x256xf32>
    %270 = arith.mulf %268, %269 : vector<4x256xf32>
    %271 = arith.addf %265, %270 : vector<4x256xf32>
    %272 = vector.extract_strided_slice %255 {offsets = [0, 2], sizes = [4, 1], strides = [1, 1]} : vector<4x36xf32> to vector<4x1xf32>
    %273 = vector.extract_strided_slice %259 {offsets = [2, 0], sizes = [1, 256], strides = [1, 1]} : vector<4x256xf32> to vector<1x256xf32>
    %274 = vector.broadcast %272 : vector<4x1xf32> to vector<4x256xf32>
    %275 = vector.broadcast %273 : vector<1x256xf32> to vector<4x256xf32>
    %276 = arith.mulf %274, %275 : vector<4x256xf32>
    %277 = arith.addf %271, %276 : vector<4x256xf32>
    %278 = vector.extract_strided_slice %255 {offsets = [0, 3], sizes = [4, 1], strides = [1, 1]} : vector<4x36xf32> to vector<4x1xf32>
    %279 = vector.extract_strided_slice %259 {offsets = [3, 0], sizes = [1, 256], strides = [1, 1]} : vector<4x256xf32> to vector<1x256xf32>
    %280 = vector.broadcast %278 : vector<4x1xf32> to vector<4x256xf32>
    %281 = vector.broadcast %279 : vector<1x256xf32> to vector<4x256xf32>
    %282 = arith.mulf %280, %281 : vector<4x256xf32>
    %283 = arith.addf %277, %282 : vector<4x256xf32>
    %c0_34 = arith.constant 0 : index
    %c16_35 = arith.constant 16 : index
    %284 = vector.load %arg8[%c0_34, %c16_35] : memref<4x320xf32, #tpu.memory_space<vmem>>, vector<4x256xf32>
    %285 = vector.extract_strided_slice %255 {offsets = [0, 4], sizes = [4, 1], strides = [1, 1]} : vector<4x36xf32> to vector<4x1xf32>
    %286 = vector.extract_strided_slice %284 {offsets = [0, 0], sizes = [1, 256], strides = [1, 1]} : vector<4x256xf32> to vector<1x256xf32>
    %287 = vector.broadcast %285 : vector<4x1xf32> to vector<4x256xf32>
    %288 = vector.broadcast %286 : vector<1x256xf32> to vector<4x256xf32>
    %289 = arith.mulf %287, %288 : vector<4x256xf32>
    %290 = arith.addf %283, %289 : vector<4x256xf32>
    %291 = vector.extract_strided_slice %255 {offsets = [0, 5], sizes = [4, 1], strides = [1, 1]} : vector<4x36xf32> to vector<4x1xf32>
    %292 = vector.extract_strided_slice %284 {offsets = [1, 0], sizes = [1, 256], strides = [1, 1]} : vector<4x256xf32> to vector<1x256xf32>
    %293 = vector.broadcast %291 : vector<4x1xf32> to vector<4x256xf32>
    %294 = vector.broadcast %292 : vector<1x256xf32> to vector<4x256xf32>
    %295 = arith.mulf %293, %294 : vector<4x256xf32>
    %296 = arith.addf %290, %295 : vector<4x256xf32>
    %297 = vector.extract_strided_slice %255 {offsets = [0, 6], sizes = [4, 1], strides = [1, 1]} : vector<4x36xf32> to vector<4x1xf32>
    %298 = vector.extract_strided_slice %284 {offsets = [2, 0], sizes = [1, 256], strides = [1, 1]} : vector<4x256xf32> to vector<1x256xf32>
    %299 = vector.broadcast %297 : vector<4x1xf32> to vector<4x256xf32>
    %300 = vector.broadcast %298 : vector<1x256xf32> to vector<4x256xf32>
    %301 = arith.mulf %299, %300 : vector<4x256xf32>
    %302 = arith.addf %296, %301 : vector<4x256xf32>
    %303 = vector.extract_strided_slice %255 {offsets = [0, 7], sizes = [4, 1], strides = [1, 1]} : vector<4x36xf32> to vector<4x1xf32>
    %304 = vector.extract_strided_slice %284 {offsets = [3, 0], sizes = [1, 256], strides = [1, 1]} : vector<4x256xf32> to vector<1x256xf32>
    %305 = vector.broadcast %303 : vector<4x1xf32> to vector<4x256xf32>
    %306 = vector.broadcast %304 : vector<1x256xf32> to vector<4x256xf32>
    %307 = arith.mulf %305, %306 : vector<4x256xf32>
    %308 = arith.addf %302, %307 : vector<4x256xf32>
    %c0_36 = arith.constant 0 : index
    %c17_37 = arith.constant 17 : index
    %309 = vector.load %arg8[%c0_36, %c17_37] : memref<4x320xf32, #tpu.memory_space<vmem>>, vector<4x256xf32>
    %310 = vector.broadcast %3 : vector<1x256xf32> to vector<4x256xf32>
    %311 = arith.mulf %309, %310 : vector<4x256xf32>
    %312 = vector.extract_strided_slice %255 {offsets = [0, 8], sizes = [4, 1], strides = [1, 1]} : vector<4x36xf32> to vector<4x1xf32>
    %313 = vector.extract_strided_slice %311 {offsets = [0, 0], sizes = [1, 256], strides = [1, 1]} : vector<4x256xf32> to vector<1x256xf32>
    %314 = vector.broadcast %312 : vector<4x1xf32> to vector<4x256xf32>
    %315 = vector.broadcast %313 : vector<1x256xf32> to vector<4x256xf32>
    %316 = arith.mulf %314, %315 : vector<4x256xf32>
    %317 = arith.addf %308, %316 : vector<4x256xf32>
    %318 = vector.extract_strided_slice %255 {offsets = [0, 9], sizes = [4, 1], strides = [1, 1]} : vector<4x36xf32> to vector<4x1xf32>
    %319 = vector.extract_strided_slice %311 {offsets = [1, 0], sizes = [1, 256], strides = [1, 1]} : vector<4x256xf32> to vector<1x256xf32>
    %320 = vector.broadcast %318 : vector<4x1xf32> to vector<4x256xf32>
    %321 = vector.broadcast %319 : vector<1x256xf32> to vector<4x256xf32>
    %322 = arith.mulf %320, %321 : vector<4x256xf32>
    %323 = arith.addf %317, %322 : vector<4x256xf32>
    %324 = vector.extract_strided_slice %255 {offsets = [0, 10], sizes = [4, 1], strides = [1, 1]} : vector<4x36xf32> to vector<4x1xf32>
    %325 = vector.extract_strided_slice %311 {offsets = [2, 0], sizes = [1, 256], strides = [1, 1]} : vector<4x256xf32> to vector<1x256xf32>
    %326 = vector.broadcast %324 : vector<4x1xf32> to vector<4x256xf32>
    %327 = vector.broadcast %325 : vector<1x256xf32> to vector<4x256xf32>
    %328 = arith.mulf %326, %327 : vector<4x256xf32>
    %329 = arith.addf %323, %328 : vector<4x256xf32>
    %330 = vector.extract_strided_slice %255 {offsets = [0, 11], sizes = [4, 1], strides = [1, 1]} : vector<4x36xf32> to vector<4x1xf32>
    %331 = vector.extract_strided_slice %311 {offsets = [3, 0], sizes = [1, 256], strides = [1, 1]} : vector<4x256xf32> to vector<1x256xf32>
    %332 = vector.broadcast %330 : vector<4x1xf32> to vector<4x256xf32>
    %333 = vector.broadcast %331 : vector<1x256xf32> to vector<4x256xf32>
    %334 = arith.mulf %332, %333 : vector<4x256xf32>
    %335 = arith.addf %329, %334 : vector<4x256xf32>
    %c0_38 = arith.constant 0 : index
    %c31_39 = arith.constant 31 : index
    %336 = vector.load %arg8[%c0_38, %c31_39] : memref<4x320xf32, #tpu.memory_space<vmem>>, vector<4x256xf32>
    %337 = vector.broadcast %2 : vector<1x256xf32> to vector<4x256xf32>
    %338 = arith.mulf %336, %337 : vector<4x256xf32>
    %339 = vector.extract_strided_slice %255 {offsets = [0, 12], sizes = [4, 1], strides = [1, 1]} : vector<4x36xf32> to vector<4x1xf32>
    %340 = vector.extract_strided_slice %338 {offsets = [0, 0], sizes = [1, 256], strides = [1, 1]} : vector<4x256xf32> to vector<1x256xf32>
    %341 = vector.broadcast %339 : vector<4x1xf32> to vector<4x256xf32>
    %342 = vector.broadcast %340 : vector<1x256xf32> to vector<4x256xf32>
    %343 = arith.mulf %341, %342 : vector<4x256xf32>
    %344 = arith.addf %335, %343 : vector<4x256xf32>
    %345 = vector.extract_strided_slice %255 {offsets = [0, 13], sizes = [4, 1], strides = [1, 1]} : vector<4x36xf32> to vector<4x1xf32>
    %346 = vector.extract_strided_slice %338 {offsets = [1, 0], sizes = [1, 256], strides = [1, 1]} : vector<4x256xf32> to vector<1x256xf32>
    %347 = vector.broadcast %345 : vector<4x1xf32> to vector<4x256xf32>
    %348 = vector.broadcast %346 : vector<1x256xf32> to vector<4x256xf32>
    %349 = arith.mulf %347, %348 : vector<4x256xf32>
    %350 = arith.addf %344, %349 : vector<4x256xf32>
    %351 = vector.extract_strided_slice %255 {offsets = [0, 14], sizes = [4, 1], strides = [1, 1]} : vector<4x36xf32> to vector<4x1xf32>
    %352 = vector.extract_strided_slice %338 {offsets = [2, 0], sizes = [1, 256], strides = [1, 1]} : vector<4x256xf32> to vector<1x256xf32>
    %353 = vector.broadcast %351 : vector<4x1xf32> to vector<4x256xf32>
    %354 = vector.broadcast %352 : vector<1x256xf32> to vector<4x256xf32>
    %355 = arith.mulf %353, %354 : vector<4x256xf32>
    %356 = arith.addf %350, %355 : vector<4x256xf32>
    %357 = vector.extract_strided_slice %255 {offsets = [0, 15], sizes = [4, 1], strides = [1, 1]} : vector<4x36xf32> to vector<4x1xf32>
    %358 = vector.extract_strided_slice %338 {offsets = [3, 0], sizes = [1, 256], strides = [1, 1]} : vector<4x256xf32> to vector<1x256xf32>
    %359 = vector.broadcast %357 : vector<4x1xf32> to vector<4x256xf32>
    %360 = vector.broadcast %358 : vector<1x256xf32> to vector<4x256xf32>
    %361 = arith.mulf %359, %360 : vector<4x256xf32>
    %362 = arith.addf %356, %361 : vector<4x256xf32>
    %c0_40 = arith.constant 0 : index
    %c32_41 = arith.constant 32 : index
    %363 = vector.load %arg8[%c0_40, %c32_41] : memref<4x320xf32, #tpu.memory_space<vmem>>, vector<4x256xf32>
    %364 = vector.extract_strided_slice %255 {offsets = [0, 16], sizes = [4, 1], strides = [1, 1]} : vector<4x36xf32> to vector<4x1xf32>
    %365 = vector.extract_strided_slice %363 {offsets = [0, 0], sizes = [1, 256], strides = [1, 1]} : vector<4x256xf32> to vector<1x256xf32>
    %366 = vector.broadcast %364 : vector<4x1xf32> to vector<4x256xf32>
    %367 = vector.broadcast %365 : vector<1x256xf32> to vector<4x256xf32>
    %368 = arith.mulf %366, %367 : vector<4x256xf32>
    %369 = arith.addf %362, %368 : vector<4x256xf32>
    %370 = vector.extract_strided_slice %255 {offsets = [0, 17], sizes = [4, 1], strides = [1, 1]} : vector<4x36xf32> to vector<4x1xf32>
    %371 = vector.extract_strided_slice %363 {offsets = [1, 0], sizes = [1, 256], strides = [1, 1]} : vector<4x256xf32> to vector<1x256xf32>
    %372 = vector.broadcast %370 : vector<4x1xf32> to vector<4x256xf32>
    %373 = vector.broadcast %371 : vector<1x256xf32> to vector<4x256xf32>
    %374 = arith.mulf %372, %373 : vector<4x256xf32>
    %375 = arith.addf %369, %374 : vector<4x256xf32>
    %376 = vector.extract_strided_slice %255 {offsets = [0, 18], sizes = [4, 1], strides = [1, 1]} : vector<4x36xf32> to vector<4x1xf32>
    %377 = vector.extract_strided_slice %363 {offsets = [2, 0], sizes = [1, 256], strides = [1, 1]} : vector<4x256xf32> to vector<1x256xf32>
    %378 = vector.broadcast %376 : vector<4x1xf32> to vector<4x256xf32>
    %379 = vector.broadcast %377 : vector<1x256xf32> to vector<4x256xf32>
    %380 = arith.mulf %378, %379 : vector<4x256xf32>
    %381 = arith.addf %375, %380 : vector<4x256xf32>
    %382 = vector.extract_strided_slice %255 {offsets = [0, 19], sizes = [4, 1], strides = [1, 1]} : vector<4x36xf32> to vector<4x1xf32>
    %383 = vector.extract_strided_slice %363 {offsets = [3, 0], sizes = [1, 256], strides = [1, 1]} : vector<4x256xf32> to vector<1x256xf32>
    %384 = vector.broadcast %382 : vector<4x1xf32> to vector<4x256xf32>
    %385 = vector.broadcast %383 : vector<1x256xf32> to vector<4x256xf32>
    %386 = arith.mulf %384, %385 : vector<4x256xf32>
    %387 = arith.addf %381, %386 : vector<4x256xf32>
    %c0_42 = arith.constant 0 : index
    %c33_43 = arith.constant 33 : index
    %388 = vector.load %arg8[%c0_42, %c33_43] : memref<4x320xf32, #tpu.memory_space<vmem>>, vector<4x256xf32>
    %389 = vector.broadcast %3 : vector<1x256xf32> to vector<4x256xf32>
    %390 = arith.mulf %388, %389 : vector<4x256xf32>
    %391 = vector.extract_strided_slice %255 {offsets = [0, 20], sizes = [4, 1], strides = [1, 1]} : vector<4x36xf32> to vector<4x1xf32>
    %392 = vector.extract_strided_slice %390 {offsets = [0, 0], sizes = [1, 256], strides = [1, 1]} : vector<4x256xf32> to vector<1x256xf32>
    %393 = vector.broadcast %391 : vector<4x1xf32> to vector<4x256xf32>
    %394 = vector.broadcast %392 : vector<1x256xf32> to vector<4x256xf32>
    %395 = arith.mulf %393, %394 : vector<4x256xf32>
    %396 = arith.addf %387, %395 : vector<4x256xf32>
    %397 = vector.extract_strided_slice %255 {offsets = [0, 21], sizes = [4, 1], strides = [1, 1]} : vector<4x36xf32> to vector<4x1xf32>
    %398 = vector.extract_strided_slice %390 {offsets = [1, 0], sizes = [1, 256], strides = [1, 1]} : vector<4x256xf32> to vector<1x256xf32>
    %399 = vector.broadcast %397 : vector<4x1xf32> to vector<4x256xf32>
    %400 = vector.broadcast %398 : vector<1x256xf32> to vector<4x256xf32>
    %401 = arith.mulf %399, %400 : vector<4x256xf32>
    %402 = arith.addf %396, %401 : vector<4x256xf32>
    %403 = vector.extract_strided_slice %255 {offsets = [0, 22], sizes = [4, 1], strides = [1, 1]} : vector<4x36xf32> to vector<4x1xf32>
    %404 = vector.extract_strided_slice %390 {offsets = [2, 0], sizes = [1, 256], strides = [1, 1]} : vector<4x256xf32> to vector<1x256xf32>
    %405 = vector.broadcast %403 : vector<4x1xf32> to vector<4x256xf32>
    %406 = vector.broadcast %404 : vector<1x256xf32> to vector<4x256xf32>
    %407 = arith.mulf %405, %406 : vector<4x256xf32>
    %408 = arith.addf %402, %407 : vector<4x256xf32>
    %409 = vector.extract_strided_slice %255 {offsets = [0, 23], sizes = [4, 1], strides = [1, 1]} : vector<4x36xf32> to vector<4x1xf32>
    %410 = vector.extract_strided_slice %390 {offsets = [3, 0], sizes = [1, 256], strides = [1, 1]} : vector<4x256xf32> to vector<1x256xf32>
    %411 = vector.broadcast %409 : vector<4x1xf32> to vector<4x256xf32>
    %412 = vector.broadcast %410 : vector<1x256xf32> to vector<4x256xf32>
    %413 = arith.mulf %411, %412 : vector<4x256xf32>
    %414 = arith.addf %408, %413 : vector<4x256xf32>
    %c0_44 = arith.constant 0 : index
    %c47_45 = arith.constant 47 : index
    %415 = vector.load %arg8[%c0_44, %c47_45] : memref<4x320xf32, #tpu.memory_space<vmem>>, vector<4x256xf32>
    %416 = vector.broadcast %2 : vector<1x256xf32> to vector<4x256xf32>
    %417 = arith.mulf %415, %416 : vector<4x256xf32>
    %418 = vector.extract_strided_slice %255 {offsets = [0, 24], sizes = [4, 1], strides = [1, 1]} : vector<4x36xf32> to vector<4x1xf32>
    %419 = vector.extract_strided_slice %417 {offsets = [0, 0], sizes = [1, 256], strides = [1, 1]} : vector<4x256xf32> to vector<1x256xf32>
    %420 = vector.broadcast %418 : vector<4x1xf32> to vector<4x256xf32>
    %421 = vector.broadcast %419 : vector<1x256xf32> to vector<4x256xf32>
    %422 = arith.mulf %420, %421 : vector<4x256xf32>
    %423 = arith.addf %414, %422 : vector<4x256xf32>
    %424 = vector.extract_strided_slice %255 {offsets = [0, 25], sizes = [4, 1], strides = [1, 1]} : vector<4x36xf32> to vector<4x1xf32>
    %425 = vector.extract_strided_slice %417 {offsets = [1, 0], sizes = [1, 256], strides = [1, 1]} : vector<4x256xf32> to vector<1x256xf32>
    %426 = vector.broadcast %424 : vector<4x1xf32> to vector<4x256xf32>
    %427 = vector.broadcast %425 : vector<1x256xf32> to vector<4x256xf32>
    %428 = arith.mulf %426, %427 : vector<4x256xf32>
    %429 = arith.addf %423, %428 : vector<4x256xf32>
    %430 = vector.extract_strided_slice %255 {offsets = [0, 26], sizes = [4, 1], strides = [1, 1]} : vector<4x36xf32> to vector<4x1xf32>
    %431 = vector.extract_strided_slice %417 {offsets = [2, 0], sizes = [1, 256], strides = [1, 1]} : vector<4x256xf32> to vector<1x256xf32>
    %432 = vector.broadcast %430 : vector<4x1xf32> to vector<4x256xf32>
    %433 = vector.broadcast %431 : vector<1x256xf32> to vector<4x256xf32>
    %434 = arith.mulf %432, %433 : vector<4x256xf32>
    %435 = arith.addf %429, %434 : vector<4x256xf32>
    %436 = vector.extract_strided_slice %255 {offsets = [0, 27], sizes = [4, 1], strides = [1, 1]} : vector<4x36xf32> to vector<4x1xf32>
    %437 = vector.extract_strided_slice %417 {offsets = [3, 0], sizes = [1, 256], strides = [1, 1]} : vector<4x256xf32> to vector<1x256xf32>
    %438 = vector.broadcast %436 : vector<4x1xf32> to vector<4x256xf32>
    %439 = vector.broadcast %437 : vector<1x256xf32> to vector<4x256xf32>
    %440 = arith.mulf %438, %439 : vector<4x256xf32>
    %441 = arith.addf %435, %440 : vector<4x256xf32>
    %c0_46 = arith.constant 0 : index
    %c48_47 = arith.constant 48 : index
    %442 = vector.load %arg8[%c0_46, %c48_47] : memref<4x320xf32, #tpu.memory_space<vmem>>, vector<4x256xf32>
    %443 = vector.extract_strided_slice %255 {offsets = [0, 28], sizes = [4, 1], strides = [1, 1]} : vector<4x36xf32> to vector<4x1xf32>
    %444 = vector.extract_strided_slice %442 {offsets = [0, 0], sizes = [1, 256], strides = [1, 1]} : vector<4x256xf32> to vector<1x256xf32>
    %445 = vector.broadcast %443 : vector<4x1xf32> to vector<4x256xf32>
    %446 = vector.broadcast %444 : vector<1x256xf32> to vector<4x256xf32>
    %447 = arith.mulf %445, %446 : vector<4x256xf32>
    %448 = arith.addf %441, %447 : vector<4x256xf32>
    %449 = vector.extract_strided_slice %255 {offsets = [0, 29], sizes = [4, 1], strides = [1, 1]} : vector<4x36xf32> to vector<4x1xf32>
    %450 = vector.extract_strided_slice %442 {offsets = [1, 0], sizes = [1, 256], strides = [1, 1]} : vector<4x256xf32> to vector<1x256xf32>
    %451 = vector.broadcast %449 : vector<4x1xf32> to vector<4x256xf32>
    %452 = vector.broadcast %450 : vector<1x256xf32> to vector<4x256xf32>
    %453 = arith.mulf %451, %452 : vector<4x256xf32>
    %454 = arith.addf %448, %453 : vector<4x256xf32>
    %455 = vector.extract_strided_slice %255 {offsets = [0, 30], sizes = [4, 1], strides = [1, 1]} : vector<4x36xf32> to vector<4x1xf32>
    %456 = vector.extract_strided_slice %442 {offsets = [2, 0], sizes = [1, 256], strides = [1, 1]} : vector<4x256xf32> to vector<1x256xf32>
    %457 = vector.broadcast %455 : vector<4x1xf32> to vector<4x256xf32>
    %458 = vector.broadcast %456 : vector<1x256xf32> to vector<4x256xf32>
    %459 = arith.mulf %457, %458 : vector<4x256xf32>
    %460 = arith.addf %454, %459 : vector<4x256xf32>
    %461 = vector.extract_strided_slice %255 {offsets = [0, 31], sizes = [4, 1], strides = [1, 1]} : vector<4x36xf32> to vector<4x1xf32>
    %462 = vector.extract_strided_slice %442 {offsets = [3, 0], sizes = [1, 256], strides = [1, 1]} : vector<4x256xf32> to vector<1x256xf32>
    %463 = vector.broadcast %461 : vector<4x1xf32> to vector<4x256xf32>
    %464 = vector.broadcast %462 : vector<1x256xf32> to vector<4x256xf32>
    %465 = arith.mulf %463, %464 : vector<4x256xf32>
    %466 = arith.addf %460, %465 : vector<4x256xf32>
    %c0_48 = arith.constant 0 : index
    %c49_49 = arith.constant 49 : index
    %467 = vector.load %arg8[%c0_48, %c49_49] : memref<4x320xf32, #tpu.memory_space<vmem>>, vector<4x256xf32>
    %468 = vector.broadcast %3 : vector<1x256xf32> to vector<4x256xf32>
    %469 = arith.mulf %467, %468 : vector<4x256xf32>
    %470 = vector.extract_strided_slice %255 {offsets = [0, 32], sizes = [4, 1], strides = [1, 1]} : vector<4x36xf32> to vector<4x1xf32>
    %471 = vector.extract_strided_slice %469 {offsets = [0, 0], sizes = [1, 256], strides = [1, 1]} : vector<4x256xf32> to vector<1x256xf32>
    %472 = vector.broadcast %470 : vector<4x1xf32> to vector<4x256xf32>
    %473 = vector.broadcast %471 : vector<1x256xf32> to vector<4x256xf32>
    %474 = arith.mulf %472, %473 : vector<4x256xf32>
    %475 = arith.addf %466, %474 : vector<4x256xf32>
    %476 = vector.extract_strided_slice %255 {offsets = [0, 33], sizes = [4, 1], strides = [1, 1]} : vector<4x36xf32> to vector<4x1xf32>
    %477 = vector.extract_strided_slice %469 {offsets = [1, 0], sizes = [1, 256], strides = [1, 1]} : vector<4x256xf32> to vector<1x256xf32>
    %478 = vector.broadcast %476 : vector<4x1xf32> to vector<4x256xf32>
    %479 = vector.broadcast %477 : vector<1x256xf32> to vector<4x256xf32>
    %480 = arith.mulf %478, %479 : vector<4x256xf32>
    %481 = arith.addf %475, %480 : vector<4x256xf32>
    %482 = vector.extract_strided_slice %255 {offsets = [0, 34], sizes = [4, 1], strides = [1, 1]} : vector<4x36xf32> to vector<4x1xf32>
    %483 = vector.extract_strided_slice %469 {offsets = [2, 0], sizes = [1, 256], strides = [1, 1]} : vector<4x256xf32> to vector<1x256xf32>
    %484 = vector.broadcast %482 : vector<4x1xf32> to vector<4x256xf32>
    %485 = vector.broadcast %483 : vector<1x256xf32> to vector<4x256xf32>
    %486 = arith.mulf %484, %485 : vector<4x256xf32>
    %487 = arith.addf %481, %486 : vector<4x256xf32>
    %488 = vector.extract_strided_slice %255 {offsets = [0, 35], sizes = [4, 1], strides = [1, 1]} : vector<4x36xf32> to vector<4x1xf32>
    %489 = vector.extract_strided_slice %469 {offsets = [3, 0], sizes = [1, 256], strides = [1, 1]} : vector<4x256xf32> to vector<1x256xf32>
    %490 = vector.broadcast %488 : vector<4x1xf32> to vector<4x256xf32>
    %491 = vector.broadcast %489 : vector<1x256xf32> to vector<4x256xf32>
    %492 = arith.mulf %490, %491 : vector<4x256xf32>
    %493 = arith.addf %487, %492 : vector<4x256xf32>
    %c1_50 = arith.constant 1 : index
    %c0_51 = arith.constant 0 : index
    %c0_52 = arith.constant 0 : index
    %494 = vector.load %arg4[%c1_50, %c0_51, %c0_52] : memref<2x4x1xf32, #tpu.memory_space<vmem>>, vector<1x4x1xf32>
    %495 = vector.shape_cast %494 : vector<1x4x1xf32> to vector<4x1xf32>
    %496 = vector.broadcast %495 : vector<4x1xf32> to vector<4x256xf32>
    %497 = arith.addf %493, %496 : vector<4x256xf32>
    %498 = vector.shape_cast %497 : vector<4x256xf32> to vector<4x16x16xf32>
    %cst_53 = arith.constant dense<0xFF800000> : vector<16x16xf32>
    %499 = vector.multi_reduction <maximumf>, %498, %cst_53 [0] : vector<4x16x16xf32> to vector<16x16xf32>
    %cst_54 = arith.constant dense<0.000000e+00> : vector<16x16xf32>
    %500 = vector.multi_reduction <add>, %498, %cst_54 [0] : vector<4x16x16xf32> to vector<16x16xf32>
    %cst_55 = arith.constant 4.000000e+00 : f32
    %501 = vector.broadcast %cst_55 : f32 to vector<16x16xf32>
    %502 = arith.divf %500, %501 : vector<16x16xf32>
    %cst_56 = arith.constant dense<0xFF800000> : vector<4x16xf32>
    %503 = vector.multi_reduction <maximumf>, %498, %cst_56 [1] : vector<4x16x16xf32> to vector<4x16xf32>
    %cst_57 = arith.constant dense<0.000000e+00> : vector<4x16xf32>
    %504 = vector.multi_reduction <add>, %498, %cst_57 [1] : vector<4x16x16xf32> to vector<4x16xf32>
    %cst_58 = arith.constant 1.600000e+01 : f32
    %505 = vector.broadcast %cst_58 : f32 to vector<4x16xf32>
    %506 = arith.divf %504, %505 : vector<4x16xf32>
    %cst_59 = arith.constant dense<0xFF800000> : vector<4x16xf32>
    %507 = vector.multi_reduction <maximumf>, %498, %cst_59 [2] : vector<4x16x16xf32> to vector<4x16xf32>
    %cst_60 = arith.constant dense<0.000000e+00> : vector<4x16xf32>
    %508 = vector.multi_reduction <add>, %498, %cst_60 [2] : vector<4x16x16xf32> to vector<4x16xf32>
    %cst_61 = arith.constant 1.600000e+01 : f32
    %509 = vector.broadcast %cst_61 : f32 to vector<4x16xf32>
    %510 = arith.divf %508, %509 : vector<4x16xf32>
    %cst_62 = arith.constant 0.000000e+00 : f32
    %511 = vector.broadcast %cst_62 : f32 to vector<2x22x128xf32>
    %c0_63 = arith.constant 0 : index
    %c0_64 = arith.constant 0 : index
    %c0_65 = arith.constant 0 : index
    %512 = vector.load %arg9[%c0_63, %c0_64, %c0_65] : memref<2x22x128xf32, #tpu.memory_space<vmem>>, vector<2x22x128xf32>
    tpu.vector_store %arg9[%c0_63, %c0_64, %c0_65], %511 {strides = array<i32>} : memref<2x22x128xf32, #tpu.memory_space<vmem>>, vector<2x22x128xf32>,
    %513 = vector.shape_cast %499 : vector<16x16xf32> to vector<1x16x16xf32>
    %c0_66 = arith.constant 0 : index
    %c3 = arith.constant 3 : index
    %c3_67 = arith.constant 3 : index
    %514 = vector.load %arg9[%c0_66, %c3, %c3_67] : memref<2x22x128xf32, #tpu.memory_space<vmem>>, vector<1x16x16xf32>
    tpu.vector_store %arg9[%c0_66, %c3, %c3_67], %513 {strides = array<i32>} : memref<2x22x128xf32, #tpu.memory_space<vmem>>, vector<1x16x16xf32>,
    %515 = vector.shape_cast %502 : vector<16x16xf32> to vector<1x16x16xf32>
    %c1_68 = arith.constant 1 : index
    %c3_69 = arith.constant 3 : index
    %c3_70 = arith.constant 3 : index
    %516 = vector.load %arg9[%c1_68, %c3_69, %c3_70] : memref<2x22x128xf32, #tpu.memory_space<vmem>>, vector<1x16x16xf32>
    tpu.vector_store %arg9[%c1_68, %c3_69, %c3_70], %515 {strides = array<i32>} : memref<2x22x128xf32, #tpu.memory_space<vmem>>, vector<1x16x16xf32>,
    %517 = vector.shape_cast %503 : vector<4x16xf32> to vector<1x4x16xf32>
    %c0_71 = arith.constant 0 : index
    %c3_72 = arith.constant 3 : index
    %c35 = arith.constant 35 : index
    %518 = vector.load %arg9[%c0_71, %c3_72, %c35] : memref<2x22x128xf32, #tpu.memory_space<vmem>>, vector<1x4x16xf32>
    tpu.vector_store %arg9[%c0_71, %c3_72, %c35], %517 {strides = array<i32>} : memref<2x22x128xf32, #tpu.memory_space<vmem>>, vector<1x4x16xf32>,
    %519 = vector.shape_cast %506 : vector<4x16xf32> to vector<1x4x16xf32>
    %c1_73 = arith.constant 1 : index
    %c3_74 = arith.constant 3 : index
    %c35_75 = arith.constant 35 : index
    %520 = vector.load %arg9[%c1_73, %c3_74, %c35_75] : memref<2x22x128xf32, #tpu.memory_space<vmem>>, vector<1x4x16xf32>
    tpu.vector_store %arg9[%c1_73, %c3_74, %c35_75], %519 {strides = array<i32>} : memref<2x22x128xf32, #tpu.memory_space<vmem>>, vector<1x4x16xf32>,
    %521 = vector.shape_cast %507 : vector<4x16xf32> to vector<1x4x16xf32>
    %c0_76 = arith.constant 0 : index
    %c3_77 = arith.constant 3 : index
    %c67 = arith.constant 67 : index
    %522 = vector.load %arg9[%c0_76, %c3_77, %c67] : memref<2x22x128xf32, #tpu.memory_space<vmem>>, vector<1x4x16xf32>
    tpu.vector_store %arg9[%c0_76, %c3_77, %c67], %521 {strides = array<i32>} : memref<2x22x128xf32, #tpu.memory_space<vmem>>, vector<1x4x16xf32>,
    %523 = vector.shape_cast %510 : vector<4x16xf32> to vector<1x4x16xf32>
    %c1_78 = arith.constant 1 : index
    %c3_79 = arith.constant 3 : index
    %c67_80 = arith.constant 67 : index
    %524 = vector.load %arg9[%c1_78, %c3_79, %c67_80] : memref<2x22x128xf32, #tpu.memory_space<vmem>>, vector<1x4x16xf32>
    tpu.vector_store %arg9[%c1_78, %c3_79, %c67_80], %523 {strides = array<i32>} : memref<2x22x128xf32, #tpu.memory_space<vmem>>, vector<1x4x16xf32>,
    %cst_81 = arith.constant 0.000000e+00 : f32
    %525 = vector.broadcast %cst_81 : f32 to vector<2x16x96xf32>
    %c0_82 = arith.constant 0 : index
    %c0_83 = arith.constant 0 : index
    %c0_84 = arith.constant 0 : index
    %526 = vector.load %arg9[%c0_82, %c0_83, %c0_84] : memref<2x22x128xf32, #tpu.memory_space<vmem>>, vector<2x16x96xf32>
    %c0_85 = arith.constant 0 : index
    %c0_86 = arith.constant 0 : index
    %c0_87 = arith.constant 0 : index
    %c0_88 = arith.constant 0 : index
    %527 = vector.load %arg5[%c0_85, %c0_86, %c0_87, %c0_88] : memref<49x2x1x96xf32, #tpu.memory_space<vmem>>, vector<1x2x1x96xf32>
    %528 = vector.shape_cast %527 : vector<1x2x1x96xf32> to vector<2x1x96xf32>
    %529 = vector.broadcast %528 : vector<2x1x96xf32> to vector<2x16x96xf32>
    %530 = arith.mulf %526, %529 : vector<2x16x96xf32>
    %531 = arith.addf %525, %530 : vector<2x16x96xf32>
    %c0_89 = arith.constant 0 : index
    %c0_90 = arith.constant 0 : index
    %c1_91 = arith.constant 1 : index
    %532 = vector.load %arg9[%c0_89, %c0_90, %c1_91] : memref<2x22x128xf32, #tpu.memory_space<vmem>>, vector<2x16x96xf32>
    %c1_92 = arith.constant 1 : index
    %c0_93 = arith.constant 0 : index
    %c0_94 = arith.constant 0 : index
    %c0_95 = arith.constant 0 : index
    %533 = vector.load %arg5[%c1_92, %c0_93, %c0_94, %c0_95] : memref<49x2x1x96xf32, #tpu.memory_space<vmem>>, vector<1x2x1x96xf32>
    %534 = vector.shape_cast %533 : vector<1x2x1x96xf32> to vector<2x1x96xf32>
    %535 = vector.broadcast %534 : vector<2x1x96xf32> to vector<2x16x96xf32>
    %536 = arith.mulf %532, %535 : vector<2x16x96xf32>
    %537 = arith.addf %531, %536 : vector<2x16x96xf32>
    %c0_96 = arith.constant 0 : index
    %c0_97 = arith.constant 0 : index
    %c2 = arith.constant 2 : index
    %538 = vector.load %arg9[%c0_96, %c0_97, %c2] : memref<2x22x128xf32, #tpu.memory_space<vmem>>, vector<2x16x96xf32>
    %c2_98 = arith.constant 2 : index
    %c0_99 = arith.constant 0 : index
    %c0_100 = arith.constant 0 : index
    %c0_101 = arith.constant 0 : index
    %539 = vector.load %arg5[%c2_98, %c0_99, %c0_100, %c0_101] : memref<49x2x1x96xf32, #tpu.memory_space<vmem>>, vector<1x2x1x96xf32>
    %540 = vector.shape_cast %539 : vector<1x2x1x96xf32> to vector<2x1x96xf32>
    %541 = vector.broadcast %540 : vector<2x1x96xf32> to vector<2x16x96xf32>
    %542 = arith.mulf %538, %541 : vector<2x16x96xf32>
    %543 = arith.addf %537, %542 : vector<2x16x96xf32>
    %c0_102 = arith.constant 0 : index
    %c0_103 = arith.constant 0 : index
    %c3_104 = arith.constant 3 : index
    %544 = vector.load %arg9[%c0_102, %c0_103, %c3_104] : memref<2x22x128xf32, #tpu.memory_space<vmem>>, vector<2x16x96xf32>
    %c3_105 = arith.constant 3 : index
    %c0_106 = arith.constant 0 : index
    %c0_107 = arith.constant 0 : index
    %c0_108 = arith.constant 0 : index
    %545 = vector.load %arg5[%c3_105, %c0_106, %c0_107, %c0_108] : memref<49x2x1x96xf32, #tpu.memory_space<vmem>>, vector<1x2x1x96xf32>
    %546 = vector.shape_cast %545 : vector<1x2x1x96xf32> to vector<2x1x96xf32>
    %547 = vector.broadcast %546 : vector<2x1x96xf32> to vector<2x16x96xf32>
    %548 = arith.mulf %544, %547 : vector<2x16x96xf32>
    %549 = arith.addf %543, %548 : vector<2x16x96xf32>
    %c0_109 = arith.constant 0 : index
    %c0_110 = arith.constant 0 : index
    %c4 = arith.constant 4 : index
    %550 = vector.load %arg9[%c0_109, %c0_110, %c4] : memref<2x22x128xf32, #tpu.memory_space<vmem>>, vector<2x16x96xf32>
    %c4_111 = arith.constant 4 : index
    %c0_112 = arith.constant 0 : index
    %c0_113 = arith.constant 0 : index
    %c0_114 = arith.constant 0 : index
    %551 = vector.load %arg5[%c4_111, %c0_112, %c0_113, %c0_114] : memref<49x2x1x96xf32, #tpu.memory_space<vmem>>, vector<1x2x1x96xf32>
    %552 = vector.shape_cast %551 : vector<1x2x1x96xf32> to vector<2x1x96xf32>
    %553 = vector.broadcast %552 : vector<2x1x96xf32> to vector<2x16x96xf32>
    %554 = arith.mulf %550, %553 : vector<2x16x96xf32>
    %555 = arith.addf %549, %554 : vector<2x16x96xf32>
    %c0_115 = arith.constant 0 : index
    %c0_116 = arith.constant 0 : index
    %c5 = arith.constant 5 : index
    %556 = vector.load %arg9[%c0_115, %c0_116, %c5] : memref<2x22x128xf32, #tpu.memory_space<vmem>>, vector<2x16x96xf32>
    %c5_117 = arith.constant 5 : index
    %c0_118 = arith.constant 0 : index
    %c0_119 = arith.constant 0 : index
    %c0_120 = arith.constant 0 : index
    %557 = vector.load %arg5[%c5_117, %c0_118, %c0_119, %c0_120] : memref<49x2x1x96xf32, #tpu.memory_space<vmem>>, vector<1x2x1x96xf32>
    %558 = vector.shape_cast %557 : vector<1x2x1x96xf32> to vector<2x1x96xf32>
    %559 = vector.broadcast %558 : vector<2x1x96xf32> to vector<2x16x96xf32>
    %560 = arith.mulf %556, %559 : vector<2x16x96xf32>
    %561 = arith.addf %555, %560 : vector<2x16x96xf32>
    %c0_121 = arith.constant 0 : index
    %c0_122 = arith.constant 0 : index
    %c6 = arith.constant 6 : index
    %562 = vector.load %arg9[%c0_121, %c0_122, %c6] : memref<2x22x128xf32, #tpu.memory_space<vmem>>, vector<2x16x96xf32>
    %c6_123 = arith.constant 6 : index
    %c0_124 = arith.constant 0 : index
    %c0_125 = arith.constant 0 : index
    %c0_126 = arith.constant 0 : index
    %563 = vector.load %arg5[%c6_123, %c0_124, %c0_125, %c0_126] : memref<49x2x1x96xf32, #tpu.memory_space<vmem>>, vector<1x2x1x96xf32>
    %564 = vector.shape_cast %563 : vector<1x2x1x96xf32> to vector<2x1x96xf32>
    %565 = vector.broadcast %564 : vector<2x1x96xf32> to vector<2x16x96xf32>
    %566 = arith.mulf %562, %565 : vector<2x16x96xf32>
    %567 = arith.addf %561, %566 : vector<2x16x96xf32>
    %c0_127 = arith.constant 0 : index
    %c1_128 = arith.constant 1 : index
    %c0_129 = arith.constant 0 : index
    %568 = vector.load %arg9[%c0_127, %c1_128, %c0_129] : memref<2x22x128xf32, #tpu.memory_space<vmem>>, vector<2x16x96xf32>
    %c7 = arith.constant 7 : index
    %c0_130 = arith.constant 0 : index
    %c0_131 = arith.constant 0 : index
    %c0_132 = arith.constant 0 : index
    %569 = vector.load %arg5[%c7, %c0_130, %c0_131, %c0_132] : memref<49x2x1x96xf32, #tpu.memory_space<vmem>>, vector<1x2x1x96xf32>
    %570 = vector.shape_cast %569 : vector<1x2x1x96xf32> to vector<2x1x96xf32>
    %571 = vector.broadcast %570 : vector<2x1x96xf32> to vector<2x16x96xf32>
    %572 = arith.mulf %568, %571 : vector<2x16x96xf32>
    %573 = arith.addf %567, %572 : vector<2x16x96xf32>
    %c0_133 = arith.constant 0 : index
    %c1_134 = arith.constant 1 : index
    %c1_135 = arith.constant 1 : index
    %574 = vector.load %arg9[%c0_133, %c1_134, %c1_135] : memref<2x22x128xf32, #tpu.memory_space<vmem>>, vector<2x16x96xf32>
    %c8 = arith.constant 8 : index
    %c0_136 = arith.constant 0 : index
    %c0_137 = arith.constant 0 : index
    %c0_138 = arith.constant 0 : index
    %575 = vector.load %arg5[%c8, %c0_136, %c0_137, %c0_138] : memref<49x2x1x96xf32, #tpu.memory_space<vmem>>, vector<1x2x1x96xf32>
    %576 = vector.shape_cast %575 : vector<1x2x1x96xf32> to vector<2x1x96xf32>
    %577 = vector.broadcast %576 : vector<2x1x96xf32> to vector<2x16x96xf32>
    %578 = arith.mulf %574, %577 : vector<2x16x96xf32>
    %579 = arith.addf %573, %578 : vector<2x16x96xf32>
    %c0_139 = arith.constant 0 : index
    %c1_140 = arith.constant 1 : index
    %c2_141 = arith.constant 2 : index
    %580 = vector.load %arg9[%c0_139, %c1_140, %c2_141] : memref<2x22x128xf32, #tpu.memory_space<vmem>>, vector<2x16x96xf32>
    %c9 = arith.constant 9 : index
    %c0_142 = arith.constant 0 : index
    %c0_143 = arith.constant 0 : index
    %c0_144 = arith.constant 0 : index
    %581 = vector.load %arg5[%c9, %c0_142, %c0_143, %c0_144] : memref<49x2x1x96xf32, #tpu.memory_space<vmem>>, vector<1x2x1x96xf32>
    %582 = vector.shape_cast %581 : vector<1x2x1x96xf32> to vector<2x1x96xf32>
    %583 = vector.broadcast %582 : vector<2x1x96xf32> to vector<2x16x96xf32>
    %584 = arith.mulf %580, %583 : vector<2x16x96xf32>
    %585 = arith.addf %579, %584 : vector<2x16x96xf32>
    %c0_145 = arith.constant 0 : index
    %c1_146 = arith.constant 1 : index
    %c3_147 = arith.constant 3 : index
    %586 = vector.load %arg9[%c0_145, %c1_146, %c3_147] : memref<2x22x128xf32, #tpu.memory_space<vmem>>, vector<2x16x96xf32>
    %c10 = arith.constant 10 : index
    %c0_148 = arith.constant 0 : index
    %c0_149 = arith.constant 0 : index
    %c0_150 = arith.constant 0 : index
    %587 = vector.load %arg5[%c10, %c0_148, %c0_149, %c0_150] : memref<49x2x1x96xf32, #tpu.memory_space<vmem>>, vector<1x2x1x96xf32>
    %588 = vector.shape_cast %587 : vector<1x2x1x96xf32> to vector<2x1x96xf32>
    %589 = vector.broadcast %588 : vector<2x1x96xf32> to vector<2x16x96xf32>
    %590 = arith.mulf %586, %589 : vector<2x16x96xf32>
    %591 = arith.addf %585, %590 : vector<2x16x96xf32>
    %c0_151 = arith.constant 0 : index
    %c1_152 = arith.constant 1 : index
    %c4_153 = arith.constant 4 : index
    %592 = vector.load %arg9[%c0_151, %c1_152, %c4_153] : memref<2x22x128xf32, #tpu.memory_space<vmem>>, vector<2x16x96xf32>
    %c11 = arith.constant 11 : index
    %c0_154 = arith.constant 0 : index
    %c0_155 = arith.constant 0 : index
    %c0_156 = arith.constant 0 : index
    %593 = vector.load %arg5[%c11, %c0_154, %c0_155, %c0_156] : memref<49x2x1x96xf32, #tpu.memory_space<vmem>>, vector<1x2x1x96xf32>
    %594 = vector.shape_cast %593 : vector<1x2x1x96xf32> to vector<2x1x96xf32>
    %595 = vector.broadcast %594 : vector<2x1x96xf32> to vector<2x16x96xf32>
    %596 = arith.mulf %592, %595 : vector<2x16x96xf32>
    %597 = arith.addf %591, %596 : vector<2x16x96xf32>
    %c0_157 = arith.constant 0 : index
    %c1_158 = arith.constant 1 : index
    %c5_159 = arith.constant 5 : index
    %598 = vector.load %arg9[%c0_157, %c1_158, %c5_159] : memref<2x22x128xf32, #tpu.memory_space<vmem>>, vector<2x16x96xf32>
    %c12 = arith.constant 12 : index
    %c0_160 = arith.constant 0 : index
    %c0_161 = arith.constant 0 : index
    %c0_162 = arith.constant 0 : index
    %599 = vector.load %arg5[%c12, %c0_160, %c0_161, %c0_162] : memref<49x2x1x96xf32, #tpu.memory_space<vmem>>, vector<1x2x1x96xf32>
    %600 = vector.shape_cast %599 : vector<1x2x1x96xf32> to vector<2x1x96xf32>
    %601 = vector.broadcast %600 : vector<2x1x96xf32> to vector<2x16x96xf32>
    %602 = arith.mulf %598, %601 : vector<2x16x96xf32>
    %603 = arith.addf %597, %602 : vector<2x16x96xf32>
    %c0_163 = arith.constant 0 : index
    %c1_164 = arith.constant 1 : index
    %c6_165 = arith.constant 6 : index
    %604 = vector.load %arg9[%c0_163, %c1_164, %c6_165] : memref<2x22x128xf32, #tpu.memory_space<vmem>>, vector<2x16x96xf32>
    %c13 = arith.constant 13 : index
    %c0_166 = arith.constant 0 : index
    %c0_167 = arith.constant 0 : index
    %c0_168 = arith.constant 0 : index
    %605 = vector.load %arg5[%c13, %c0_166, %c0_167, %c0_168] : memref<49x2x1x96xf32, #tpu.memory_space<vmem>>, vector<1x2x1x96xf32>
    %606 = vector.shape_cast %605 : vector<1x2x1x96xf32> to vector<2x1x96xf32>
    %607 = vector.broadcast %606 : vector<2x1x96xf32> to vector<2x16x96xf32>
    %608 = arith.mulf %604, %607 : vector<2x16x96xf32>
    %609 = arith.addf %603, %608 : vector<2x16x96xf32>
    %c0_169 = arith.constant 0 : index
    %c2_170 = arith.constant 2 : index
    %c0_171 = arith.constant 0 : index
    %610 = vector.load %arg9[%c0_169, %c2_170, %c0_171] : memref<2x22x128xf32, #tpu.memory_space<vmem>>, vector<2x16x96xf32>
    %c14 = arith.constant 14 : index
    %c0_172 = arith.constant 0 : index
    %c0_173 = arith.constant 0 : index
    %c0_174 = arith.constant 0 : index
    %611 = vector.load %arg5[%c14, %c0_172, %c0_173, %c0_174] : memref<49x2x1x96xf32, #tpu.memory_space<vmem>>, vector<1x2x1x96xf32>
    %612 = vector.shape_cast %611 : vector<1x2x1x96xf32> to vector<2x1x96xf32>
    %613 = vector.broadcast %612 : vector<2x1x96xf32> to vector<2x16x96xf32>
    %614 = arith.mulf %610, %613 : vector<2x16x96xf32>
    %615 = arith.addf %609, %614 : vector<2x16x96xf32>
    %c0_175 = arith.constant 0 : index
    %c2_176 = arith.constant 2 : index
    %c1_177 = arith.constant 1 : index
    %616 = vector.load %arg9[%c0_175, %c2_176, %c1_177] : memref<2x22x128xf32, #tpu.memory_space<vmem>>, vector<2x16x96xf32>
    %c15_178 = arith.constant 15 : index
    %c0_179 = arith.constant 0 : index
    %c0_180 = arith.constant 0 : index
    %c0_181 = arith.constant 0 : index
    %617 = vector.load %arg5[%c15_178, %c0_179, %c0_180, %c0_181] : memref<49x2x1x96xf32, #tpu.memory_space<vmem>>, vector<1x2x1x96xf32>
    %618 = vector.shape_cast %617 : vector<1x2x1x96xf32> to vector<2x1x96xf32>
    %619 = vector.broadcast %618 : vector<2x1x96xf32> to vector<2x16x96xf32>
    %620 = arith.mulf %616, %619 : vector<2x16x96xf32>
    %621 = arith.addf %615, %620 : vector<2x16x96xf32>
    %c0_182 = arith.constant 0 : index
    %c2_183 = arith.constant 2 : index
    %c2_184 = arith.constant 2 : index
    %622 = vector.load %arg9[%c0_182, %c2_183, %c2_184] : memref<2x22x128xf32, #tpu.memory_space<vmem>>, vector<2x16x96xf32>
    %c16_185 = arith.constant 16 : index
    %c0_186 = arith.constant 0 : index
    %c0_187 = arith.constant 0 : index
    %c0_188 = arith.constant 0 : index
    %623 = vector.load %arg5[%c16_185, %c0_186, %c0_187, %c0_188] : memref<49x2x1x96xf32, #tpu.memory_space<vmem>>, vector<1x2x1x96xf32>
    %624 = vector.shape_cast %623 : vector<1x2x1x96xf32> to vector<2x1x96xf32>
    %625 = vector.broadcast %624 : vector<2x1x96xf32> to vector<2x16x96xf32>
    %626 = arith.mulf %622, %625 : vector<2x16x96xf32>
    %627 = arith.addf %621, %626 : vector<2x16x96xf32>
    %c0_189 = arith.constant 0 : index
    %c2_190 = arith.constant 2 : index
    %c3_191 = arith.constant 3 : index
    %628 = vector.load %arg9[%c0_189, %c2_190, %c3_191] : memref<2x22x128xf32, #tpu.memory_space<vmem>>, vector<2x16x96xf32>
    %c17_192 = arith.constant 17 : index
    %c0_193 = arith.constant 0 : index
    %c0_194 = arith.constant 0 : index
    %c0_195 = arith.constant 0 : index
    %629 = vector.load %arg5[%c17_192, %c0_193, %c0_194, %c0_195] : memref<49x2x1x96xf32, #tpu.memory_space<vmem>>, vector<1x2x1x96xf32>
    %630 = vector.shape_cast %629 : vector<1x2x1x96xf32> to vector<2x1x96xf32>
    %631 = vector.broadcast %630 : vector<2x1x96xf32> to vector<2x16x96xf32>
    %632 = arith.mulf %628, %631 : vector<2x16x96xf32>
    %633 = arith.addf %627, %632 : vector<2x16x96xf32>
    %c0_196 = arith.constant 0 : index
    %c2_197 = arith.constant 2 : index
    %c4_198 = arith.constant 4 : index
    %634 = vector.load %arg9[%c0_196, %c2_197, %c4_198] : memref<2x22x128xf32, #tpu.memory_space<vmem>>, vector<2x16x96xf32>
    %c18 = arith.constant 18 : index
    %c0_199 = arith.constant 0 : index
    %c0_200 = arith.constant 0 : index
    %c0_201 = arith.constant 0 : index
    %635 = vector.load %arg5[%c18, %c0_199, %c0_200, %c0_201] : memref<49x2x1x96xf32, #tpu.memory_space<vmem>>, vector<1x2x1x96xf32>
    %636 = vector.shape_cast %635 : vector<1x2x1x96xf32> to vector<2x1x96xf32>
    %637 = vector.broadcast %636 : vector<2x1x96xf32> to vector<2x16x96xf32>
    %638 = arith.mulf %634, %637 : vector<2x16x96xf32>
    %639 = arith.addf %633, %638 : vector<2x16x96xf32>
    %c0_202 = arith.constant 0 : index
    %c2_203 = arith.constant 2 : index
    %c5_204 = arith.constant 5 : index
    %640 = vector.load %arg9[%c0_202, %c2_203, %c5_204] : memref<2x22x128xf32, #tpu.memory_space<vmem>>, vector<2x16x96xf32>
    %c19 = arith.constant 19 : index
    %c0_205 = arith.constant 0 : index
    %c0_206 = arith.constant 0 : index
    %c0_207 = arith.constant 0 : index
    %641 = vector.load %arg5[%c19, %c0_205, %c0_206, %c0_207] : memref<49x2x1x96xf32, #tpu.memory_space<vmem>>, vector<1x2x1x96xf32>
    %642 = vector.shape_cast %641 : vector<1x2x1x96xf32> to vector<2x1x96xf32>
    %643 = vector.broadcast %642 : vector<2x1x96xf32> to vector<2x16x96xf32>
    %644 = arith.mulf %640, %643 : vector<2x16x96xf32>
    %645 = arith.addf %639, %644 : vector<2x16x96xf32>
    %c0_208 = arith.constant 0 : index
    %c2_209 = arith.constant 2 : index
    %c6_210 = arith.constant 6 : index
    %646 = vector.load %arg9[%c0_208, %c2_209, %c6_210] : memref<2x22x128xf32, #tpu.memory_space<vmem>>, vector<2x16x96xf32>
    %c20 = arith.constant 20 : index
    %c0_211 = arith.constant 0 : index
    %c0_212 = arith.constant 0 : index
    %c0_213 = arith.constant 0 : index
    %647 = vector.load %arg5[%c20, %c0_211, %c0_212, %c0_213] : memref<49x2x1x96xf32, #tpu.memory_space<vmem>>, vector<1x2x1x96xf32>
    %648 = vector.shape_cast %647 : vector<1x2x1x96xf32> to vector<2x1x96xf32>
    %649 = vector.broadcast %648 : vector<2x1x96xf32> to vector<2x16x96xf32>
    %650 = arith.mulf %646, %649 : vector<2x16x96xf32>
    %651 = arith.addf %645, %650 : vector<2x16x96xf32>
    %c0_214 = arith.constant 0 : index
    %c3_215 = arith.constant 3 : index
    %c0_216 = arith.constant 0 : index
    %652 = vector.load %arg9[%c0_214, %c3_215, %c0_216] : memref<2x22x128xf32, #tpu.memory_space<vmem>>, vector<2x16x96xf32>
    %c21 = arith.constant 21 : index
    %c0_217 = arith.constant 0 : index
    %c0_218 = arith.constant 0 : index
    %c0_219 = arith.constant 0 : index
    %653 = vector.load %arg5[%c21, %c0_217, %c0_218, %c0_219] : memref<49x2x1x96xf32, #tpu.memory_space<vmem>>, vector<1x2x1x96xf32>
    %654 = vector.shape_cast %653 : vector<1x2x1x96xf32> to vector<2x1x96xf32>
    %655 = vector.broadcast %654 : vector<2x1x96xf32> to vector<2x16x96xf32>
    %656 = arith.mulf %652, %655 : vector<2x16x96xf32>
    %657 = arith.addf %651, %656 : vector<2x16x96xf32>
    %c0_220 = arith.constant 0 : index
    %c3_221 = arith.constant 3 : index
    %c1_222 = arith.constant 1 : index
    %658 = vector.load %arg9[%c0_220, %c3_221, %c1_222] : memref<2x22x128xf32, #tpu.memory_space<vmem>>, vector<2x16x96xf32>
    %c22 = arith.constant 22 : index
    %c0_223 = arith.constant 0 : index
    %c0_224 = arith.constant 0 : index
    %c0_225 = arith.constant 0 : index
    %659 = vector.load %arg5[%c22, %c0_223, %c0_224, %c0_225] : memref<49x2x1x96xf32, #tpu.memory_space<vmem>>, vector<1x2x1x96xf32>
    %660 = vector.shape_cast %659 : vector<1x2x1x96xf32> to vector<2x1x96xf32>
    %661 = vector.broadcast %660 : vector<2x1x96xf32> to vector<2x16x96xf32>
    %662 = arith.mulf %658, %661 : vector<2x16x96xf32>
    %663 = arith.addf %657, %662 : vector<2x16x96xf32>
    %c0_226 = arith.constant 0 : index
    %c3_227 = arith.constant 3 : index
    %c2_228 = arith.constant 2 : index
    %664 = vector.load %arg9[%c0_226, %c3_227, %c2_228] : memref<2x22x128xf32, #tpu.memory_space<vmem>>, vector<2x16x96xf32>
    %c23 = arith.constant 23 : index
    %c0_229 = arith.constant 0 : index
    %c0_230 = arith.constant 0 : index
    %c0_231 = arith.constant 0 : index
    %665 = vector.load %arg5[%c23, %c0_229, %c0_230, %c0_231] : memref<49x2x1x96xf32, #tpu.memory_space<vmem>>, vector<1x2x1x96xf32>
    %666 = vector.shape_cast %665 : vector<1x2x1x96xf32> to vector<2x1x96xf32>
    %667 = vector.broadcast %666 : vector<2x1x96xf32> to vector<2x16x96xf32>
    %668 = arith.mulf %664, %667 : vector<2x16x96xf32>
    %669 = arith.addf %663, %668 : vector<2x16x96xf32>
    %c0_232 = arith.constant 0 : index
    %c3_233 = arith.constant 3 : index
    %c3_234 = arith.constant 3 : index
    %670 = vector.load %arg9[%c0_232, %c3_233, %c3_234] : memref<2x22x128xf32, #tpu.memory_space<vmem>>, vector<2x16x96xf32>
    %c24 = arith.constant 24 : index
    %c0_235 = arith.constant 0 : index
    %c0_236 = arith.constant 0 : index
    %c0_237 = arith.constant 0 : index
    %671 = vector.load %arg5[%c24, %c0_235, %c0_236, %c0_237] : memref<49x2x1x96xf32, #tpu.memory_space<vmem>>, vector<1x2x1x96xf32>
    %672 = vector.shape_cast %671 : vector<1x2x1x96xf32> to vector<2x1x96xf32>
    %673 = vector.broadcast %672 : vector<2x1x96xf32> to vector<2x16x96xf32>
    %674 = arith.mulf %670, %673 : vector<2x16x96xf32>
    %675 = arith.addf %669, %674 : vector<2x16x96xf32>
    %c0_238 = arith.constant 0 : index
    %c3_239 = arith.constant 3 : index
    %c4_240 = arith.constant 4 : index
    %676 = vector.load %arg9[%c0_238, %c3_239, %c4_240] : memref<2x22x128xf32, #tpu.memory_space<vmem>>, vector<2x16x96xf32>
    %c25 = arith.constant 25 : index
    %c0_241 = arith.constant 0 : index
    %c0_242 = arith.constant 0 : index
    %c0_243 = arith.constant 0 : index
    %677 = vector.load %arg5[%c25, %c0_241, %c0_242, %c0_243] : memref<49x2x1x96xf32, #tpu.memory_space<vmem>>, vector<1x2x1x96xf32>
    %678 = vector.shape_cast %677 : vector<1x2x1x96xf32> to vector<2x1x96xf32>
    %679 = vector.broadcast %678 : vector<2x1x96xf32> to vector<2x16x96xf32>
    %680 = arith.mulf %676, %679 : vector<2x16x96xf32>
    %681 = arith.addf %675, %680 : vector<2x16x96xf32>
    %c0_244 = arith.constant 0 : index
    %c3_245 = arith.constant 3 : index
    %c5_246 = arith.constant 5 : index
    %682 = vector.load %arg9[%c0_244, %c3_245, %c5_246] : memref<2x22x128xf32, #tpu.memory_space<vmem>>, vector<2x16x96xf32>
    %c26 = arith.constant 26 : index
    %c0_247 = arith.constant 0 : index
    %c0_248 = arith.constant 0 : index
    %c0_249 = arith.constant 0 : index
    %683 = vector.load %arg5[%c26, %c0_247, %c0_248, %c0_249] : memref<49x2x1x96xf32, #tpu.memory_space<vmem>>, vector<1x2x1x96xf32>
    %684 = vector.shape_cast %683 : vector<1x2x1x96xf32> to vector<2x1x96xf32>
    %685 = vector.broadcast %684 : vector<2x1x96xf32> to vector<2x16x96xf32>
    %686 = arith.mulf %682, %685 : vector<2x16x96xf32>
    %687 = arith.addf %681, %686 : vector<2x16x96xf32>
    %c0_250 = arith.constant 0 : index
    %c3_251 = arith.constant 3 : index
    %c6_252 = arith.constant 6 : index
    %688 = vector.load %arg9[%c0_250, %c3_251, %c6_252] : memref<2x22x128xf32, #tpu.memory_space<vmem>>, vector<2x16x96xf32>
    %c27 = arith.constant 27 : index
    %c0_253 = arith.constant 0 : index
    %c0_254 = arith.constant 0 : index
    %c0_255 = arith.constant 0 : index
    %689 = vector.load %arg5[%c27, %c0_253, %c0_254, %c0_255] : memref<49x2x1x96xf32, #tpu.memory_space<vmem>>, vector<1x2x1x96xf32>
    %690 = vector.shape_cast %689 : vector<1x2x1x96xf32> to vector<2x1x96xf32>
    %691 = vector.broadcast %690 : vector<2x1x96xf32> to vector<2x16x96xf32>
    %692 = arith.mulf %688, %691 : vector<2x16x96xf32>
    %693 = arith.addf %687, %692 : vector<2x16x96xf32>
    %c0_256 = arith.constant 0 : index
    %c4_257 = arith.constant 4 : index
    %c0_258 = arith.constant 0 : index
    %694 = vector.load %arg9[%c0_256, %c4_257, %c0_258] : memref<2x22x128xf32, #tpu.memory_space<vmem>>, vector<2x16x96xf32>
    %c28 = arith.constant 28 : index
    %c0_259 = arith.constant 0 : index
    %c0_260 = arith.constant 0 : index
    %c0_261 = arith.constant 0 : index
    %695 = vector.load %arg5[%c28, %c0_259, %c0_260, %c0_261] : memref<49x2x1x96xf32, #tpu.memory_space<vmem>>, vector<1x2x1x96xf32>
    %696 = vector.shape_cast %695 : vector<1x2x1x96xf32> to vector<2x1x96xf32>
    %697 = vector.broadcast %696 : vector<2x1x96xf32> to vector<2x16x96xf32>
    %698 = arith.mulf %694, %697 : vector<2x16x96xf32>
    %699 = arith.addf %693, %698 : vector<2x16x96xf32>
    %c0_262 = arith.constant 0 : index
    %c4_263 = arith.constant 4 : index
    %c1_264 = arith.constant 1 : index
    %700 = vector.load %arg9[%c0_262, %c4_263, %c1_264] : memref<2x22x128xf32, #tpu.memory_space<vmem>>, vector<2x16x96xf32>
    %c29 = arith.constant 29 : index
    %c0_265 = arith.constant 0 : index
    %c0_266 = arith.constant 0 : index
    %c0_267 = arith.constant 0 : index
    %701 = vector.load %arg5[%c29, %c0_265, %c0_266, %c0_267] : memref<49x2x1x96xf32, #tpu.memory_space<vmem>>, vector<1x2x1x96xf32>
    %702 = vector.shape_cast %701 : vector<1x2x1x96xf32> to vector<2x1x96xf32>
    %703 = vector.broadcast %702 : vector<2x1x96xf32> to vector<2x16x96xf32>
    %704 = arith.mulf %700, %703 : vector<2x16x96xf32>
    %705 = arith.addf %699, %704 : vector<2x16x96xf32>
    %c0_268 = arith.constant 0 : index
    %c4_269 = arith.constant 4 : index
    %c2_270 = arith.constant 2 : index
    %706 = vector.load %arg9[%c0_268, %c4_269, %c2_270] : memref<2x22x128xf32, #tpu.memory_space<vmem>>, vector<2x16x96xf32>
    %c30 = arith.constant 30 : index
    %c0_271 = arith.constant 0 : index
    %c0_272 = arith.constant 0 : index
    %c0_273 = arith.constant 0 : index
    %707 = vector.load %arg5[%c30, %c0_271, %c0_272, %c0_273] : memref<49x2x1x96xf32, #tpu.memory_space<vmem>>, vector<1x2x1x96xf32>
    %708 = vector.shape_cast %707 : vector<1x2x1x96xf32> to vector<2x1x96xf32>
    %709 = vector.broadcast %708 : vector<2x1x96xf32> to vector<2x16x96xf32>
    %710 = arith.mulf %706, %709 : vector<2x16x96xf32>
    %711 = arith.addf %705, %710 : vector<2x16x96xf32>
    %c0_274 = arith.constant 0 : index
    %c4_275 = arith.constant 4 : index
    %c3_276 = arith.constant 3 : index
    %712 = vector.load %arg9[%c0_274, %c4_275, %c3_276] : memref<2x22x128xf32, #tpu.memory_space<vmem>>, vector<2x16x96xf32>
    %c31_277 = arith.constant 31 : index
    %c0_278 = arith.constant 0 : index
    %c0_279 = arith.constant 0 : index
    %c0_280 = arith.constant 0 : index
    %713 = vector.load %arg5[%c31_277, %c0_278, %c0_279, %c0_280] : memref<49x2x1x96xf32, #tpu.memory_space<vmem>>, vector<1x2x1x96xf32>
    %714 = vector.shape_cast %713 : vector<1x2x1x96xf32> to vector<2x1x96xf32>
    %715 = vector.broadcast %714 : vector<2x1x96xf32> to vector<2x16x96xf32>
    %716 = arith.mulf %712, %715 : vector<2x16x96xf32>
    %717 = arith.addf %711, %716 : vector<2x16x96xf32>
    %c0_281 = arith.constant 0 : index
    %c4_282 = arith.constant 4 : index
    %c4_283 = arith.constant 4 : index
    %718 = vector.load %arg9[%c0_281, %c4_282, %c4_283] : memref<2x22x128xf32, #tpu.memory_space<vmem>>, vector<2x16x96xf32>
    %c32_284 = arith.constant 32 : index
    %c0_285 = arith.constant 0 : index
    %c0_286 = arith.constant 0 : index
    %c0_287 = arith.constant 0 : index
    %719 = vector.load %arg5[%c32_284, %c0_285, %c0_286, %c0_287] : memref<49x2x1x96xf32, #tpu.memory_space<vmem>>, vector<1x2x1x96xf32>
    %720 = vector.shape_cast %719 : vector<1x2x1x96xf32> to vector<2x1x96xf32>
    %721 = vector.broadcast %720 : vector<2x1x96xf32> to vector<2x16x96xf32>
    %722 = arith.mulf %718, %721 : vector<2x16x96xf32>
    %723 = arith.addf %717, %722 : vector<2x16x96xf32>
    %c0_288 = arith.constant 0 : index
    %c4_289 = arith.constant 4 : index
    %c5_290 = arith.constant 5 : index
    %724 = vector.load %arg9[%c0_288, %c4_289, %c5_290] : memref<2x22x128xf32, #tpu.memory_space<vmem>>, vector<2x16x96xf32>
    %c33_291 = arith.constant 33 : index
    %c0_292 = arith.constant 0 : index
    %c0_293 = arith.constant 0 : index
    %c0_294 = arith.constant 0 : index
    %725 = vector.load %arg5[%c33_291, %c0_292, %c0_293, %c0_294] : memref<49x2x1x96xf32, #tpu.memory_space<vmem>>, vector<1x2x1x96xf32>
    %726 = vector.shape_cast %725 : vector<1x2x1x96xf32> to vector<2x1x96xf32>
    %727 = vector.broadcast %726 : vector<2x1x96xf32> to vector<2x16x96xf32>
    %728 = arith.mulf %724, %727 : vector<2x16x96xf32>
    %729 = arith.addf %723, %728 : vector<2x16x96xf32>
    %c0_295 = arith.constant 0 : index
    %c4_296 = arith.constant 4 : index
    %c6_297 = arith.constant 6 : index
    %730 = vector.load %arg9[%c0_295, %c4_296, %c6_297] : memref<2x22x128xf32, #tpu.memory_space<vmem>>, vector<2x16x96xf32>
    %c34 = arith.constant 34 : index
    %c0_298 = arith.constant 0 : index
    %c0_299 = arith.constant 0 : index
    %c0_300 = arith.constant 0 : index
    %731 = vector.load %arg5[%c34, %c0_298, %c0_299, %c0_300] : memref<49x2x1x96xf32, #tpu.memory_space<vmem>>, vector<1x2x1x96xf32>
    %732 = vector.shape_cast %731 : vector<1x2x1x96xf32> to vector<2x1x96xf32>
    %733 = vector.broadcast %732 : vector<2x1x96xf32> to vector<2x16x96xf32>
    %734 = arith.mulf %730, %733 : vector<2x16x96xf32>
    %735 = arith.addf %729, %734 : vector<2x16x96xf32>
    %c0_301 = arith.constant 0 : index
    %c5_302 = arith.constant 5 : index
    %c0_303 = arith.constant 0 : index
    %736 = vector.load %arg9[%c0_301, %c5_302, %c0_303] : memref<2x22x128xf32, #tpu.memory_space<vmem>>, vector<2x16x96xf32>
    %c35_304 = arith.constant 35 : index
    %c0_305 = arith.constant 0 : index
    %c0_306 = arith.constant 0 : index
    %c0_307 = arith.constant 0 : index
    %737 = vector.load %arg5[%c35_304, %c0_305, %c0_306, %c0_307] : memref<49x2x1x96xf32, #tpu.memory_space<vmem>>, vector<1x2x1x96xf32>
    %738 = vector.shape_cast %737 : vector<1x2x1x96xf32> to vector<2x1x96xf32>
    %739 = vector.broadcast %738 : vector<2x1x96xf32> to vector<2x16x96xf32>
    %740 = arith.mulf %736, %739 : vector<2x16x96xf32>
    %741 = arith.addf %735, %740 : vector<2x16x96xf32>
    %c0_308 = arith.constant 0 : index
    %c5_309 = arith.constant 5 : index
    %c1_310 = arith.constant 1 : index
    %742 = vector.load %arg9[%c0_308, %c5_309, %c1_310] : memref<2x22x128xf32, #tpu.memory_space<vmem>>, vector<2x16x96xf32>
    %c36 = arith.constant 36 : index
    %c0_311 = arith.constant 0 : index
    %c0_312 = arith.constant 0 : index
    %c0_313 = arith.constant 0 : index
    %743 = vector.load %arg5[%c36, %c0_311, %c0_312, %c0_313] : memref<49x2x1x96xf32, #tpu.memory_space<vmem>>, vector<1x2x1x96xf32>
    %744 = vector.shape_cast %743 : vector<1x2x1x96xf32> to vector<2x1x96xf32>
    %745 = vector.broadcast %744 : vector<2x1x96xf32> to vector<2x16x96xf32>
    %746 = arith.mulf %742, %745 : vector<2x16x96xf32>
    %747 = arith.addf %741, %746 : vector<2x16x96xf32>
    %c0_314 = arith.constant 0 : index
    %c5_315 = arith.constant 5 : index
    %c2_316 = arith.constant 2 : index
    %748 = vector.load %arg9[%c0_314, %c5_315, %c2_316] : memref<2x22x128xf32, #tpu.memory_space<vmem>>, vector<2x16x96xf32>
    %c37 = arith.constant 37 : index
    %c0_317 = arith.constant 0 : index
    %c0_318 = arith.constant 0 : index
    %c0_319 = arith.constant 0 : index
    %749 = vector.load %arg5[%c37, %c0_317, %c0_318, %c0_319] : memref<49x2x1x96xf32, #tpu.memory_space<vmem>>, vector<1x2x1x96xf32>
    %750 = vector.shape_cast %749 : vector<1x2x1x96xf32> to vector<2x1x96xf32>
    %751 = vector.broadcast %750 : vector<2x1x96xf32> to vector<2x16x96xf32>
    %752 = arith.mulf %748, %751 : vector<2x16x96xf32>
    %753 = arith.addf %747, %752 : vector<2x16x96xf32>
    %c0_320 = arith.constant 0 : index
    %c5_321 = arith.constant 5 : index
    %c3_322 = arith.constant 3 : index
    %754 = vector.load %arg9[%c0_320, %c5_321, %c3_322] : memref<2x22x128xf32, #tpu.memory_space<vmem>>, vector<2x16x96xf32>
    %c38 = arith.constant 38 : index
    %c0_323 = arith.constant 0 : index
    %c0_324 = arith.constant 0 : index
    %c0_325 = arith.constant 0 : index
    %755 = vector.load %arg5[%c38, %c0_323, %c0_324, %c0_325] : memref<49x2x1x96xf32, #tpu.memory_space<vmem>>, vector<1x2x1x96xf32>
    %756 = vector.shape_cast %755 : vector<1x2x1x96xf32> to vector<2x1x96xf32>
    %757 = vector.broadcast %756 : vector<2x1x96xf32> to vector<2x16x96xf32>
    %758 = arith.mulf %754, %757 : vector<2x16x96xf32>
    %759 = arith.addf %753, %758 : vector<2x16x96xf32>
    %c0_326 = arith.constant 0 : index
    %c5_327 = arith.constant 5 : index
    %c4_328 = arith.constant 4 : index
    %760 = vector.load %arg9[%c0_326, %c5_327, %c4_328] : memref<2x22x128xf32, #tpu.memory_space<vmem>>, vector<2x16x96xf32>
    %c39 = arith.constant 39 : index
    %c0_329 = arith.constant 0 : index
    %c0_330 = arith.constant 0 : index
    %c0_331 = arith.constant 0 : index
    %761 = vector.load %arg5[%c39, %c0_329, %c0_330, %c0_331] : memref<49x2x1x96xf32, #tpu.memory_space<vmem>>, vector<1x2x1x96xf32>
    %762 = vector.shape_cast %761 : vector<1x2x1x96xf32> to vector<2x1x96xf32>
    %763 = vector.broadcast %762 : vector<2x1x96xf32> to vector<2x16x96xf32>
    %764 = arith.mulf %760, %763 : vector<2x16x96xf32>
    %765 = arith.addf %759, %764 : vector<2x16x96xf32>
    %c0_332 = arith.constant 0 : index
    %c5_333 = arith.constant 5 : index
    %c5_334 = arith.constant 5 : index
    %766 = vector.load %arg9[%c0_332, %c5_333, %c5_334] : memref<2x22x128xf32, #tpu.memory_space<vmem>>, vector<2x16x96xf32>
    %c40 = arith.constant 40 : index
    %c0_335 = arith.constant 0 : index
    %c0_336 = arith.constant 0 : index
    %c0_337 = arith.constant 0 : index
    %767 = vector.load %arg5[%c40, %c0_335, %c0_336, %c0_337] : memref<49x2x1x96xf32, #tpu.memory_space<vmem>>, vector<1x2x1x96xf32>
    %768 = vector.shape_cast %767 : vector<1x2x1x96xf32> to vector<2x1x96xf32>
    %769 = vector.broadcast %768 : vector<2x1x96xf32> to vector<2x16x96xf32>
    %770 = arith.mulf %766, %769 : vector<2x16x96xf32>
    %771 = arith.addf %765, %770 : vector<2x16x96xf32>
    %c0_338 = arith.constant 0 : index
    %c5_339 = arith.constant 5 : index
    %c6_340 = arith.constant 6 : index
    %772 = vector.load %arg9[%c0_338, %c5_339, %c6_340] : memref<2x22x128xf32, #tpu.memory_space<vmem>>, vector<2x16x96xf32>
    %c41 = arith.constant 41 : index
    %c0_341 = arith.constant 0 : index
    %c0_342 = arith.constant 0 : index
    %c0_343 = arith.constant 0 : index
    %773 = vector.load %arg5[%c41, %c0_341, %c0_342, %c0_343] : memref<49x2x1x96xf32, #tpu.memory_space<vmem>>, vector<1x2x1x96xf32>
    %774 = vector.shape_cast %773 : vector<1x2x1x96xf32> to vector<2x1x96xf32>
    %775 = vector.broadcast %774 : vector<2x1x96xf32> to vector<2x16x96xf32>
    %776 = arith.mulf %772, %775 : vector<2x16x96xf32>
    %777 = arith.addf %771, %776 : vector<2x16x96xf32>
    %c0_344 = arith.constant 0 : index
    %c6_345 = arith.constant 6 : index
    %c0_346 = arith.constant 0 : index
    %778 = vector.load %arg9[%c0_344, %c6_345, %c0_346] : memref<2x22x128xf32, #tpu.memory_space<vmem>>, vector<2x16x96xf32>
    %c42 = arith.constant 42 : index
    %c0_347 = arith.constant 0 : index
    %c0_348 = arith.constant 0 : index
    %c0_349 = arith.constant 0 : index
    %779 = vector.load %arg5[%c42, %c0_347, %c0_348, %c0_349] : memref<49x2x1x96xf32, #tpu.memory_space<vmem>>, vector<1x2x1x96xf32>
    %780 = vector.shape_cast %779 : vector<1x2x1x96xf32> to vector<2x1x96xf32>
    %781 = vector.broadcast %780 : vector<2x1x96xf32> to vector<2x16x96xf32>
    %782 = arith.mulf %778, %781 : vector<2x16x96xf32>
    %783 = arith.addf %777, %782 : vector<2x16x96xf32>
    %c0_350 = arith.constant 0 : index
    %c6_351 = arith.constant 6 : index
    %c1_352 = arith.constant 1 : index
    %784 = vector.load %arg9[%c0_350, %c6_351, %c1_352] : memref<2x22x128xf32, #tpu.memory_space<vmem>>, vector<2x16x96xf32>
    %c43 = arith.constant 43 : index
    %c0_353 = arith.constant 0 : index
    %c0_354 = arith.constant 0 : index
    %c0_355 = arith.constant 0 : index
    %785 = vector.load %arg5[%c43, %c0_353, %c0_354, %c0_355] : memref<49x2x1x96xf32, #tpu.memory_space<vmem>>, vector<1x2x1x96xf32>
    %786 = vector.shape_cast %785 : vector<1x2x1x96xf32> to vector<2x1x96xf32>
    %787 = vector.broadcast %786 : vector<2x1x96xf32> to vector<2x16x96xf32>
    %788 = arith.mulf %784, %787 : vector<2x16x96xf32>
    %789 = arith.addf %783, %788 : vector<2x16x96xf32>
    %c0_356 = arith.constant 0 : index
    %c6_357 = arith.constant 6 : index
    %c2_358 = arith.constant 2 : index
    %790 = vector.load %arg9[%c0_356, %c6_357, %c2_358] : memref<2x22x128xf32, #tpu.memory_space<vmem>>, vector<2x16x96xf32>
    %c44 = arith.constant 44 : index
    %c0_359 = arith.constant 0 : index
    %c0_360 = arith.constant 0 : index
    %c0_361 = arith.constant 0 : index
    %791 = vector.load %arg5[%c44, %c0_359, %c0_360, %c0_361] : memref<49x2x1x96xf32, #tpu.memory_space<vmem>>, vector<1x2x1x96xf32>
    %792 = vector.shape_cast %791 : vector<1x2x1x96xf32> to vector<2x1x96xf32>
    %793 = vector.broadcast %792 : vector<2x1x96xf32> to vector<2x16x96xf32>
    %794 = arith.mulf %790, %793 : vector<2x16x96xf32>
    %795 = arith.addf %789, %794 : vector<2x16x96xf32>
    %c0_362 = arith.constant 0 : index
    %c6_363 = arith.constant 6 : index
    %c3_364 = arith.constant 3 : index
    %796 = vector.load %arg9[%c0_362, %c6_363, %c3_364] : memref<2x22x128xf32, #tpu.memory_space<vmem>>, vector<2x16x96xf32>
    %c45 = arith.constant 45 : index
    %c0_365 = arith.constant 0 : index
    %c0_366 = arith.constant 0 : index
    %c0_367 = arith.constant 0 : index
    %797 = vector.load %arg5[%c45, %c0_365, %c0_366, %c0_367] : memref<49x2x1x96xf32, #tpu.memory_space<vmem>>, vector<1x2x1x96xf32>
    %798 = vector.shape_cast %797 : vector<1x2x1x96xf32> to vector<2x1x96xf32>
    %799 = vector.broadcast %798 : vector<2x1x96xf32> to vector<2x16x96xf32>
    %800 = arith.mulf %796, %799 : vector<2x16x96xf32>
    %801 = arith.addf %795, %800 : vector<2x16x96xf32>
    %c0_368 = arith.constant 0 : index
    %c6_369 = arith.constant 6 : index
    %c4_370 = arith.constant 4 : index
    %802 = vector.load %arg9[%c0_368, %c6_369, %c4_370] : memref<2x22x128xf32, #tpu.memory_space<vmem>>, vector<2x16x96xf32>
    %c46 = arith.constant 46 : index
    %c0_371 = arith.constant 0 : index
    %c0_372 = arith.constant 0 : index
    %c0_373 = arith.constant 0 : index
    %803 = vector.load %arg5[%c46, %c0_371, %c0_372, %c0_373] : memref<49x2x1x96xf32, #tpu.memory_space<vmem>>, vector<1x2x1x96xf32>
    %804 = vector.shape_cast %803 : vector<1x2x1x96xf32> to vector<2x1x96xf32>
    %805 = vector.broadcast %804 : vector<2x1x96xf32> to vector<2x16x96xf32>
    %806 = arith.mulf %802, %805 : vector<2x16x96xf32>
    %807 = arith.addf %801, %806 : vector<2x16x96xf32>
    %c0_374 = arith.constant 0 : index
    %c6_375 = arith.constant 6 : index
    %c5_376 = arith.constant 5 : index
    %808 = vector.load %arg9[%c0_374, %c6_375, %c5_376] : memref<2x22x128xf32, #tpu.memory_space<vmem>>, vector<2x16x96xf32>
    %c47_377 = arith.constant 47 : index
    %c0_378 = arith.constant 0 : index
    %c0_379 = arith.constant 0 : index
    %c0_380 = arith.constant 0 : index
    %809 = vector.load %arg5[%c47_377, %c0_378, %c0_379, %c0_380] : memref<49x2x1x96xf32, #tpu.memory_space<vmem>>, vector<1x2x1x96xf32>
    %810 = vector.shape_cast %809 : vector<1x2x1x96xf32> to vector<2x1x96xf32>
    %811 = vector.broadcast %810 : vector<2x1x96xf32> to vector<2x16x96xf32>
    %812 = arith.mulf %808, %811 : vector<2x16x96xf32>
    %813 = arith.addf %807, %812 : vector<2x16x96xf32>
    %c0_381 = arith.constant 0 : index
    %c6_382 = arith.constant 6 : index
    %c6_383 = arith.constant 6 : index
    %814 = vector.load %arg9[%c0_381, %c6_382, %c6_383] : memref<2x22x128xf32, #tpu.memory_space<vmem>>, vector<2x16x96xf32>
    %c48_384 = arith.constant 48 : index
    %c0_385 = arith.constant 0 : index
    %c0_386 = arith.constant 0 : index
    %c0_387 = arith.constant 0 : index
    %815 = vector.load %arg5[%c48_384, %c0_385, %c0_386, %c0_387] : memref<49x2x1x96xf32, #tpu.memory_space<vmem>>, vector<1x2x1x96xf32>
    %816 = vector.shape_cast %815 : vector<1x2x1x96xf32> to vector<2x1x96xf32>
    %817 = vector.broadcast %816 : vector<2x1x96xf32> to vector<2x16x96xf32>
    %818 = arith.mulf %814, %817 : vector<2x16x96xf32>
    %819 = arith.addf %813, %818 : vector<2x16x96xf32>
    %820 = vector.extract_strided_slice %819 {offsets = [0, 0, 0], sizes = [1, 16, 96], strides = [1, 1, 1]} : vector<2x16x96xf32> to vector<1x16x96xf32>
    %821 = vector.shape_cast %820 : vector<1x16x96xf32> to vector<16x96xf32>
    %822 = vector.extract_strided_slice %819 {offsets = [1, 0, 0], sizes = [1, 16, 96], strides = [1, 1, 1]} : vector<2x16x96xf32> to vector<1x16x96xf32>
    %823 = vector.shape_cast %822 : vector<1x16x96xf32> to vector<16x96xf32>
    %824 = arith.addf %821, %823 : vector<16x96xf32>
    %c0_388 = arith.constant 0 : index
    %c0_389 = arith.constant 0 : index
    %825 = vector.load %arg6[%c0_388, %c0_389] : memref<1x96xf32, #tpu.memory_space<vmem>>, vector<1x96xf32>
    %826 = vector.broadcast %825 : vector<1x96xf32> to vector<16x96xf32>
    %827 = arith.addf %824, %826 : vector<16x96xf32>
    %cst_390 = arith.constant 0.000000e+00 : f32
    %828 = vector.broadcast %cst_390 : f32 to vector<16x96xf32>
    %829 = arith.subf %828, %827 : vector<16x96xf32>
    %830 = math.exp %829 : vector<16x96xf32>
    %cst_391 = arith.constant 1.000000e+00 : f32
    %831 = vector.broadcast %cst_391 : f32 to vector<16x96xf32>
    %832 = arith.addf %831, %830 : vector<16x96xf32>
    %833 = tpu.reciprocal %832 {approx = true} : vector<16x96xf32> -> vector<16x96xf32>
    %834 = vector.extract_strided_slice %833 {offsets = [0, 0], sizes = [16, 16], strides = [1, 1]} : vector<16x96xf32> to vector<16x16xf32>
    %835 = vector.extract_strided_slice %833 {offsets = [0, 32], sizes = [4, 16], strides = [1, 1]} : vector<16x96xf32> to vector<4x16xf32>
    %836 = vector.extract_strided_slice %833 {offsets = [0, 64], sizes = [4, 16], strides = [1, 1]} : vector<16x96xf32> to vector<4x16xf32>
    %837 = vector.shape_cast %834 : vector<16x16xf32> to vector<1x16x16xf32>
    %838 = vector.shape_cast %835 : vector<4x16xf32> to vector<4x1x16xf32>
    %839 = vector.broadcast %837 : vector<1x16x16xf32> to vector<4x16x16xf32>
    %840 = vector.broadcast %838 : vector<4x1x16xf32> to vector<4x16x16xf32>
    %841 = arith.addf %839, %840 : vector<4x16x16xf32>
    %842 = vector.shape_cast %836 : vector<4x16xf32> to vector<4x16x1xf32>
    %843 = vector.broadcast %842 : vector<4x16x1xf32> to vector<4x16x16xf32>
    %844 = arith.addf %841, %843 : vector<4x16x16xf32>
    %845 = vector.shape_cast %844 : vector<4x16x16xf32> to vector<4x256xf32>
    %846 = arith.mulf %497, %845 : vector<4x256xf32>
    %cst_392 = arith.constant 0.333333343 : f32
    %847 = vector.broadcast %cst_392 : f32 to vector<4x256xf32>
    %848 = arith.mulf %846, %847 : vector<4x256xf32>
    %849 = arith.addf %848, %1 : vector<4x256xf32>
    %cst_393 = arith.constant 0.000000e+00 : f32
    %850 = vector.broadcast %cst_393 : f32 to vector<4x256xf32>
    %851 = arith.maximumf %849, %850 : vector<4x256xf32>
    %c0_394 = arith.constant 0 : index
    %c0_395 = arith.constant 0 : index
    %c0_396 = arith.constant 0 : index
    %852 = vector.load %arg7[%c0_394, %c0_395, %c0_396] : memref<1x4x256xf32, #tpu.memory_space<vmem>>, vector<1x4x256xf32>
    %853 = vector.shape_cast %852 : vector<1x4x256xf32> to vector<4x256xf32>
    %854 = vector.shape_cast %851 : vector<4x256xf32> to vector<1x4x256xf32>
    tpu.vector_store %arg7[%c0_394, %c0_395, %c0_396], %854 {strides = array<i32>} : memref<1x4x256xf32, #tpu.memory_space<vmem>>, vector<1x4x256xf32>,
    return
  }
  func.func @transform_0(%arg0: i32) -> (i32, i32, i32) {
    %c0_i32 = arith.constant 0 : i32
    %c0_i32_0 = arith.constant 0 : i32
    %c0_i32_1 = arith.constant 0 : i32
    return %arg0, %c0_i32, %c0_i32_0 : i32, i32, i32
  }
  func.func @transform_1(%arg0: i32) -> (i32, i32) {
    %c0_i32 = arith.constant 0 : i32
    %c0_i32_0 = arith.constant 0 : i32
    %c0_i32_1 = arith.constant 0 : i32
    return %c0_i32, %c0_i32_0 : i32, i32
  }
  func.func @transform_2(%arg0: i32) -> (i32, i32, i32) {
    %c0_i32 = arith.constant 0 : i32
    %c0_i32_0 = arith.constant 0 : i32
    %c0_i32_1 = arith.constant 0 : i32
    %c0_i32_2 = arith.constant 0 : i32
    return %c0_i32, %c0_i32_0, %c0_i32_1 : i32, i32, i32
  }
  func.func @transform_3(%arg0: i32) -> (i32, i32, i32) {
    %c0_i32 = arith.constant 0 : i32
    %c0_i32_0 = arith.constant 0 : i32
    %c0_i32_1 = arith.constant 0 : i32
    %c0_i32_2 = arith.constant 0 : i32
    return %c0_i32, %c0_i32_0, %c0_i32_1 : i32, i32, i32
  }
  func.func @transform_4(%arg0: i32) -> (i32, i32, i32, i32) {
    %c0_i32 = arith.constant 0 : i32
    %c0_i32_0 = arith.constant 0 : i32
    %c0_i32_1 = arith.constant 0 : i32
    %c0_i32_2 = arith.constant 0 : i32
    %c0_i32_3 = arith.constant 0 : i32
    return %c0_i32, %c0_i32_0, %c0_i32_1, %c0_i32_2 : i32, i32, i32, i32
  }
  func.func @transform_5(%arg0: i32) -> (i32, i32) {
    %c0_i32 = arith.constant 0 : i32
    %c0_i32_0 = arith.constant 0 : i32
    %c0_i32_1 = arith.constant 0 : i32
    return %c0_i32, %c0_i32_0 : i32, i32
  }
  func.func @transform_6(%arg0: i32) -> (i32, i32, i32) {
    %c0_i32 = arith.constant 0 : i32
    %c0_i32_0 = arith.constant 0 : i32
    %c0_i32_1 = arith.constant 0 : i32
    return %arg0, %c0_i32, %c0_i32_0 : i32, i32, i32
  }
}

</mosaic_0001>

<llo_original>
// kernel: basic_block_triplet_attention.1
$region0: #{basic_block_triplet_attention.1}
  #allocation0 [shape = 'u32[]', space=smem, size = 0x4, offset = 0x4, fixed_abs, tag = 'smem constant byte address 0x4 - core index']
  #allocation1 [shape = 'u32[72,128]{1,0:T(1,128)}', space=vmem, size = 0x9000, scoped, tag = 'internal scratch']
  #allocation2 [shape = 'f32[4,320]{1,0:T(4,128)}', space=vmem, size = 0x1800, scoped, tag = 'scratch operand']
  #allocation3 [shape = 'f32[2,22,128]{2,1,0:T(8,128)}', space=vmem, size = 0x6000, scoped, tag = 'scratch operand']
  %s0 = inlined_call_operand.vmem [shape: f32[2,4,256], index: 0, kind: input, shape index: {}]
  %s1 = inlined_call_operand.vmem [shape: f32[2,256], index: 1, kind: input, shape index: {}]
  %s2 = inlined_call_operand.vmem [shape: f32[2,4,36], index: 2, kind: input, shape index: {}]
  %s3 = inlined_call_operand.vmem [shape: f32[2,4,1], index: 3, kind: input, shape index: {}]
  %s4 = inlined_call_operand.vmem [shape: f32[49,2,1,96], index: 4, kind: input, shape index: {}]
  %s5 = inlined_call_operand.vmem [shape: f32[1,96], index: 5, kind: input, shape index: {}]
  %s6 = inlined_call_operand.vmem [shape: f32[2,4,256], index: 6, kind: output, shape index: {}]
  %s7 = sld [smem:[#allocation0]]
  $region57: #{basic_block_triplet_attention.1} parent=0
    _
  %s9 = ssub.s32 1, %s7
  %s10 = scalar_select 0, %s9, %s7
  loop: start=0, step=1, limit=4
  $region2: #{basic_block_triplet_attention.1} parent=0 // loop_pre_header
    _
  $region3: #{basic_block_triplet_attention.1} parent=0 // loop_header
    %s12 = sphi 0, %s16
    %p13 = scmp.ge.s32.totalorder %s12, 4
    %s22 = sphi 0, %s24
    %s25 = sphi 0, %s22
    %s26 = sphi 0, %s25
    %s42 = sphi 0, %s26
    %s46 = sphi 0, %s46
    %s48 = sphi 0, %s46
    %s49 = sphi 0, %s48
    %s63 = sphi 0, %s49
    %s67 = sphi 0, %s67
    %s69 = sphi 0, %s67
    %s70 = sphi 0, %s69
    %s84 = sphi 0, %s70
    %s88 = sphi 0, %s88
    %s90 = sphi 0, %s88
    %s91 = sphi 0, %s90
    %s105 = sphi 0, %s91
    %s109 = sphi 0, %s109
    %s111 = sphi 0, %s109
    %s112 = sphi 0, %s111
    %s126 = sphi 0, %s112
    %s130 = sphi 0, %s130
    %s132 = sphi 0, %s130
    %s133 = sphi 0, %s132
    %s147 = sphi 0, %s133
    %s153 = sphi 0, %s155
    %s156 = sphi 0, %s153
    %s157 = sphi 0, %s156
    %s173 = sphi 0, %s157
  $region4: #{basic_block_triplet_attention.1} parent=0 // loop_header_branch
    %15 = sbr.rel (%p13) target = $region8
  $region5: #{basic_block_triplet_attention.1} parent=0 // loop_body
    %s17 = ssub.s32 %s12, 1
    %s18 = ssub.s32 %s12, 2
    %s19 = sadd.s32 %s12, 1
    %s20 = ssub.s32 %s12, %s19
    %p21 = scmp.eq.s32.totalorder %s20, 0
    %s23 = sadd.s32 %s22, 1
    %s24 = scalar_select %p21, %s22, %s23
    %p27 = pneg %p21
    %p28 = scmp.eq.s32.totalorder %s12, 1
    %p29 = por %p27, %p28
    %p30 = scmp.ne.s32.totalorder %s22, %s25
    %p31 = scmp.eq.s32.totalorder %s12, 0
    %p32 = por %p30, %p31
    %p33 = scmp.ne.s32.totalorder %s22, %s25
    %p34 = scmp.eq.s32.totalorder %s17, 1
    %p35 = por %p33, %p34
    %p36 = scmp.ne.s32.totalorder %s25, %s26
    %p37 = scmp.eq.s32.totalorder %s17, 0
    %p38 = por %p36, %p37
    %p39 = scmp.ne.s32.totalorder %s25, %s26
    %p40 = scmp.eq.s32.totalorder %s18, 1
    %p41 = por %p39, %p40
    %p43 = scmp.ne.s32.totalorder %s26, %s42
    %p44 = scmp.eq.s32.totalorder %s18, 0
    %p45 = por %p43, %p44
    %s47 = sadd.s32 %s46, 1
    %p50 = scmp.eq.s32.totalorder %s12, 1
    %p51 = scmp.ne.s32.totalorder %s46, %s48
    %p52 = scmp.eq.s32.totalorder %s12, 0
    %p53 = por %p51, %p52
    %p54 = scmp.ne.s32.totalorder %s46, %s48
    %p55 = scmp.eq.s32.totalorder %s17, 1
    %p56 = por %p54, %p55
    %p57 = scmp.ne.s32.totalorder %s48, %s49
    %p58 = scmp.eq.s32.totalorder %s17, 0
    %p59 = por %p57, %p58
    %p60 = scmp.ne.s32.totalorder %s48, %s49
    %p61 = scmp.eq.s32.totalorder %s18, 1
    %p62 = por %p60, %p61
    %p64 = scmp.ne.s32.totalorder %s49, %s63
    %p65 = scmp.eq.s32.totalorder %s18, 0
    %p66 = por %p64, %p65
    %s68 = sadd.s32 %s67, 1
    %p71 = scmp.eq.s32.totalorder %s12, 1
    %p72 = scmp.ne.s32.totalorder %s67, %s69
    %p73 = scmp.eq.s32.totalorder %s12, 0
    %p74 = por %p72, %p73
    %p75 = scmp.ne.s32.totalorder %s67, %s69
    %p76 = scmp.eq.s32.totalorder %s17, 1
    %p77 = por %p75, %p76
    %p78 = scmp.ne.s32.totalorder %s69, %s70
    %p79 = scmp.eq.s32.totalorder %s17, 0
    %p80 = por %p78, %p79
    %p81 = scmp.ne.s32.totalorder %s69, %s70
    %p82 = scmp.eq.s32.totalorder %s18, 1
    %p83 = por %p81, %p82
    %p85 = scmp.ne.s32.totalorder %s70, %s84
    %p86 = scmp.eq.s32.totalorder %s18, 0
    %p87 = por %p85, %p86
    %s89 = sadd.s32 %s88, 1
    %p92 = scmp.eq.s32.totalorder %s12, 1
    %p93 = scmp.ne.s32.totalorder %s88, %s90
    %p94 = scmp.eq.s32.totalorder %s12, 0
    %p95 = por %p93, %p94
    %p96 = scmp.ne.s32.totalorder %s88, %s90
    %p97 = scmp.eq.s32.totalorder %s17, 1
    %p98 = por %p96, %p97
    %p99 = scmp.ne.s32.totalorder %s90, %s91
    %p100 = scmp.eq.s32.totalorder %s17, 0
    %p101 = por %p99, %p100
    %p102 = scmp.ne.s32.totalorder %s90, %s91
    %p103 = scmp.eq.s32.totalorder %s18, 1
    %p104 = por %p102, %p103
    %p106 = scmp.ne.s32.totalorder %s91, %s105
    %p107 = scmp.eq.s32.totalorder %s18, 0
    %p108 = por %p106, %p107
    %s110 = sadd.s32 %s109, 1
    %p113 = scmp.eq.s32.totalorder %s12, 1
    %p114 = scmp.ne.s32.totalorder %s109, %s111
    %p115 = scmp.eq.s32.totalorder %s12, 0
    %p116 = por %p114, %p115
    %p117 = scmp.ne.s32.totalorder %s109, %s111
    %p118 = scmp.eq.s32.totalorder %s17, 1
    %p119 = por %p117, %p118
    %p120 = scmp.ne.s32.totalorder %s111, %s112
    %p121 = scmp.eq.s32.totalorder %s17, 0
    %p122 = por %p120, %p121
    %p123 = scmp.ne.s32.totalorder %s111, %s112
    %p124 = scmp.eq.s32.totalorder %s18, 1
    %p125 = por %p123, %p124
    %p127 = scmp.ne.s32.totalorder %s112, %s126
    %p128 = scmp.eq.s32.totalorder %s18, 0
    %p129 = por %p127, %p128
    %s131 = sadd.s32 %s130, 1
    %p134 = scmp.eq.s32.totalorder %s12, 1
    %p135 = scmp.ne.s32.totalorder %s130, %s132
    %p136 = scmp.eq.s32.totalorder %s12, 0
    %p137 = por %p135, %p136
    %p138 = scmp.ne.s32.totalorder %s130, %s132
    %p139 = scmp.eq.s32.totalorder %s17, 1
    %p140 = por %p138, %p139
    %p141 = scmp.ne.s32.totalorder %s132, %s133
    %p142 = scmp.eq.s32.totalorder %s17, 0
    %p143 = por %p141, %p142
    %p144 = scmp.ne.s32.totalorder %s132, %s133
    %p145 = scmp.eq.s32.totalorder %s18, 1
    %p146 = por %p144, %p145
    %p148 = scmp.ne.s32.totalorder %s133, %s147
    %p149 = scmp.eq.s32.totalorder %s18, 0
    %p150 = por %p148, %p149
    %s151 = ssub.s32 %s12, %s19
    %p152 = scmp.eq.s32.totalorder %s151, 0
    %s154 = sadd.s32 %s153, 1
    %s155 = scalar_select %p152, %s153, %s154
    %p158 = pneg %p152
    %p159 = scmp.eq.s32.totalorder %s12, 1
    %p160 = por %p158, %p159
    %p161 = scmp.ne.s32.totalorder %s153, %s156
    %p162 = scmp.eq.s32.totalorder %s12, 0
    %p163 = por %p161, %p162
    %p164 = scmp.ne.s32.totalorder %s153, %s156
    %p165 = scmp.eq.s32.totalorder %s17, 1
    %p166 = por %p164, %p165
    %p167 = scmp.ne.s32.totalorder %s156, %s157
    %p168 = scmp.eq.s32.totalorder %s17, 0
    %p169 = por %p167, %p168
    %p170 = scmp.ne.s32.totalorder %s156, %s157
    %p171 = scmp.eq.s32.totalorder %s18, 1
    %p172 = por %p170, %p171
    %p174 = scmp.ne.s32.totalorder %s157, %s173
    %p175 = scmp.eq.s32.totalorder %s18, 0
    %p176 = por %p174, %p175
    %p177 = scmp.le.s32.totalorder 1, %s12
    %p178 = scmp.lt.s32.totalorder %s12, 3
    %p179 = pnand %p177, %p178
    %p180 = pneg %p179
    // Predicated region
    $region9: #{basic_block_triplet_attention.1} parent=5 // pred_check
      _
    $region10: #{basic_block_triplet_attention.1} parent=5 // pred_check_branch
      %182 = sbr.rel (%p179) target = $region12
    $region11: #{basic_block_triplet_attention.1} parent=5 // pred_region
      %s183 = ssub.s32 %s12, 1
      // Predicated region
      $region13: #{basic_block_triplet_attention.1} parent=11 // pred_check
        %p184 = pneg %p59
      $region14: #{basic_block_triplet_attention.1} parent=11 // pred_check_branch
        %186 = sbr.rel (%p184) target = $region16
      $region15: #{basic_block_triplet_attention.1} parent=11 // pred_region
        _
      $region16: #{basic_block_triplet_attention.1} parent=11 // pred_fallthru
        _
      // Predicated region
      $region17: #{basic_block_triplet_attention.1} parent=11 // pred_check
        %p187 = pneg %p80
      $region18: #{basic_block_triplet_attention.1} parent=11 // pred_check_branch
        %189 = sbr.rel (%p187) target = $region20
      $region19: #{basic_block_triplet_attention.1} parent=11 // pred_region
        _
      $region20: #{basic_block_triplet_attention.1} parent=11 // pred_fallthru
        _
      // Predicated region
      $region21: #{basic_block_triplet_attention.1} parent=11 // pred_check
        %p190 = pneg %p101
      $region22: #{basic_block_triplet_attention.1} parent=11 // pred_check_branch
        %192 = sbr.rel (%p190) target = $region24
      $region23: #{basic_block_triplet_attention.1} parent=11 // pred_region
        _
      $region24: #{basic_block_triplet_attention.1} parent=11 // pred_fallthru
        _
      // Predicated region
      $region25: #{basic_block_triplet_attention.1} parent=11 // pred_check
        %p193 = pneg %p122
      $region26: #{basic_block_triplet_attention.1} parent=11 // pred_check_branch
        %195 = sbr.rel (%p193) target = $region28
      $region27: #{basic_block_triplet_attention.1} parent=11 // pred_region
        _
      $region28: #{basic_block_triplet_attention.1} parent=11 // pred_fallthru
        _
      // Predicated region
      $region29: #{basic_block_triplet_attention.1} parent=11 // pred_check
        %p196 = pneg %p143
      $region30: #{basic_block_triplet_attention.1} parent=11 // pred_check_branch
        %198 = sbr.rel (%p196) target = $region32
      $region31: #{basic_block_triplet_attention.1} parent=11 // pred_region
        _
      $region32: #{basic_block_triplet_attention.1} parent=11 // pred_fallthru
        _
    $region12: #{basic_block_triplet_attention.1} parent=5 // pred_fallthru
      _
    %p199 = scmp.lt.s32.totalorder %s12, 2
    // Predicated region
    $region33: #{basic_block_triplet_attention.1} parent=5 // pred_check
      %p200 = pneg %p199
    $region34: #{basic_block_triplet_attention.1} parent=5 // pred_check_branch
      %202 = sbr.rel (%p200) target = $region36
    $region35: #{basic_block_triplet_attention.1} parent=5 // pred_region
      // Predicated region
      $region37: #{basic_block_triplet_attention.1} parent=35 // pred_check
        %p203 = pneg %p32
      $region38: #{basic_block_triplet_attention.1} parent=35 // pred_check_branch
        %205 = sbr.rel (%p203) target = $region40
      $region39: #{basic_block_triplet_attention.1} parent=35 // pred_region
        %p206 = scmp.lt.s32.totalorder %s12, 1
        %s207 = scalar_select %p206, %s12, 1
        %s208 = smul.addr %s207, 2
        %s209 = smul.addr %s208, 4
        %s210 = scalar_lea.vmem %s0, %s209
      $region40: #{basic_block_triplet_attention.1} parent=35 // pred_fallthru
        _
    $region36: #{basic_block_triplet_attention.1} parent=5 // pred_fallthru
      _
    %p211 = scmp.le.s32.totalorder 1, %s12
    %p212 = scmp.lt.s32.totalorder %s12, 3
    %p213 = pnand %p211, %p212
    %p214 = pneg %p213
    // Predicated region
    $region41: #{basic_block_triplet_attention.1} parent=5 // pred_check
      _
    $region42: #{basic_block_triplet_attention.1} parent=5 // pred_check_branch
      %216 = sbr.rel (%p213) target = $region44
    $region43: #{basic_block_triplet_attention.1} parent=5 // pred_region
      %s217 = ssub.s32 %s12, 1
      %p218 = scmp.lt.s32.totalorder %s17, 1
      %s219 = scalar_select %p218, %s17, 1
      %s220 = smul.addr %s219, 2
      %s221 = smul.addr %s220, 4
      %s222 = scalar_lea.vmem %s0, %s221
      %p223 = pneg %p38
      %p224 = pneg %p35
      %p225 = pneg %p59
      %p226 = pneg %p56
      %p227 = pneg %p80
      %p228 = pneg %p77
      %p229 = pneg %p101
      %p230 = pneg %p98
      %p231 = pneg %p122
      %p232 = pneg %p119
      %p233 = pneg %p143
      %p234 = pneg %p140
      %p235 = pneg %p169
      %p236 = pneg %p166
      %p237 = scmp.lt.s32.totalorder %s17, 1
      %s238 = scalar_select %p237, %s17, 1
      %s239 = smul.addr %s238, 2
      %s240 = smul.addr %s239, 4
      %s241 = scalar_lea.vmem %s6, %s240
      %p242 = scmp.lt.s32.totalorder %s17, 1
      %s243 = scalar_select %p242, %s17, 1
      %s244 = smul.addr %s243, 2
      %s245 = smul.addr %s244, 4
      %s246 = scalar_lea.vmem %s0, %s245
      %p247 = scmp.lt.s32.totalorder %s17, 1
      %s248 = scalar_select %p247, %s17, 1
      %s249 = smul.addr %s248, 2
      %s250 = smul.addr %s249, 4
      %s251 = scalar_lea.vmem %s6, %s250
      %v252 = vld [vmem:[%s246] sm:$0xff]
      %v253 = vld [vmem:[%s1] ss:$2 sm:$0x3]
      %s254 = scalar_lea.vmem %s1, 1
      %v255 = vld [vmem:[%s254] ss:$2 sm:$0x3]
      %256 = vst [vmem:[#allocation2] sm:$0xff] 0.0
      %vm257 = vcmask 519168
      %258 = vst.msk [vmem:[#allocation2 + $0x8] sm:$0xf] %vm257, 0.0
      %260 = vrot.lane.b32.xlu0 %v252, 32
      %v261 = vpop.permute.xlu0 %260
      %v262 = vrot.slane %v261, 4
      %vm263 = vcmask 261120
      %v264 = vsel %vm263, %v262, %v261
      %vm267 = vcmask 1043712
      %vm268 = vcmask 1047556
      %vm269 = vmor %vm268, %vm267
      %270 = vst.msk [vmem:[#allocation2] sm:$0xff] %vm269, %v264
      %vm271 = vcmask 257024
      %272 = vst.msk [vmem:[#allocation2 + $0x8] sm:$0xf] %vm271, %v262
      %v273 = vld [vmem:[%s2] sm:$0xf]
      %v274 = vld [vmem:[#allocation2] sm:$0xff]
      %v275 = vld [vmem:[#allocation2 + $0x8] sm:$0xf]
      %v277 = vperm.slane %v253, 0
      %v278 = vperm.slane %v253, 1
      %v279 = vrot.slane %v278, 4
      %vm280 = vcmask 1043456
      %v281 = vsel %vm280, %v277, %v279
      %282 = vrot.lane.b32.xlu0 %v281, 15
      %v283 = vpop.permute.xlu0 %282
      %v284 = vrot.slane %v283, 4
      %vm285 = vcmask 121856
      %v286 = vsel %vm285, %v284, %v283
      %v289 = vmul.f32 %v274, %v286
      %v290 = vmul.f32 %v275, %v284
      %292 = vset.pattern.permute.xlu0 0
      %293 = vperm.xlu0 %292, %v273
      %v294 = vpop.permute.xlu0 %293
      %v298 = vperm.slane %v289, 0
      %v299 = vperm.slane %v289, 4
      %v300 = vperm.slane %v290, 0
      %v304 = vperm.slane %v298, 0
      %v305 = vperm.slane %v299, 0
      %v306 = vperm.slane %v300, 0
      %v307 = vmul.f32 %v294, %v304
      %v308 = vmul.f32 %v294, %v305
      %v309 = vmul.f32 %v294, %v306
      %v310 = vadd.f32 %v307, 0.0
      %v311 = vadd.f32 %v308, 0.0
      %v312 = vadd.f32 %v309, 0.0
      %313 = vset.pattern.permute.xlu0 1
      %314 = vperm.xlu0 %313, %v273
      %v315 = vpop.permute.xlu0 %314
      %v317 = vperm.slane %v289, 1
      %v318 = vperm.slane %v289, 5
      %v319 = vperm.slane %v290, 1
      %v323 = vperm.slane %v317, 1
      %v324 = vperm.slane %v318, 1
      %v325 = vperm.slane %v319, 1
      %v326 = vmul.f32 %v315, %v323
      %v327 = vmul.f32 %v315, %v324
      %v328 = vmul.f32 %v315, %v325
      %v329 = vadd.f32 %v310, %v326
      %v330 = vadd.f32 %v311, %v327
      %v331 = vadd.f32 %v312, %v328
      %332 = vset.pattern.permute.xlu0 2
      %333 = vperm.xlu0 %332, %v273
      %v334 = vpop.permute.xlu0 %333
      %v336 = vperm.slane %v289, 2
      %v337 = vperm.slane %v289, 6
      %v338 = vperm.slane %v290, 2
      %v342 = vperm.slane %v336, 2
      %v343 = vperm.slane %v337, 2
      %v344 = vperm.slane %v338, 2
      %v345 = vmul.f32 %v334, %v342
      %v346 = vmul.f32 %v334, %v343
      %v347 = vmul.f32 %v334, %v344
      %v348 = vadd.f32 %v329, %v345
      %v349 = vadd.f32 %v330, %v346
      %v350 = vadd.f32 %v331, %v347
      %351 = vset.pattern.permute.xlu0 3
      %352 = vperm.xlu0 %351, %v273
      %v353 = vpop.permute.xlu0 %352
      %v355 = vperm.slane %v289, 3
      %v356 = vperm.slane %v289, 7
      %v357 = vperm.slane %v290, 3
      %v361 = vperm.slane %v355, 3
      %v362 = vperm.slane %v356, 3
      %v363 = vperm.slane %v357, 3
      %v364 = vmul.f32 %v353, %v361
      %v365 = vmul.f32 %v353, %v362
      %v366 = vmul.f32 %v353, %v363
      %v367 = vadd.f32 %v348, %v364
      %v368 = vadd.f32 %v349, %v365
      %v369 = vadd.f32 %v350, %v366
      %370 = vset.pattern.permute.xlu0 4
      %371 = vperm.xlu0 %370, %v273
      %v372 = vpop.permute.xlu0 %371
      %v376 = vperm.slane %v274, 0
      %v377 = vperm.slane %v274, 4
      %v378 = vperm.slane %v275, 0
      %v382 = vperm.slane %v376, 0
      %v383 = vperm.slane %v377, 0
      %v384 = vperm.slane %v378, 0
      %v385 = vmul.f32 %v372, %v382
      %v386 = vmul.f32 %v372, %v383
      %v387 = vmul.f32 %v372, %v384
      %391 = vrot.lane.b32.xlu0 %v385, 127
      %v392 = vpop.permute.xlu0 %391
      %393 = vrot.lane.b32.xlu0 %v386, 127
      %v394 = vpop.permute.xlu0 %393
      %395 = vrot.lane.b32.xlu0 %v387, 127
      %v396 = vpop.permute.xlu0 %395
      %vm397 = vcmask 1039360
      %v398 = vsel %vm397, %v392, %v394
      %v399 = vsel %vm397, %v394, %v396
      %v403 = vadd.f32 %v367, %v398
      %v404 = vadd.f32 %v368, %v399
      %v405 = vadd.f32 %v369, %v396
      %406 = vset.pattern.permute.xlu0 5
      %407 = vperm.xlu0 %406, %v273
      %v408 = vpop.permute.xlu0 %407
      %v410 = vperm.slane %v274, 1
      %v411 = vperm.slane %v274, 5
      %v412 = vperm.slane %v275, 1
      %v416 = vperm.slane %v410, 1
      %v417 = vperm.slane %v411, 1
      %v418 = vperm.slane %v412, 1
      %v419 = vmul.f32 %v408, %v416
      %v420 = vmul.f32 %v408, %v417
      %v421 = vmul.f32 %v408, %v418
      %425 = vrot.lane.b32.xlu0 %v419, 127
      %v426 = vpop.permute.xlu0 %425
      %427 = vrot.lane.b32.xlu0 %v420, 127
      %v428 = vpop.permute.xlu0 %427
      %429 = vrot.lane.b32.xlu0 %v421, 127
      %v430 = vpop.permute.xlu0 %429
      %v431 = vsel %vm397, %v426, %v428
      %v432 = vsel %vm397, %v428, %v430
      %v436 = vadd.f32 %v403, %v431
      %v437 = vadd.f32 %v404, %v432
      %v438 = vadd.f32 %v405, %v430
      %439 = vset.pattern.permute.xlu0 6
      %440 = vperm.xlu0 %439, %v273
      %v441 = vpop.permute.xlu0 %440
      %v443 = vperm.slane %v274, 2
      %v444 = vperm.slane %v274, 6
      %v445 = vperm.slane %v275, 2
      %v449 = vperm.slane %v443, 2
      %v450 = vperm.slane %v444, 2
      %v451 = vperm.slane %v445, 2
      %v452 = vmul.f32 %v441, %v449
      %v453 = vmul.f32 %v441, %v450
      %v454 = vmul.f32 %v441, %v451
      %458 = vrot.lane.b32.xlu0 %v452, 127
      %v459 = vpop.permute.xlu0 %458
      %460 = vrot.lane.b32.xlu0 %v453, 127
      %v461 = vpop.permute.xlu0 %460
      %462 = vrot.lane.b32.xlu0 %v454, 127
      %v463 = vpop.permute.xlu0 %462
      %v464 = vsel %vm397, %v459, %v461
      %v465 = vsel %vm397, %v461, %v463
      %v469 = vadd.f32 %v436, %v464
      %v470 = vadd.f32 %v437, %v465
      %v471 = vadd.f32 %v438, %v463
      %472 = vset.pattern.permute.xlu0 7
      %473 = vperm.xlu0 %472, %v273
      %v474 = vpop.permute.xlu0 %473
      %v476 = vperm.slane %v274, 3
      %v477 = vperm.slane %v274, 7
      %v478 = vperm.slane %v275, 3
      %v482 = vperm.slane %v476, 3
      %v483 = vperm.slane %v477, 3
      %v484 = vperm.slane %v478, 3
      %v485 = vmul.f32 %v474, %v482
      %v486 = vmul.f32 %v474, %v483
      %v487 = vmul.f32 %v474, %v484
      %491 = vrot.lane.b32.xlu0 %v485, 127
      %v492 = vpop.permute.xlu0 %491
      %493 = vrot.lane.b32.xlu0 %v486, 127
      %v494 = vpop.permute.xlu0 %493
      %495 = vrot.lane.b32.xlu0 %v487, 127
      %v496 = vpop.permute.xlu0 %495
      %v497 = vsel %vm397, %v492, %v494
      %v498 = vsel %vm397, %v494, %v496
      %v502 = vadd.f32 %v469, %v497
      %v503 = vadd.f32 %v470, %v498
      %v504 = vadd.f32 %v471, %v496
      %v506 = vperm.slane %v255, 0
      %v507 = vperm.slane %v255, 1
      %v508 = vrot.slane %v507, 4
      %v509 = vsel %vm280, %v506, %v508
      %510 = vrot.lane.b32.xlu0 %v509, 17
      %v511 = vpop.permute.xlu0 %510
      %v512 = vrot.slane %v511, 4
      %vm513 = vcmask 138240
      %v514 = vsel %vm513, %v512, %v511
      %v517 = vmul.f32 %v274, %v514
      %v518 = vmul.f32 %v275, %v512
      %519 = vset.pattern.permute.xlu0 8
      %520 = vperm.xlu0 %519, %v273
      %v521 = vpop.permute.xlu0 %520
      %v525 = vperm.slane %v517, 0
      %v526 = vperm.slane %v517, 4
      %v527 = vperm.slane %v518, 0
      %v531 = vperm.slane %v525, 0
      %v532 = vperm.slane %v526, 0
      %v533 = vperm.slane %v527, 0
      %v534 = vmul.f32 %v521, %v531
      %v535 = vmul.f32 %v521, %v532
      %v536 = vmul.f32 %v521, %v533
      %540 = vrot.lane.b32.xlu0 %v534, 126
      %v541 = vpop.permute.xlu0 %540
      %542 = vrot.lane.b32.xlu0 %v535, 126
      %v543 = vpop.permute.xlu0 %542
      %544 = vrot.lane.b32.xlu0 %v536, 126
      %v545 = vpop.permute.xlu0 %544
      %vm546 = vcmask 1031168
      %v547 = vsel %vm546, %v541, %v543
      %v548 = vsel %vm546, %v543, %v545
      %v552 = vadd.f32 %v502, %v547
      %v553 = vadd.f32 %v503, %v548
      %v554 = vadd.f32 %v504, %v545
      %555 = vset.pattern.permute.xlu0 9
      %556 = vperm.xlu0 %555, %v273
      %v557 = vpop.permute.xlu0 %556
      %v559 = vperm.slane %v517, 1
      %v560 = vperm.slane %v517, 5
      %v561 = vperm.slane %v518, 1
      %v565 = vperm.slane %v559, 1
      %v566 = vperm.slane %v560, 1
      %v567 = vperm.slane %v561, 1
      %v568 = vmul.f32 %v557, %v565
      %v569 = vmul.f32 %v557, %v566
      %v570 = vmul.f32 %v557, %v567
      %574 = vrot.lane.b32.xlu0 %v568, 126
      %v575 = vpop.permute.xlu0 %574
      %576 = vrot.lane.b32.xlu0 %v569, 126
      %v577 = vpop.permute.xlu0 %576
      %578 = vrot.lane.b32.xlu0 %v570, 126
      %v579 = vpop.permute.xlu0 %578
      %v580 = vsel %vm546, %v575, %v577
      %v581 = vsel %vm546, %v577, %v579
      %v585 = vadd.f32 %v552, %v580
      %v586 = vadd.f32 %v553, %v581
      %v587 = vadd.f32 %v554, %v579
      %588 = vset.pattern.permute.xlu0 10
      %589 = vperm.xlu0 %588, %v273
      %v590 = vpop.permute.xlu0 %589
      %v592 = vperm.slane %v517, 2
      %v593 = vperm.slane %v517, 6
      %v594 = vperm.slane %v518, 2
      %v598 = vperm.slane %v592, 2
      %v599 = vperm.slane %v593, 2
      %v600 = vperm.slane %v594, 2
      %v601 = vmul.f32 %v590, %v598
      %v602 = vmul.f32 %v590, %v599
      %v603 = vmul.f32 %v590, %v600
      %607 = vrot.lane.b32.xlu0 %v601, 126
      %v608 = vpop.permute.xlu0 %607
      %609 = vrot.lane.b32.xlu0 %v602, 126
      %v610 = vpop.permute.xlu0 %609
      %611 = vrot.lane.b32.xlu0 %v603, 126
      %v612 = vpop.permute.xlu0 %611
      %v613 = vsel %vm546, %v608, %v610
      %v614 = vsel %vm546, %v610, %v612
      %v618 = vadd.f32 %v585, %v613
      %v619 = vadd.f32 %v586, %v614
      %v620 = vadd.f32 %v587, %v612
      %621 = vset.pattern.permute.xlu0 11
      %622 = vperm.xlu0 %621, %v273
      %v623 = vpop.permute.xlu0 %622
      %v625 = vperm.slane %v517, 3
      %v626 = vperm.slane %v517, 7
      %v627 = vperm.slane %v518, 3
      %v631 = vperm.slane %v625, 3
      %v632 = vperm.slane %v626, 3
      %v633 = vperm.slane %v627, 3
      %v634 = vmul.f32 %v623, %v631
      %v635 = vmul.f32 %v623, %v632
      %v636 = vmul.f32 %v623, %v633
      %640 = vrot.lane.b32.xlu0 %v634, 126
      %v641 = vpop.permute.xlu0 %640
      %642 = vrot.lane.b32.xlu0 %v635, 126
      %v643 = vpop.permute.xlu0 %642
      %644 = vrot.lane.b32.xlu0 %v636, 126
      %v645 = vpop.permute.xlu0 %644
      %v646 = vsel %vm546, %v641, %v643
      %v647 = vsel %vm546, %v643, %v645
      %v651 = vadd.f32 %v618, %v646
      %v652 = vadd.f32 %v619, %v647
      %v653 = vadd.f32 %v620, %v645
      %654 = vrot.lane.b32.xlu0 %v281, 31
      %v655 = vpop.permute.xlu0 %654
      %v656 = vrot.slane %v655, 4
      %vm657 = vcmask 252928
      %v658 = vsel %vm657, %v656, %v655
      %v661 = vmul.f32 %v274, %v658
      %v662 = vmul.f32 %v275, %v656
      %663 = vset.pattern.permute.xlu0 12
      %664 = vperm.xlu0 %663, %v273
      %v665 = vpop.permute.xlu0 %664
      %v669 = vperm.slane %v661, 0
      %v670 = vperm.slane %v661, 4
      %v671 = vperm.slane %v662, 0
      %v675 = vperm.slane %v669, 0
      %v676 = vperm.slane %v670, 0
      %v677 = vperm.slane %v671, 0
      %v678 = vmul.f32 %v665, %v675
      %v679 = vmul.f32 %v665, %v676
      %v680 = vmul.f32 %v665, %v677
      %684 = vrot.lane.b32.xlu0 %v678, 112
      %v685 = vpop.permute.xlu0 %684
      %686 = vrot.lane.b32.xlu0 %v679, 112
      %v687 = vpop.permute.xlu0 %686
      %688 = vrot.lane.b32.xlu0 %v680, 112
      %v689 = vpop.permute.xlu0 %688
      %vm690 = vcmask 916480
      %v691 = vsel %vm690, %v685, %v687
      %v692 = vsel %vm690, %v687, %v689
      %v696 = vadd.f32 %v651, %v691
      %v697 = vadd.f32 %v652, %v692
      %v698 = vadd.f32 %v653, %v689
      %699 = vset.pattern.permute.xlu0 13
      %700 = vperm.xlu0 %699, %v273
      %v701 = vpop.permute.xlu0 %700
      %v703 = vperm.slane %v661, 1
      %v704 = vperm.slane %v661, 5
      %v705 = vperm.slane %v662, 1
      %v709 = vperm.slane %v703, 1
      %v710 = vperm.slane %v704, 1
      %v711 = vperm.slane %v705, 1
      %v712 = vmul.f32 %v701, %v709
      %v713 = vmul.f32 %v701, %v710
      %v714 = vmul.f32 %v701, %v711
      %718 = vrot.lane.b32.xlu0 %v712, 112
      %v719 = vpop.permute.xlu0 %718
      %720 = vrot.lane.b32.xlu0 %v713, 112
      %v721 = vpop.permute.xlu0 %720
      %722 = vrot.lane.b32.xlu0 %v714, 112
      %v723 = vpop.permute.xlu0 %722
      %v724 = vsel %vm690, %v719, %v721
      %v725 = vsel %vm690, %v721, %v723
      %v729 = vadd.f32 %v696, %v724
      %v730 = vadd.f32 %v697, %v725
      %v731 = vadd.f32 %v698, %v723
      %732 = vset.pattern.permute.xlu0 14
      %733 = vperm.xlu0 %732, %v273
      %v734 = vpop.permute.xlu0 %733
      %v736 = vperm.slane %v661, 2
      %v737 = vperm.slane %v661, 6
      %v738 = vperm.slane %v662, 2
      %v742 = vperm.slane %v736, 2
      %v743 = vperm.slane %v737, 2
      %v744 = vperm.slane %v738, 2
      %v745 = vmul.f32 %v734, %v742
      %v746 = vmul.f32 %v734, %v743
      %v747 = vmul.f32 %v734, %v744
      %751 = vrot.lane.b32.xlu0 %v745, 112
      %v752 = vpop.permute.xlu0 %751
      %753 = vrot.lane.b32.xlu0 %v746, 112
      %v754 = vpop.permute.xlu0 %753
      %755 = vrot.lane.b32.xlu0 %v747, 112
      %v756 = vpop.permute.xlu0 %755
      %v757 = vsel %vm690, %v752, %v754
      %v758 = vsel %vm690, %v754, %v756
      %v762 = vadd.f32 %v729, %v757
      %v763 = vadd.f32 %v730, %v758
      %v764 = vadd.f32 %v731, %v756
      %765 = vset.pattern.permute.xlu0 15
      %766 = vperm.xlu0 %765, %v273
      %v767 = vpop.permute.xlu0 %766
      %v769 = vperm.slane %v661, 3
      %v770 = vperm.slane %v661, 7
      %v771 = vperm.slane %v662, 3
      %v775 = vperm.slane %v769, 3
      %v776 = vperm.slane %v770, 3
      %v777 = vperm.slane %v771, 3
      %v778 = vmul.f32 %v767, %v775
      %v779 = vmul.f32 %v767, %v776
      %v780 = vmul.f32 %v767, %v777
      %784 = vrot.lane.b32.xlu0 %v778, 112
      %v785 = vpop.permute.xlu0 %784
      %786 = vrot.lane.b32.xlu0 %v779, 112
      %v787 = vpop.permute.xlu0 %786
      %788 = vrot.lane.b32.xlu0 %v780, 112
      %v789 = vpop.permute.xlu0 %788
      %v790 = vsel %vm690, %v785, %v787
      %v791 = vsel %vm690, %v787, %v789
      %v795 = vadd.f32 %v762, %v790
      %v796 = vadd.f32 %v763, %v791
      %v797 = vadd.f32 %v764, %v789
      %798 = vset.pattern.permute.xlu0 16
      %799 = vperm.xlu0 %798, %v273
      %v800 = vpop.permute.xlu0 %799
      %v802 = vmul.f32 %v800, %v382
      %v803 = vmul.f32 %v800, %v383
      %v804 = vmul.f32 %v800, %v384
      %808 = vrot.lane.b32.xlu0 %v802, 111
      %v809 = vpop.permute.xlu0 %808
      %810 = vrot.lane.b32.xlu0 %v803, 111
      %v811 = vpop.permute.xlu0 %810
      %812 = vrot.lane.b32.xlu0 %v804, 111
      %v813 = vpop.permute.xlu0 %812
      %vm814 = vcmask 908288
      %v815 = vsel %vm814, %v809, %v811
      %v816 = vsel %vm814, %v811, %v813
      %v820 = vadd.f32 %v795, %v815
      %v821 = vadd.f32 %v796, %v816
      %v822 = vadd.f32 %v797, %v813
      %823 = vset.pattern.permute.xlu0 17
      %824 = vperm.xlu0 %823, %v273
      %v825 = vpop.permute.xlu0 %824
      %v827 = vmul.f32 %v825, %v416
      %v828 = vmul.f32 %v825, %v417
      %v829 = vmul.f32 %v825, %v418
      %833 = vrot.lane.b32.xlu0 %v827, 111
      %v834 = vpop.permute.xlu0 %833
      %835 = vrot.lane.b32.xlu0 %v828, 111
      %v836 = vpop.permute.xlu0 %835
      %837 = vrot.lane.b32.xlu0 %v829, 111
      %v838 = vpop.permute.xlu0 %837
      %v839 = vsel %vm814, %v834, %v836
      %v840 = vsel %vm814, %v836, %v838
      %v844 = vadd.f32 %v820, %v839
      %v845 = vadd.f32 %v821, %v840
      %v846 = vadd.f32 %v822, %v838
      %847 = vset.pattern.permute.xlu0 18
      %848 = vperm.xlu0 %847, %v273
      %v849 = vpop.permute.xlu0 %848
      %v851 = vmul.f32 %v849, %v449
      %v852 = vmul.f32 %v849, %v450
      %v853 = vmul.f32 %v849, %v451
      %857 = vrot.lane.b32.xlu0 %v851, 111
      %v858 = vpop.permute.xlu0 %857
      %859 = vrot.lane.b32.xlu0 %v852, 111
      %v860 = vpop.permute.xlu0 %859
      %861 = vrot.lane.b32.xlu0 %v853, 111
      %v862 = vpop.permute.xlu0 %861
      %v863 = vsel %vm814, %v858, %v860
      %v864 = vsel %vm814, %v860, %v862
      %v868 = vadd.f32 %v844, %v863
      %v869 = vadd.f32 %v845, %v864
      %v870 = vadd.f32 %v846, %v862
      %871 = vset.pattern.permute.xlu0 19
      %872 = vperm.xlu0 %871, %v273
      %v873 = vpop.permute.xlu0 %872
      %v875 = vmul.f32 %v873, %v482
      %v876 = vmul.f32 %v873, %v483
      %v877 = vmul.f32 %v873, %v484
      %881 = vrot.lane.b32.xlu0 %v875, 111
      %v882 = vpop.permute.xlu0 %881
      %883 = vrot.lane.b32.xlu0 %v876, 111
      %v884 = vpop.permute.xlu0 %883
      %885 = vrot.lane.b32.xlu0 %v877, 111
      %v886 = vpop.permute.xlu0 %885
      %v887 = vsel %vm814, %v882, %v884
      %v888 = vsel %vm814, %v884, %v886
      %v892 = vadd.f32 %v868, %v887
      %v893 = vadd.f32 %v869, %v888
      %v894 = vadd.f32 %v870, %v886
      %895 = vrot.lane.b32.xlu0 %v509, 33
      %v896 = vpop.permute.xlu0 %895
      %v897 = vrot.slane %v896, 4
      %vm898 = vcmask 269312
      %v899 = vsel %vm898, %v897, %v896
      %v902 = vmul.f32 %v274, %v899
      %v903 = vmul.f32 %v275, %v897
      %904 = vset.pattern.permute.xlu0 20
      %905 = vperm.xlu0 %904, %v273
      %v906 = vpop.permute.xlu0 %905
      %v910 = vperm.slane %v902, 0
      %v911 = vperm.slane %v902, 4
      %v912 = vperm.slane %v903, 0
      %v916 = vperm.slane %v910, 0
      %v917 = vperm.slane %v911, 0
      %v918 = vperm.slane %v912, 0
      %v919 = vmul.f32 %v906, %v916
      %v920 = vmul.f32 %v906, %v917
      %v921 = vmul.f32 %v906, %v918
      %925 = vrot.lane.b32.xlu0 %v919, 110
      %v926 = vpop.permute.xlu0 %925
      %927 = vrot.lane.b32.xlu0 %v920, 110
      %v928 = vpop.permute.xlu0 %927
      %929 = vrot.lane.b32.xlu0 %v921, 110
      %v930 = vpop.permute.xlu0 %929
      %vm931 = vcmask 900096
      %v932 = vsel %vm931, %v926, %v928
      %v933 = vsel %vm931, %v928, %v930
      %v937 = vadd.f32 %v892, %v932
      %v938 = vadd.f32 %v893, %v933
      %v939 = vadd.f32 %v894, %v930
      %940 = vset.pattern.permute.xlu0 21
      %941 = vperm.xlu0 %940, %v273
      %v942 = vpop.permute.xlu0 %941
      %v944 = vperm.slane %v902, 1
      %v945 = vperm.slane %v902, 5
      %v946 = vperm.slane %v903, 1
      %v950 = vperm.slane %v944, 1
      %v951 = vperm.slane %v945, 1
      %v952 = vperm.slane %v946, 1
      %v953 = vmul.f32 %v942, %v950
      %v954 = vmul.f32 %v942, %v951
      %v955 = vmul.f32 %v942, %v952
      %959 = vrot.lane.b32.xlu0 %v953, 110
      %v960 = vpop.permute.xlu0 %959
      %961 = vrot.lane.b32.xlu0 %v954, 110
      %v962 = vpop.permute.xlu0 %961
      %963 = vrot.lane.b32.xlu0 %v955, 110
      %v964 = vpop.permute.xlu0 %963
      %v965 = vsel %vm931, %v960, %v962
      %v966 = vsel %vm931, %v962, %v964
      %v970 = vadd.f32 %v937, %v965
      %v971 = vadd.f32 %v938, %v966
      %v972 = vadd.f32 %v939, %v964
      %973 = vset.pattern.permute.xlu0 22
      %974 = vperm.xlu0 %973, %v273
      %v975 = vpop.permute.xlu0 %974
      %v977 = vperm.slane %v902, 2
      %v978 = vperm.slane %v902, 6
      %v979 = vperm.slane %v903, 2
      %v983 = vperm.slane %v977, 2
      %v984 = vperm.slane %v978, 2
      %v985 = vperm.slane %v979, 2
      %v986 = vmul.f32 %v975, %v983
      %v987 = vmul.f32 %v975, %v984
      %v988 = vmul.f32 %v975, %v985
      %992 = vrot.lane.b32.xlu0 %v986, 110
      %v993 = vpop.permute.xlu0 %992
      %994 = vrot.lane.b32.xlu0 %v987, 110
      %v995 = vpop.permute.xlu0 %994
      %996 = vrot.lane.b32.xlu0 %v988, 110
      %v997 = vpop.permute.xlu0 %996
      %v998 = vsel %vm931, %v993, %v995
      %v999 = vsel %vm931, %v995, %v997
      %v1003 = vadd.f32 %v970, %v998
      %v1004 = vadd.f32 %v971, %v999
      %v1005 = vadd.f32 %v972, %v997
      %1006 = vset.pattern.permute.xlu0 23
      %1007 = vperm.xlu0 %1006, %v273
      %v1008 = vpop.permute.xlu0 %1007
      %v1010 = vperm.slane %v902, 3
      %v1011 = vperm.slane %v902, 7
      %v1012 = vperm.slane %v903, 3
      %v1016 = vperm.slane %v1010, 3
      %v1017 = vperm.slane %v1011, 3
      %v1018 = vperm.slane %v1012, 3
      %v1019 = vmul.f32 %v1008, %v1016
      %v1020 = vmul.f32 %v1008, %v1017
      %v1021 = vmul.f32 %v1008, %v1018
      %1025 = vrot.lane.b32.xlu0 %v1019, 110
      %v1026 = vpop.permute.xlu0 %1025
      %1027 = vrot.lane.b32.xlu0 %v1020, 110
      %v1028 = vpop.permute.xlu0 %1027
      %1029 = vrot.lane.b32.xlu0 %v1021, 110
      %v1030 = vpop.permute.xlu0 %1029
      %v1031 = vsel %vm931, %v1026, %v1028
      %v1032 = vsel %vm931, %v1028, %v1030
      %v1036 = vadd.f32 %v1003, %v1031
      %v1037 = vadd.f32 %v1004, %v1032
      %v1038 = vadd.f32 %v1005, %v1030
      %1039 = vrot.lane.b32.xlu0 %v281, 47
      %v1040 = vpop.permute.xlu0 %1039
      %v1041 = vrot.slane %v1040, 4
      %vm1042 = vcmask 384000
      %v1043 = vsel %vm1042, %v1041, %v1040
      %v1046 = vmul.f32 %v274, %v1043
      %v1047 = vmul.f32 %v275, %v1041
      %1048 = vset.pattern.permute.xlu0 24
      %1049 = vperm.xlu0 %1048, %v273
      %v1050 = vpop.permute.xlu0 %1049
      %v1054 = vperm.slane %v1046, 0
      %v1055 = vperm.slane %v1046, 4
      %v1056 = vperm.slane %v1047, 0
      %v1060 = vperm.slane %v1054, 0
      %v1061 = vperm.slane %v1055, 0
      %v1062 = vperm.slane %v1056, 0
      %v1063 = vmul.f32 %v1050, %v1060
      %v1064 = vmul.f32 %v1050, %v1061
      %v1065 = vmul.f32 %v1050, %v1062
      %1069 = vrot.lane.b32.xlu0 %v1063, 96
      %v1070 = vpop.permute.xlu0 %1069
      %1071 = vrot.lane.b32.xlu0 %v1064, 96
      %v1072 = vpop.permute.xlu0 %1071
      %1073 = vrot.lane.b32.xlu0 %v1065, 96
      %v1074 = vpop.permute.xlu0 %1073
      %vm1075 = vcmask 785408
      %v1076 = vsel %vm1075, %v1070, %v1072
      %v1077 = vsel %vm1075, %v1072, %v1074
      %v1081 = vadd.f32 %v1036, %v1076
      %v1082 = vadd.f32 %v1037, %v1077
      %v1083 = vadd.f32 %v1038, %v1074
      %1084 = vset.pattern.permute.xlu0 25
      %1085 = vperm.xlu0 %1084, %v273
      %v1086 = vpop.permute.xlu0 %1085
      %v1088 = vperm.slane %v1046, 1
      %v1089 = vperm.slane %v1046, 5
      %v1090 = vperm.slane %v1047, 1
      %v1094 = vperm.slane %v1088, 1
      %v1095 = vperm.slane %v1089, 1
      %v1096 = vperm.slane %v1090, 1
      %v1097 = vmul.f32 %v1086, %v1094
      %v1098 = vmul.f32 %v1086, %v1095
      %v1099 = vmul.f32 %v1086, %v1096
      %1103 = vrot.lane.b32.xlu0 %v1097, 96
      %v1104 = vpop.permute.xlu0 %1103
      %1105 = vrot.lane.b32.xlu0 %v1098, 96
      %v1106 = vpop.permute.xlu0 %1105
      %1107 = vrot.lane.b32.xlu0 %v1099, 96
      %v1108 = vpop.permute.xlu0 %1107
      %v1109 = vsel %vm1075, %v1104, %v1106
      %v1110 = vsel %vm1075, %v1106, %v1108
      %v1114 = vadd.f32 %v1081, %v1109
      %v1115 = vadd.f32 %v1082, %v1110
      %v1116 = vadd.f32 %v1083, %v1108
      %1117 = vset.pattern.permute.xlu0 26
      %1118 = vperm.xlu0 %1117, %v273
      %v1119 = vpop.permute.xlu0 %1118
      %v1121 = vperm.slane %v1046, 2
      %v1122 = vperm.slane %v1046, 6
      %v1123 = vperm.slane %v1047, 2
      %v1127 = vperm.slane %v1121, 2
      %v1128 = vperm.slane %v1122, 2
      %v1129 = vperm.slane %v1123, 2
      %v1130 = vmul.f32 %v1119, %v1127
      %v1131 = vmul.f32 %v1119, %v1128
      %v1132 = vmul.f32 %v1119, %v1129
      %1136 = vrot.lane.b32.xlu0 %v1130, 96
      %v1137 = vpop.permute.xlu0 %1136
      %1138 = vrot.lane.b32.xlu0 %v1131, 96
      %v1139 = vpop.permute.xlu0 %1138
      %1140 = vrot.lane.b32.xlu0 %v1132, 96
      %v1141 = vpop.permute.xlu0 %1140
      %v1142 = vsel %vm1075, %v1137, %v1139
      %v1143 = vsel %vm1075, %v1139, %v1141
      %v1147 = vadd.f32 %v1114, %v1142
      %v1148 = vadd.f32 %v1115, %v1143
      %v1149 = vadd.f32 %v1116, %v1141
      %1150 = vset.pattern.permute.xlu0 27
      %1151 = vperm.xlu0 %1150, %v273
      %v1152 = vpop.permute.xlu0 %1151
      %v1154 = vperm.slane %v1046, 3
      %v1155 = vperm.slane %v1046, 7
      %v1156 = vperm.slane %v1047, 3
      %v1160 = vperm.slane %v1154, 3
      %v1161 = vperm.slane %v1155, 3
      %v1162 = vperm.slane %v1156, 3
      %v1163 = vmul.f32 %v1152, %v1160
      %v1164 = vmul.f32 %v1152, %v1161
      %v1165 = vmul.f32 %v1152, %v1162
      %1169 = vrot.lane.b32.xlu0 %v1163, 96
      %v1170 = vpop.permute.xlu0 %1169
      %1171 = vrot.lane.b32.xlu0 %v1164, 96
      %v1172 = vpop.permute.xlu0 %1171
      %1173 = vrot.lane.b32.xlu0 %v1165, 96
      %v1174 = vpop.permute.xlu0 %1173
      %v1175 = vsel %vm1075, %v1170, %v1172
      %v1176 = vsel %vm1075, %v1172, %v1174
      %v1180 = vadd.f32 %v1147, %v1175
      %v1181 = vadd.f32 %v1148, %v1176
      %v1182 = vadd.f32 %v1149, %v1174
      %1183 = vset.pattern.permute.xlu0 28
      %1184 = vperm.xlu0 %1183, %v273
      %v1185 = vpop.permute.xlu0 %1184
      %v1187 = vmul.f32 %v1185, %v382
      %v1188 = vmul.f32 %v1185, %v383
      %v1189 = vmul.f32 %v1185, %v384
      %1193 = vrot.lane.b32.xlu0 %v1187, 95
      %v1194 = vpop.permute.xlu0 %1193
      %1195 = vrot.lane.b32.xlu0 %v1188, 95
      %v1196 = vpop.permute.xlu0 %1195
      %1197 = vrot.lane.b32.xlu0 %v1189, 95
      %v1198 = vpop.permute.xlu0 %1197
      %vm1199 = vcmask 777216
      %v1200 = vsel %vm1199, %v1194, %v1196
      %v1201 = vsel %vm1199, %v1196, %v1198
      %v1205 = vadd.f32 %v1180, %v1200
      %v1206 = vadd.f32 %v1181, %v1201
      %v1207 = vadd.f32 %v1182, %v1198
      %1208 = vset.pattern.permute.xlu0 29
      %1209 = vperm.xlu0 %1208, %v273
      %v1210 = vpop.permute.xlu0 %1209
      %v1212 = vmul.f32 %v1210, %v416
      %v1213 = vmul.f32 %v1210, %v417
      %v1214 = vmul.f32 %v1210, %v418
      %1218 = vrot.lane.b32.xlu0 %v1212, 95
      %v1219 = vpop.permute.xlu0 %1218
      %1220 = vrot.lane.b32.xlu0 %v1213, 95
      %v1221 = vpop.permute.xlu0 %1220
      %1222 = vrot.lane.b32.xlu0 %v1214, 95
      %v1223 = vpop.permute.xlu0 %1222
      %v1224 = vsel %vm1199, %v1219, %v1221
      %v1225 = vsel %vm1199, %v1221, %v1223
      %v1229 = vadd.f32 %v1205, %v1224
      %v1230 = vadd.f32 %v1206, %v1225
      %v1231 = vadd.f32 %v1207, %v1223
      %1232 = vset.pattern.permute.xlu0 30
      %1233 = vperm.xlu0 %1232, %v273
      %v1234 = vpop.permute.xlu0 %1233
      %v1236 = vmul.f32 %v1234, %v449
      %v1237 = vmul.f32 %v1234, %v450
      %v1238 = vmul.f32 %v1234, %v451
      %1242 = vrot.lane.b32.xlu0 %v1236, 95
      %v1243 = vpop.permute.xlu0 %1242
      %1244 = vrot.lane.b32.xlu0 %v1237, 95
      %v1245 = vpop.permute.xlu0 %1244
      %1246 = vrot.lane.b32.xlu0 %v1238, 95
      %v1247 = vpop.permute.xlu0 %1246
      %v1248 = vsel %vm1199, %v1243, %v1245
      %v1249 = vsel %vm1199, %v1245, %v1247
      %v1253 = vadd.f32 %v1229, %v1248
      %v1254 = vadd.f32 %v1230, %v1249
      %v1255 = vadd.f32 %v1231, %v1247
      %1256 = vset.pattern.permute.xlu0 31
      %1257 = vperm.xlu0 %1256, %v273
      %v1258 = vpop.permute.xlu0 %1257
      %v1260 = vmul.f32 %v1258, %v482
      %v1261 = vmul.f32 %v1258, %v483
      %v1262 = vmul.f32 %v1258, %v484
      %1266 = vrot.lane.b32.xlu0 %v1260, 95
      %v1267 = vpop.permute.xlu0 %1266
      %1268 = vrot.lane.b32.xlu0 %v1261, 95
      %v1269 = vpop.permute.xlu0 %1268
      %1270 = vrot.lane.b32.xlu0 %v1262, 95
      %v1271 = vpop.permute.xlu0 %1270
      %v1272 = vsel %vm1199, %v1267, %v1269
      %v1273 = vsel %vm1199, %v1269, %v1271
      %v1277 = vadd.f32 %v1253, %v1272
      %v1278 = vadd.f32 %v1254, %v1273
      %v1279 = vadd.f32 %v1255, %v1271
      %1280 = vrot.lane.b32.xlu0 %v509, 49
      %v1281 = vpop.permute.xlu0 %1280
      %v1282 = vrot.slane %v1281, 4
      %vm1283 = vcmask 400384
      %v1284 = vsel %vm1283, %v1282, %v1281
      %v1287 = vmul.f32 %v274, %v1284
      %v1288 = vmul.f32 %v275, %v1282
      %1289 = vset.pattern.permute.xlu0 32
      %1290 = vperm.xlu0 %1289, %v273
      %v1291 = vpop.permute.xlu0 %1290
      %v1295 = vperm.slane %v1287, 0
      %v1296 = vperm.slane %v1287, 4
      %v1297 = vperm.slane %v1288, 0
      %v1301 = vperm.slane %v1295, 0
      %v1302 = vperm.slane %v1296, 0
      %v1303 = vperm.slane %v1297, 0
      %v1304 = vmul.f32 %v1291, %v1301
      %v1305 = vmul.f32 %v1291, %v1302
      %v1306 = vmul.f32 %v1291, %v1303
      %1310 = vrot.lane.b32.xlu0 %v1304, 94
      %v1311 = vpop.permute.xlu0 %1310
      %1312 = vrot.lane.b32.xlu0 %v1305, 94
      %v1313 = vpop.permute.xlu0 %1312
      %1314 = vrot.lane.b32.xlu0 %v1306, 94
      %v1315 = vpop.permute.xlu0 %1314
      %vm1316 = vcmask 769024
      %v1317 = vsel %vm1316, %v1311, %v1313
      %v1318 = vsel %vm1316, %v1313, %v1315
      %v1322 = vadd.f32 %v1277, %v1317
      %v1323 = vadd.f32 %v1278, %v1318
      %v1324 = vadd.f32 %v1279, %v1315
      %1325 = vset.pattern.permute.xlu0 33
      %1326 = vperm.xlu0 %1325, %v273
      %v1327 = vpop.permute.xlu0 %1326
      %v1329 = vperm.slane %v1287, 1
      %v1330 = vperm.slane %v1287, 5
      %v1331 = vperm.slane %v1288, 1
      %v1335 = vperm.slane %v1329, 1
      %v1336 = vperm.slane %v1330, 1
      %v1337 = vperm.slane %v1331, 1
      %v1338 = vmul.f32 %v1327, %v1335
      %v1339 = vmul.f32 %v1327, %v1336
      %v1340 = vmul.f32 %v1327, %v1337
      %1344 = vrot.lane.b32.xlu0 %v1338, 94
      %v1345 = vpop.permute.xlu0 %1344
      %1346 = vrot.lane.b32.xlu0 %v1339, 94
      %v1347 = vpop.permute.xlu0 %1346
      %1348 = vrot.lane.b32.xlu0 %v1340, 94
      %v1349 = vpop.permute.xlu0 %1348
      %v1350 = vsel %vm1316, %v1345, %v1347
      %v1351 = vsel %vm1316, %v1347, %v1349
      %v1355 = vadd.f32 %v1322, %v1350
      %v1356 = vadd.f32 %v1323, %v1351
      %v1357 = vadd.f32 %v1324, %v1349
      %1358 = vset.pattern.permute.xlu0 34
      %1359 = vperm.xlu0 %1358, %v273
      %v1360 = vpop.permute.xlu0 %1359
      %v1362 = vperm.slane %v1287, 2
      %v1363 = vperm.slane %v1287, 6
      %v1364 = vperm.slane %v1288, 2
      %v1368 = vperm.slane %v1362, 2
      %v1369 = vperm.slane %v1363, 2
      %v1370 = vperm.slane %v1364, 2
      %v1371 = vmul.f32 %v1360, %v1368
      %v1372 = vmul.f32 %v1360, %v1369
      %v1373 = vmul.f32 %v1360, %v1370
      %1377 = vrot.lane.b32.xlu0 %v1371, 94
      %v1378 = vpop.permute.xlu0 %1377
      %1379 = vrot.lane.b32.xlu0 %v1372, 94
      %v1380 = vpop.permute.xlu0 %1379
      %1381 = vrot.lane.b32.xlu0 %v1373, 94
      %v1382 = vpop.permute.xlu0 %1381
      %v1383 = vsel %vm1316, %v1378, %v1380
      %v1384 = vsel %vm1316, %v1380, %v1382
      %v1388 = vadd.f32 %v1355, %v1383
      %v1389 = vadd.f32 %v1356, %v1384
      %v1390 = vadd.f32 %v1357, %v1382
      %1391 = vset.pattern.permute.xlu0 35
      %1392 = vperm.xlu0 %1391, %v273
      %v1393 = vpop.permute.xlu0 %1392
      %v1395 = vperm.slane %v1287, 3
      %v1396 = vperm.slane %v1287, 7
      %v1397 = vperm.slane %v1288, 3
      %v1401 = vperm.slane %v1395, 3
      %v1402 = vperm.slane %v1396, 3
      %v1403 = vperm.slane %v1397, 3
      %v1404 = vmul.f32 %v1393, %v1401
      %v1405 = vmul.f32 %v1393, %v1402
      %v1406 = vmul.f32 %v1393, %v1403
      %1410 = vrot.lane.b32.xlu0 %v1404, 94
      %v1411 = vpop.permute.xlu0 %1410
      %1412 = vrot.lane.b32.xlu0 %v1405, 94
      %v1413 = vpop.permute.xlu0 %1412
      %1414 = vrot.lane.b32.xlu0 %v1406, 94
      %v1415 = vpop.permute.xlu0 %1414
      %v1416 = vsel %vm1316, %v1411, %v1413
      %v1417 = vsel %vm1316, %v1413, %v1415
      %v1421 = vadd.f32 %v1388, %v1416
      %v1422 = vadd.f32 %v1389, %v1417
      %v1423 = vadd.f32 %v1390, %v1415
      %v1424 = vld [vmem:[%s3] sm:$0xf]
      %1426 = vset.pattern.permute.xlu0 0
      %1427 = vperm.xlu0 %1426, %v1424
      %v1428 = vpop.permute.xlu0 %1427
      %v1430 = vadd.f32 %v1421, %v1428
      %v1431 = vadd.f32 %v1422, %v1428
      %v1432 = vadd.f32 %v1423, %v1428
      %v1433 = vmax.f32 %v1430, 0.0
      %v1434 = vmax.f32 %v1431, 0.0
      %v1435 = vmax.f32 %v1432, 0.0
      %v1439 = vrot.slane %v1434, 4
      %v1440 = vsel %vm280, %v1433, %v1439
      %1441 = vrot.lane.b32.xlu0 %v1440, 17
      %v1442 = vpop.permute.xlu0 %1441
      %1443 = vrot.lane.b32.xlu0 %v1435, 17
      %v1444 = vpop.permute.xlu0 %1443
      %v1445 = vrot.slane %v1442, 4
      %v1446 = vsel %vm513, %v1445, %v1442
      %v1447 = vsel %vm513, %v1445, %v1444
      %1450 = vst.msk [vmem:[#allocation2] sm:$0xff] %vm269, %v1446
      %1451 = vst.msk [vmem:[#allocation2 + $0x8] sm:$0xf] %vm271, %v1447
      %s1452 = scalar_lea.vmem %s2, 4
      %v1453 = vld [vmem:[%s1452] sm:$0xf]
      %v1454 = vld [vmem:[#allocation2] sm:$0xff]
      %v1455 = vld [vmem:[#allocation2 + $0x8] sm:$0xf]
      %v1456 = vmul.f32 %v1454, %v286
      %v1457 = vmul.f32 %v1455, %v284
      %1459 = vset.pattern.permute.xlu0 0
      %1460 = vperm.xlu0 %1459, %v1453
      %v1461 = vpop.permute.xlu0 %1460
      %v1465 = vperm.slane %v1456, 0
      %v1466 = vperm.slane %v1456, 4
      %v1467 = vperm.slane %v1457, 0
      %v1471 = vperm.slane %v1465, 0
      %v1472 = vperm.slane %v1466, 0
      %v1473 = vperm.slane %v1467, 0
      %v1474 = vmul.f32 %v1461, %v1471
      %v1475 = vmul.f32 %v1461, %v1472
      %v1476 = vmul.f32 %v1461, %v1473
      %v1477 = vadd.f32 %v1474, 0.0
      %v1478 = vadd.f32 %v1475, 0.0
      %v1479 = vadd.f32 %v1476, 0.0
      %1480 = vset.pattern.permute.xlu0 1
      %1481 = vperm.xlu0 %1480, %v1453
      %v1482 = vpop.permute.xlu0 %1481
      %v1484 = vperm.slane %v1456, 1
      %v1485 = vperm.slane %v1456, 5
      %v1486 = vperm.slane %v1457, 1
      %v1490 = vperm.slane %v1484, 1
      %v1491 = vperm.slane %v1485, 1
      %v1492 = vperm.slane %v1486, 1
      %v1493 = vmul.f32 %v1482, %v1490
      %v1494 = vmul.f32 %v1482, %v1491
      %v1495 = vmul.f32 %v1482, %v1492
      %v1496 = vadd.f32 %v1477, %v1493
      %v1497 = vadd.f32 %v1478, %v1494
      %v1498 = vadd.f32 %v1479, %v1495
      %1499 = vset.pattern.permute.xlu0 2
      %1500 = vperm.xlu0 %1499, %v1453
      %v1501 = vpop.permute.xlu0 %1500
      %v1503 = vperm.slane %v1456, 2
      %v1504 = vperm.slane %v1456, 6
      %v1505 = vperm.slane %v1457, 2
      %v1509 = vperm.slane %v1503, 2
      %v1510 = vperm.slane %v1504, 2
      %v1511 = vperm.slane %v1505, 2
      %v1512 = vmul.f32 %v1501, %v1509
      %v1513 = vmul.f32 %v1501, %v1510
      %v1514 = vmul.f32 %v1501, %v1511
      %v1515 = vadd.f32 %v1496, %v1512
      %v1516 = vadd.f32 %v1497, %v1513
      %v1517 = vadd.f32 %v1498, %v1514
      %1518 = vset.pattern.permute.xlu0 3
      %1519 = vperm.xlu0 %1518, %v1453
      %v1520 = vpop.permute.xlu0 %1519
      %v1522 = vperm.slane %v1456, 3
      %v1523 = vperm.slane %v1456, 7
      %v1524 = vperm.slane %v1457, 3
      %v1528 = vperm.slane %v1522, 3
      %v1529 = vperm.slane %v1523, 3
      %v1530 = vperm.slane %v1524, 3
      %v1531 = vmul.f32 %v1520, %v1528
      %v1532 = vmul.f32 %v1520, %v1529
      %v1533 = vmul.f32 %v1520, %v1530
      %v1534 = vadd.f32 %v1515, %v1531
      %v1535 = vadd.f32 %v1516, %v1532
      %v1536 = vadd.f32 %v1517, %v1533
      %1537 = vset.pattern.permute.xlu0 4
      %1538 = vperm.xlu0 %1537, %v1453
      %v1539 = vpop.permute.xlu0 %1538
      %v1543 = vperm.slane %v1454, 0
      %v1544 = vperm.slane %v1454, 4
      %v1545 = vperm.slane %v1455, 0
      %v1549 = vperm.slane %v1543, 0
      %v1550 = vperm.slane %v1544, 0
      %v1551 = vperm.slane %v1545, 0
      %v1552 = vmul.f32 %v1539, %v1549
      %v1553 = vmul.f32 %v1539, %v1550
      %v1554 = vmul.f32 %v1539, %v1551
      %1558 = vrot.lane.b32.xlu0 %v1552, 127
      %v1559 = vpop.permute.xlu0 %1558
      %1560 = vrot.lane.b32.xlu0 %v1553, 127
      %v1561 = vpop.permute.xlu0 %1560
      %1562 = vrot.lane.b32.xlu0 %v1554, 127
      %v1563 = vpop.permute.xlu0 %1562
      %v1564 = vsel %vm397, %v1559, %v1561
      %v1565 = vsel %vm397, %v1561, %v1563
      %v1569 = vadd.f32 %v1534, %v1564
      %v1570 = vadd.f32 %v1535, %v1565
      %v1571 = vadd.f32 %v1536, %v1563
      %1572 = vset.pattern.permute.xlu0 5
      %1573 = vperm.xlu0 %1572, %v1453
      %v1574 = vpop.permute.xlu0 %1573
      %v1576 = vperm.slane %v1454, 1
      %v1577 = vperm.slane %v1454, 5
      %v1578 = vperm.slane %v1455, 1
      %v1582 = vperm.slane %v1576, 1
      %v1583 = vperm.slane %v1577, 1
      %v1584 = vperm.slane %v1578, 1
      %v1585 = vmul.f32 %v1574, %v1582
      %v1586 = vmul.f32 %v1574, %v1583
      %v1587 = vmul.f32 %v1574, %v1584
      %1591 = vrot.lane.b32.xlu0 %v1585, 127
      %v1592 = vpop.permute.xlu0 %1591
      %1593 = vrot.lane.b32.xlu0 %v1586, 127
      %v1594 = vpop.permute.xlu0 %1593
      %1595 = vrot.lane.b32.xlu0 %v1587, 127
      %v1596 = vpop.permute.xlu0 %1595
      %v1597 = vsel %vm397, %v1592, %v1594
      %v1598 = vsel %vm397, %v1594, %v1596
      %v1602 = vadd.f32 %v1569, %v1597
      %v1603 = vadd.f32 %v1570, %v1598
      %v1604 = vadd.f32 %v1571, %v1596
      %1605 = vset.pattern.permute.xlu0 6
      %1606 = vperm.xlu0 %1605, %v1453
      %v1607 = vpop.permute.xlu0 %1606
      %v1609 = vperm.slane %v1454, 2
      %v1610 = vperm.slane %v1454, 6
      %v1611 = vperm.slane %v1455, 2
      %v1615 = vperm.slane %v1609, 2
      %v1616 = vperm.slane %v1610, 2
      %v1617 = vperm.slane %v1611, 2
      %v1618 = vmul.f32 %v1607, %v1615
      %v1619 = vmul.f32 %v1607, %v1616
      %v1620 = vmul.f32 %v1607, %v1617
      %1624 = vrot.lane.b32.xlu0 %v1618, 127
      %v1625 = vpop.permute.xlu0 %1624
      %1626 = vrot.lane.b32.xlu0 %v1619, 127
      %v1627 = vpop.permute.xlu0 %1626
      %1628 = vrot.lane.b32.xlu0 %v1620, 127
      %v1629 = vpop.permute.xlu0 %1628
      %v1630 = vsel %vm397, %v1625, %v1627
      %v1631 = vsel %vm397, %v1627, %v1629
      %v1635 = vadd.f32 %v1602, %v1630
      %v1636 = vadd.f32 %v1603, %v1631
      %v1637 = vadd.f32 %v1604, %v1629
      %1638 = vset.pattern.permute.xlu0 7
      %1639 = vperm.xlu0 %1638, %v1453
      %v1640 = vpop.permute.xlu0 %1639
      %v1642 = vperm.slane %v1454, 3
      %v1643 = vperm.slane %v1454, 7
      %v1644 = vperm.slane %v1455, 3
      %v1648 = vperm.slane %v1642, 3
      %v1649 = vperm.slane %v1643, 3
      %v1650 = vperm.slane %v1644, 3
      %v1651 = vmul.f32 %v1640, %v1648
      %v1652 = vmul.f32 %v1640, %v1649
      %v1653 = vmul.f32 %v1640, %v1650
      %1657 = vrot.lane.b32.xlu0 %v1651, 127
      %v1658 = vpop.permute.xlu0 %1657
      %1659 = vrot.lane.b32.xlu0 %v1652, 127
      %v1660 = vpop.permute.xlu0 %1659
      %1661 = vrot.lane.b32.xlu0 %v1653, 127
      %v1662 = vpop.permute.xlu0 %1661
      %v1663 = vsel %vm397, %v1658, %v1660
      %v1664 = vsel %vm397, %v1660, %v1662
      %v1668 = vadd.f32 %v1635, %v1663
      %v1669 = vadd.f32 %v1636, %v1664
      %v1670 = vadd.f32 %v1637, %v1662
      %v1671 = vmul.f32 %v1454, %v514
      %v1672 = vmul.f32 %v1455, %v512
      %1673 = vset.pattern.permute.xlu0 8
      %1674 = vperm.xlu0 %1673, %v1453
      %v1675 = vpop.permute.xlu0 %1674
      %v1679 = vperm.slane %v1671, 0
      %v1680 = vperm.slane %v1671, 4
      %v1681 = vperm.slane %v1672, 0
      %v1685 = vperm.slane %v1679, 0
      %v1686 = vperm.slane %v1680, 0
      %v1687 = vperm.slane %v1681, 0
      %v1688 = vmul.f32 %v1675, %v1685
      %v1689 = vmul.f32 %v1675, %v1686
      %v1690 = vmul.f32 %v1675, %v1687
      %1694 = vrot.lane.b32.xlu0 %v1688, 126
      %v1695 = vpop.permute.xlu0 %1694
      %1696 = vrot.lane.b32.xlu0 %v1689, 126
      %v1697 = vpop.permute.xlu0 %1696
      %1698 = vrot.lane.b32.xlu0 %v1690, 126
      %v1699 = vpop.permute.xlu0 %1698
      %v1700 = vsel %vm546, %v1695, %v1697
      %v1701 = vsel %vm546, %v1697, %v1699
      %v1705 = vadd.f32 %v1668, %v1700
      %v1706 = vadd.f32 %v1669, %v1701
      %v1707 = vadd.f32 %v1670, %v1699
      %1708 = vset.pattern.permute.xlu0 9
      %1709 = vperm.xlu0 %1708, %v1453
      %v1710 = vpop.permute.xlu0 %1709
      %v1712 = vperm.slane %v1671, 1
      %v1713 = vperm.slane %v1671, 5
      %v1714 = vperm.slane %v1672, 1
      %v1718 = vperm.slane %v1712, 1
      %v1719 = vperm.slane %v1713, 1
      %v1720 = vperm.slane %v1714, 1
      %v1721 = vmul.f32 %v1710, %v1718
      %v1722 = vmul.f32 %v1710, %v1719
      %v1723 = vmul.f32 %v1710, %v1720
      %1727 = vrot.lane.b32.xlu0 %v1721, 126
      %v1728 = vpop.permute.xlu0 %1727
      %1729 = vrot.lane.b32.xlu0 %v1722, 126
      %v1730 = vpop.permute.xlu0 %1729
      %1731 = vrot.lane.b32.xlu0 %v1723, 126
      %v1732 = vpop.permute.xlu0 %1731
      %v1733 = vsel %vm546, %v1728, %v1730
      %v1734 = vsel %vm546, %v1730, %v1732
      %v1738 = vadd.f32 %v1705, %v1733
      %v1739 = vadd.f32 %v1706, %v1734
      %v1740 = vadd.f32 %v1707, %v1732
      %1741 = vset.pattern.permute.xlu0 10
      %1742 = vperm.xlu0 %1741, %v1453
      %v1743 = vpop.permute.xlu0 %1742
      %v1745 = vperm.slane %v1671, 2
      %v1746 = vperm.slane %v1671, 6
      %v1747 = vperm.slane %v1672, 2
      %v1751 = vperm.slane %v1745, 2
      %v1752 = vperm.slane %v1746, 2
      %v1753 = vperm.slane %v1747, 2
      %v1754 = vmul.f32 %v1743, %v1751
      %v1755 = vmul.f32 %v1743, %v1752
      %v1756 = vmul.f32 %v1743, %v1753
      %1760 = vrot.lane.b32.xlu0 %v1754, 126
      %v1761 = vpop.permute.xlu0 %1760
      %1762 = vrot.lane.b32.xlu0 %v1755, 126
      %v1763 = vpop.permute.xlu0 %1762
      %1764 = vrot.lane.b32.xlu0 %v1756, 126
      %v1765 = vpop.permute.xlu0 %1764
      %v1766 = vsel %vm546, %v1761, %v1763
      %v1767 = vsel %vm546, %v1763, %v1765
      %v1771 = vadd.f32 %v1738, %v1766
      %v1772 = vadd.f32 %v1739, %v1767
      %v1773 = vadd.f32 %v1740, %v1765
      %1774 = vset.pattern.permute.xlu0 11
      %1775 = vperm.xlu0 %1774, %v1453
      %v1776 = vpop.permute.xlu0 %1775
      %v1778 = vperm.slane %v1671, 3
      %v1779 = vperm.slane %v1671, 7
      %v1780 = vperm.slane %v1672, 3
      %v1784 = vperm.slane %v1778, 3
      %v1785 = vperm.slane %v1779, 3
      %v1786 = vperm.slane %v1780, 3
      %v1787 = vmul.f32 %v1776, %v1784
      %v1788 = vmul.f32 %v1776, %v1785
      %v1789 = vmul.f32 %v1776, %v1786
      %1793 = vrot.lane.b32.xlu0 %v1787, 126
      %v1794 = vpop.permute.xlu0 %1793
      %1795 = vrot.lane.b32.xlu0 %v1788, 126
      %v1796 = vpop.permute.xlu0 %1795
      %1797 = vrot.lane.b32.xlu0 %v1789, 126
      %v1798 = vpop.permute.xlu0 %1797
      %v1799 = vsel %vm546, %v1794, %v1796
      %v1800 = vsel %vm546, %v1796, %v1798
      %v1804 = vadd.f32 %v1771, %v1799
      %v1805 = vadd.f32 %v1772, %v1800
      %v1806 = vadd.f32 %v1773, %v1798
      %v1807 = vmul.f32 %v1454, %v658
      %v1808 = vmul.f32 %v1455, %v656
      %1809 = vset.pattern.permute.xlu0 12
      %1810 = vperm.xlu0 %1809, %v1453
      %v1811 = vpop.permute.xlu0 %1810
      %v1815 = vperm.slane %v1807, 0
      %v1816 = vperm.slane %v1807, 4
      %v1817 = vperm.slane %v1808, 0
      %v1821 = vperm.slane %v1815, 0
      %v1822 = vperm.slane %v1816, 0
      %v1823 = vperm.slane %v1817, 0
      %v1824 = vmul.f32 %v1811, %v1821
      %v1825 = vmul.f32 %v1811, %v1822
      %v1826 = vmul.f32 %v1811, %v1823
      %1830 = vrot.lane.b32.xlu0 %v1824, 112
      %v1831 = vpop.permute.xlu0 %1830
      %1832 = vrot.lane.b32.xlu0 %v1825, 112
      %v1833 = vpop.permute.xlu0 %1832
      %1834 = vrot.lane.b32.xlu0 %v1826, 112
      %v1835 = vpop.permute.xlu0 %1834
      %v1836 = vsel %vm690, %v1831, %v1833
      %v1837 = vsel %vm690, %v1833, %v1835
      %v1841 = vadd.f32 %v1804, %v1836
      %v1842 = vadd.f32 %v1805, %v1837
      %v1843 = vadd.f32 %v1806, %v1835
      %1844 = vset.pattern.permute.xlu0 13
      %1845 = vperm.xlu0 %1844, %v1453
      %v1846 = vpop.permute.xlu0 %1845
      %v1848 = vperm.slane %v1807, 1
      %v1849 = vperm.slane %v1807, 5
      %v1850 = vperm.slane %v1808, 1
      %v1854 = vperm.slane %v1848, 1
      %v1855 = vperm.slane %v1849, 1
      %v1856 = vperm.slane %v1850, 1
      %v1857 = vmul.f32 %v1846, %v1854
      %v1858 = vmul.f32 %v1846, %v1855
      %v1859 = vmul.f32 %v1846, %v1856
      %1863 = vrot.lane.b32.xlu0 %v1857, 112
      %v1864 = vpop.permute.xlu0 %1863
      %1865 = vrot.lane.b32.xlu0 %v1858, 112
      %v1866 = vpop.permute.xlu0 %1865
      %1867 = vrot.lane.b32.xlu0 %v1859, 112
      %v1868 = vpop.permute.xlu0 %1867
      %v1869 = vsel %vm690, %v1864, %v1866
      %v1870 = vsel %vm690, %v1866, %v1868
      %v1874 = vadd.f32 %v1841, %v1869
      %v1875 = vadd.f32 %v1842, %v1870
      %v1876 = vadd.f32 %v1843, %v1868
      %1877 = vset.pattern.permute.xlu0 14
      %1878 = vperm.xlu0 %1877, %v1453
      %v1879 = vpop.permute.xlu0 %1878
      %v1881 = vperm.slane %v1807, 2
      %v1882 = vperm.slane %v1807, 6
      %v1883 = vperm.slane %v1808, 2
      %v1887 = vperm.slane %v1881, 2
      %v1888 = vperm.slane %v1882, 2
      %v1889 = vperm.slane %v1883, 2
      %v1890 = vmul.f32 %v1879, %v1887
      %v1891 = vmul.f32 %v1879, %v1888
      %v1892 = vmul.f32 %v1879, %v1889
      %1896 = vrot.lane.b32.xlu0 %v1890, 112
      %v1897 = vpop.permute.xlu0 %1896
      %1898 = vrot.lane.b32.xlu0 %v1891, 112
      %v1899 = vpop.permute.xlu0 %1898
      %1900 = vrot.lane.b32.xlu0 %v1892, 112
      %v1901 = vpop.permute.xlu0 %1900
      %v1902 = vsel %vm690, %v1897, %v1899
      %v1903 = vsel %vm690, %v1899, %v1901
      %v1907 = vadd.f32 %v1874, %v1902
      %v1908 = vadd.f32 %v1875, %v1903
      %v1909 = vadd.f32 %v1876, %v1901
      %1910 = vset.pattern.permute.xlu0 15
      %1911 = vperm.xlu0 %1910, %v1453
      %v1912 = vpop.permute.xlu0 %1911
      %v1914 = vperm.slane %v1807, 3
      %v1915 = vperm.slane %v1807, 7
      %v1916 = vperm.slane %v1808, 3
      %v1920 = vperm.slane %v1914, 3
      %v1921 = vperm.slane %v1915, 3
      %v1922 = vperm.slane %v1916, 3
      %v1923 = vmul.f32 %v1912, %v1920
      %v1924 = vmul.f32 %v1912, %v1921
      %v1925 = vmul.f32 %v1912, %v1922
      %1929 = vrot.lane.b32.xlu0 %v1923, 112
      %v1930 = vpop.permute.xlu0 %1929
      %1931 = vrot.lane.b32.xlu0 %v1924, 112
      %v1932 = vpop.permute.xlu0 %1931
      %1933 = vrot.lane.b32.xlu0 %v1925, 112
      %v1934 = vpop.permute.xlu0 %1933
      %v1935 = vsel %vm690, %v1930, %v1932
      %v1936 = vsel %vm690, %v1932, %v1934
      %v1940 = vadd.f32 %v1907, %v1935
      %v1941 = vadd.f32 %v1908, %v1936
      %v1942 = vadd.f32 %v1909, %v1934
      %1943 = vset.pattern.permute.xlu0 16
      %1944 = vperm.xlu0 %1943, %v1453
      %v1945 = vpop.permute.xlu0 %1944
      %v1947 = vmul.f32 %v1945, %v1549
      %v1948 = vmul.f32 %v1945, %v1550
      %v1949 = vmul.f32 %v1945, %v1551
      %1953 = vrot.lane.b32.xlu0 %v1947, 111
      %v1954 = vpop.permute.xlu0 %1953
      %1955 = vrot.lane.b32.xlu0 %v1948, 111
      %v1956 = vpop.permute.xlu0 %1955
      %1957 = vrot.lane.b32.xlu0 %v1949, 111
      %v1958 = vpop.permute.xlu0 %1957
      %v1959 = vsel %vm814, %v1954, %v1956
      %v1960 = vsel %vm814, %v1956, %v1958
      %v1964 = vadd.f32 %v1940, %v1959
      %v1965 = vadd.f32 %v1941, %v1960
      %v1966 = vadd.f32 %v1942, %v1958
      %1967 = vset.pattern.permute.xlu0 17
      %1968 = vperm.xlu0 %1967, %v1453
      %v1969 = vpop.permute.xlu0 %1968
      %v1971 = vmul.f32 %v1969, %v1582
      %v1972 = vmul.f32 %v1969, %v1583
      %v1973 = vmul.f32 %v1969, %v1584
      %1977 = vrot.lane.b32.xlu0 %v1971, 111
      %v1978 = vpop.permute.xlu0 %1977
      %1979 = vrot.lane.b32.xlu0 %v1972, 111
      %v1980 = vpop.permute.xlu0 %1979
      %1981 = vrot.lane.b32.xlu0 %v1973, 111
      %v1982 = vpop.permute.xlu0 %1981
      %v1983 = vsel %vm814, %v1978, %v1980
      %v1984 = vsel %vm814, %v1980, %v1982
      %v1988 = vadd.f32 %v1964, %v1983
      %v1989 = vadd.f32 %v1965, %v1984
      %v1990 = vadd.f32 %v1966, %v1982
      %1991 = vset.pattern.permute.xlu0 18
      %1992 = vperm.xlu0 %1991, %v1453
      %v1993 = vpop.permute.xlu0 %1992
      %v1995 = vmul.f32 %v1993, %v1615
      %v1996 = vmul.f32 %v1993, %v1616
      %v1997 = vmul.f32 %v1993, %v1617
      %2001 = vrot.lane.b32.xlu0 %v1995, 111
      %v2002 = vpop.permute.xlu0 %2001
      %2003 = vrot.lane.b32.xlu0 %v1996, 111
      %v2004 = vpop.permute.xlu0 %2003
      %2005 = vrot.lane.b32.xlu0 %v1997, 111
      %v2006 = vpop.permute.xlu0 %2005
      %v2007 = vsel %vm814, %v2002, %v2004
      %v2008 = vsel %vm814, %v2004, %v2006
      %v2012 = vadd.f32 %v1988, %v2007
      %v2013 = vadd.f32 %v1989, %v2008
      %v2014 = vadd.f32 %v1990, %v2006
      %2015 = vset.pattern.permute.xlu0 19
      %2016 = vperm.xlu0 %2015, %v1453
      %v2017 = vpop.permute.xlu0 %2016
      %v2019 = vmul.f32 %v2017, %v1648
      %v2020 = vmul.f32 %v2017, %v1649
      %v2021 = vmul.f32 %v2017, %v1650
      %2025 = vrot.lane.b32.xlu0 %v2019, 111
      %v2026 = vpop.permute.xlu0 %2025
      %2027 = vrot.lane.b32.xlu0 %v2020, 111
      %v2028 = vpop.permute.xlu0 %2027
      %2029 = vrot.lane.b32.xlu0 %v2021, 111
      %v2030 = vpop.permute.xlu0 %2029
      %v2031 = vsel %vm814, %v2026, %v2028
      %v2032 = vsel %vm814, %v2028, %v2030
      %v2036 = vadd.f32 %v2012, %v2031
      %v2037 = vadd.f32 %v2013, %v2032
      %v2038 = vadd.f32 %v2014, %v2030
      %v2039 = vmul.f32 %v1454, %v899
      %v2040 = vmul.f32 %v1455, %v897
      %2041 = vset.pattern.permute.xlu0 20
      %2042 = vperm.xlu0 %2041, %v1453
      %v2043 = vpop.permute.xlu0 %2042
      %v2047 = vperm.slane %v2039, 0
      %v2048 = vperm.slane %v2039, 4
      %v2049 = vperm.slane %v2040, 0
      %v2053 = vperm.slane %v2047, 0
      %v2054 = vperm.slane %v2048, 0
      %v2055 = vperm.slane %v2049, 0
      %v2056 = vmul.f32 %v2043, %v2053
      %v2057 = vmul.f32 %v2043, %v2054
      %v2058 = vmul.f32 %v2043, %v2055
      %2062 = vrot.lane.b32.xlu0 %v2056, 110
      %v2063 = vpop.permute.xlu0 %2062
      %2064 = vrot.lane.b32.xlu0 %v2057, 110
      %v2065 = vpop.permute.xlu0 %2064
      %2066 = vrot.lane.b32.xlu0 %v2058, 110
      %v2067 = vpop.permute.xlu0 %2066
      %v2068 = vsel %vm931, %v2063, %v2065
      %v2069 = vsel %vm931, %v2065, %v2067
      %v2073 = vadd.f32 %v2036, %v2068
      %v2074 = vadd.f32 %v2037, %v2069
      %v2075 = vadd.f32 %v2038, %v2067
      %2076 = vset.pattern.permute.xlu0 21
      %2077 = vperm.xlu0 %2076, %v1453
      %v2078 = vpop.permute.xlu0 %2077
      %v2080 = vperm.slane %v2039, 1
      %v2081 = vperm.slane %v2039, 5
      %v2082 = vperm.slane %v2040, 1
      %v2086 = vperm.slane %v2080, 1
      %v2087 = vperm.slane %v2081, 1
      %v2088 = vperm.slane %v2082, 1
      %v2089 = vmul.f32 %v2078, %v2086
      %v2090 = vmul.f32 %v2078, %v2087
      %v2091 = vmul.f32 %v2078, %v2088
      %2095 = vrot.lane.b32.xlu0 %v2089, 110
      %v2096 = vpop.permute.xlu0 %2095
      %2097 = vrot.lane.b32.xlu0 %v2090, 110
      %v2098 = vpop.permute.xlu0 %2097
      %2099 = vrot.lane.b32.xlu0 %v2091, 110
      %v2100 = vpop.permute.xlu0 %2099
      %v2101 = vsel %vm931, %v2096, %v2098
      %v2102 = vsel %vm931, %v2098, %v2100
      %v2106 = vadd.f32 %v2073, %v2101
      %v2107 = vadd.f32 %v2074, %v2102
      %v2108 = vadd.f32 %v2075, %v2100
      %2109 = vset.pattern.permute.xlu0 22
      %2110 = vperm.xlu0 %2109, %v1453
      %v2111 = vpop.permute.xlu0 %2110
      %v2113 = vperm.slane %v2039, 2
      %v2114 = vperm.slane %v2039, 6
      %v2115 = vperm.slane %v2040, 2
      %v2119 = vperm.slane %v2113, 2
      %v2120 = vperm.slane %v2114, 2
      %v2121 = vperm.slane %v2115, 2
      %v2122 = vmul.f32 %v2111, %v2119
      %v2123 = vmul.f32 %v2111, %v2120
      %v2124 = vmul.f32 %v2111, %v2121
      %2128 = vrot.lane.b32.xlu0 %v2122, 110
      %v2129 = vpop.permute.xlu0 %2128
      %2130 = vrot.lane.b32.xlu0 %v2123, 110
      %v2131 = vpop.permute.xlu0 %2130
      %2132 = vrot.lane.b32.xlu0 %v2124, 110
      %v2133 = vpop.permute.xlu0 %2132
      %v2134 = vsel %vm931, %v2129, %v2131
      %v2135 = vsel %vm931, %v2131, %v2133
      %v2139 = vadd.f32 %v2106, %v2134
      %v2140 = vadd.f32 %v2107, %v2135
      %v2141 = vadd.f32 %v2108, %v2133
      %2142 = vset.pattern.permute.xlu0 23
      %2143 = vperm.xlu0 %2142, %v1453
      %v2144 = vpop.permute.xlu0 %2143
      %v2146 = vperm.slane %v2039, 3
      %v2147 = vperm.slane %v2039, 7
      %v2148 = vperm.slane %v2040, 3
      %v2152 = vperm.slane %v2146, 3
      %v2153 = vperm.slane %v2147, 3
      %v2154 = vperm.slane %v2148, 3
      %v2155 = vmul.f32 %v2144, %v2152
      %v2156 = vmul.f32 %v2144, %v2153
      %v2157 = vmul.f32 %v2144, %v2154
      %2161 = vrot.lane.b32.xlu0 %v2155, 110
      %v2162 = vpop.permute.xlu0 %2161
      %2163 = vrot.lane.b32.xlu0 %v2156, 110
      %v2164 = vpop.permute.xlu0 %2163
      %2165 = vrot.lane.b32.xlu0 %v2157, 110
      %v2166 = vpop.permute.xlu0 %2165
      %v2167 = vsel %vm931, %v2162, %v2164
      %v2168 = vsel %vm931, %v2164, %v2166
      %v2172 = vadd.f32 %v2139, %v2167
      %v2173 = vadd.f32 %v2140, %v2168
      %v2174 = vadd.f32 %v2141, %v2166
      %v2175 = vmul.f32 %v1454, %v1043
      %v2176 = vmul.f32 %v1455, %v1041
      %2177 = vset.pattern.permute.xlu0 24
      %2178 = vperm.xlu0 %2177, %v1453
      %v2179 = vpop.permute.xlu0 %2178
      %v2183 = vperm.slane %v2175, 0
      %v2184 = vperm.slane %v2175, 4
      %v2185 = vperm.slane %v2176, 0
      %v2189 = vperm.slane %v2183, 0
      %v2190 = vperm.slane %v2184, 0
      %v2191 = vperm.slane %v2185, 0
      %v2192 = vmul.f32 %v2179, %v2189
      %v2193 = vmul.f32 %v2179, %v2190
      %v2194 = vmul.f32 %v2179, %v2191
      %2198 = vrot.lane.b32.xlu0 %v2192, 96
      %v2199 = vpop.permute.xlu0 %2198
      %2200 = vrot.lane.b32.xlu0 %v2193, 96
      %v2201 = vpop.permute.xlu0 %2200
      %2202 = vrot.lane.b32.xlu0 %v2194, 96
      %v2203 = vpop.permute.xlu0 %2202
      %v2204 = vsel %vm1075, %v2199, %v2201
      %v2205 = vsel %vm1075, %v2201, %v2203
      %v2209 = vadd.f32 %v2172, %v2204
      %v2210 = vadd.f32 %v2173, %v2205
      %v2211 = vadd.f32 %v2174, %v2203
      %2212 = vset.pattern.permute.xlu0 25
      %2213 = vperm.xlu0 %2212, %v1453
      %v2214 = vpop.permute.xlu0 %2213
      %v2216 = vperm.slane %v2175, 1
      %v2217 = vperm.slane %v2175, 5
      %v2218 = vperm.slane %v2176, 1
      %v2222 = vperm.slane %v2216, 1
      %v2223 = vperm.slane %v2217, 1
      %v2224 = vperm.slane %v2218, 1
      %v2225 = vmul.f32 %v2214, %v2222
      %v2226 = vmul.f32 %v2214, %v2223
      %v2227 = vmul.f32 %v2214, %v2224
      %2231 = vrot.lane.b32.xlu0 %v2225, 96
      %v2232 = vpop.permute.xlu0 %2231
      %2233 = vrot.lane.b32.xlu0 %v2226, 96
      %v2234 = vpop.permute.xlu0 %2233
      %2235 = vrot.lane.b32.xlu0 %v2227, 96
      %v2236 = vpop.permute.xlu0 %2235
      %v2237 = vsel %vm1075, %v2232, %v2234
      %v2238 = vsel %vm1075, %v2234, %v2236
      %v2242 = vadd.f32 %v2209, %v2237
      %v2243 = vadd.f32 %v2210, %v2238
      %v2244 = vadd.f32 %v2211, %v2236
      %2245 = vset.pattern.permute.xlu0 26
      %2246 = vperm.xlu0 %2245, %v1453
      %v2247 = vpop.permute.xlu0 %2246
      %v2249 = vperm.slane %v2175, 2
      %v2250 = vperm.slane %v2175, 6
      %v2251 = vperm.slane %v2176, 2
      %v2255 = vperm.slane %v2249, 2
      %v2256 = vperm.slane %v2250, 2
      %v2257 = vperm.slane %v2251, 2
      %v2258 = vmul.f32 %v2247, %v2255
      %v2259 = vmul.f32 %v2247, %v2256
      %v2260 = vmul.f32 %v2247, %v2257
      %2264 = vrot.lane.b32.xlu0 %v2258, 96
      %v2265 = vpop.permute.xlu0 %2264
      %2266 = vrot.lane.b32.xlu0 %v2259, 96
      %v2267 = vpop.permute.xlu0 %2266
      %2268 = vrot.lane.b32.xlu0 %v2260, 96
      %v2269 = vpop.permute.xlu0 %2268
      %v2270 = vsel %vm1075, %v2265, %v2267
      %v2271 = vsel %vm1075, %v2267, %v2269
      %v2275 = vadd.f32 %v2242, %v2270
      %v2276 = vadd.f32 %v2243, %v2271
      %v2277 = vadd.f32 %v2244, %v2269
      %2278 = vset.pattern.permute.xlu0 27
      %2279 = vperm.xlu0 %2278, %v1453
      %v2280 = vpop.permute.xlu0 %2279
      %v2282 = vperm.slane %v2175, 3
      %v2283 = vperm.slane %v2175, 7
      %v2284 = vperm.slane %v2176, 3
      %v2288 = vperm.slane %v2282, 3
      %v2289 = vperm.slane %v2283, 3
      %v2290 = vperm.slane %v2284, 3
      %v2291 = vmul.f32 %v2280, %v2288
      %v2292 = vmul.f32 %v2280, %v2289
      %v2293 = vmul.f32 %v2280, %v2290
      %2297 = vrot.lane.b32.xlu0 %v2291, 96
      %v2298 = vpop.permute.xlu0 %2297
      %2299 = vrot.lane.b32.xlu0 %v2292, 96
      %v2300 = vpop.permute.xlu0 %2299
      %2301 = vrot.lane.b32.xlu0 %v2293, 96
      %v2302 = vpop.permute.xlu0 %2301
      %v2303 = vsel %vm1075, %v2298, %v2300
      %v2304 = vsel %vm1075, %v2300, %v2302
      %v2308 = vadd.f32 %v2275, %v2303
      %v2309 = vadd.f32 %v2276, %v2304
      %v2310 = vadd.f32 %v2277, %v2302
      %2311 = vset.pattern.permute.xlu0 28
      %2312 = vperm.xlu0 %2311, %v1453
      %v2313 = vpop.permute.xlu0 %2312
      %v2315 = vmul.f32 %v2313, %v1549
      %v2316 = vmul.f32 %v2313, %v1550
      %v2317 = vmul.f32 %v2313, %v1551
      %2321 = vrot.lane.b32.xlu0 %v2315, 95
      %v2322 = vpop.permute.xlu0 %2321
      %2323 = vrot.lane.b32.xlu0 %v2316, 95
      %v2324 = vpop.permute.xlu0 %2323
      %2325 = vrot.lane.b32.xlu0 %v2317, 95
      %v2326 = vpop.permute.xlu0 %2325
      %v2327 = vsel %vm1199, %v2322, %v2324
      %v2328 = vsel %vm1199, %v2324, %v2326
      %v2332 = vadd.f32 %v2308, %v2327
      %v2333 = vadd.f32 %v2309, %v2328
      %v2334 = vadd.f32 %v2310, %v2326
      %2335 = vset.pattern.permute.xlu0 29
      %2336 = vperm.xlu0 %2335, %v1453
      %v2337 = vpop.permute.xlu0 %2336
      %v2339 = vmul.f32 %v2337, %v1582
      %v2340 = vmul.f32 %v2337, %v1583
      %v2341 = vmul.f32 %v2337, %v1584
      %2345 = vrot.lane.b32.xlu0 %v2339, 95
      %v2346 = vpop.permute.xlu0 %2345
      %2347 = vrot.lane.b32.xlu0 %v2340, 95
      %v2348 = vpop.permute.xlu0 %2347
      %2349 = vrot.lane.b32.xlu0 %v2341, 95
      %v2350 = vpop.permute.xlu0 %2349
      %v2351 = vsel %vm1199, %v2346, %v2348
      %v2352 = vsel %vm1199, %v2348, %v2350
      %v2356 = vadd.f32 %v2332, %v2351
      %v2357 = vadd.f32 %v2333, %v2352
      %v2358 = vadd.f32 %v2334, %v2350
      %2359 = vset.pattern.permute.xlu0 30
      %2360 = vperm.xlu0 %2359, %v1453
      %v2361 = vpop.permute.xlu0 %2360
      %v2363 = vmul.f32 %v2361, %v1615
      %v2364 = vmul.f32 %v2361, %v1616
      %v2365 = vmul.f32 %v2361, %v1617
      %2369 = vrot.lane.b32.xlu0 %v2363, 95
      %v2370 = vpop.permute.xlu0 %2369
      %2371 = vrot.lane.b32.xlu0 %v2364, 95
      %v2372 = vpop.permute.xlu0 %2371
      %2373 = vrot.lane.b32.xlu0 %v2365, 95
      %v2374 = vpop.permute.xlu0 %2373
      %v2375 = vsel %vm1199, %v2370, %v2372
      %v2376 = vsel %vm1199, %v2372, %v2374
      %v2380 = vadd.f32 %v2356, %v2375
      %v2381 = vadd.f32 %v2357, %v2376
      %v2382 = vadd.f32 %v2358, %v2374
      %2383 = vset.pattern.permute.xlu0 31
      %2384 = vperm.xlu0 %2383, %v1453
      %v2385 = vpop.permute.xlu0 %2384
      %v2387 = vmul.f32 %v2385, %v1648
      %v2388 = vmul.f32 %v2385, %v1649
      %v2389 = vmul.f32 %v2385, %v1650
      %2393 = vrot.lane.b32.xlu0 %v2387, 95
      %v2394 = vpop.permute.xlu0 %2393
      %2395 = vrot.lane.b32.xlu0 %v2388, 95
      %v2396 = vpop.permute.xlu0 %2395
      %2397 = vrot.lane.b32.xlu0 %v2389, 95
      %v2398 = vpop.permute.xlu0 %2397
      %v2399 = vsel %vm1199, %v2394, %v2396
      %v2400 = vsel %vm1199, %v2396, %v2398
      %v2404 = vadd.f32 %v2380, %v2399
      %v2405 = vadd.f32 %v2381, %v2400
      %v2406 = vadd.f32 %v2382, %v2398
      %v2407 = vmul.f32 %v1454, %v1284
      %v2408 = vmul.f32 %v1455, %v1282
      %2409 = vset.pattern.permute.xlu0 32
      %2410 = vperm.xlu0 %2409, %v1453
      %v2411 = vpop.permute.xlu0 %2410
      %v2415 = vperm.slane %v2407, 0
      %v2416 = vperm.slane %v2407, 4
      %v2417 = vperm.slane %v2408, 0
      %v2421 = vperm.slane %v2415, 0
      %v2422 = vperm.slane %v2416, 0
      %v2423 = vperm.slane %v2417, 0
      %v2424 = vmul.f32 %v2411, %v2421
      %v2425 = vmul.f32 %v2411, %v2422
      %v2426 = vmul.f32 %v2411, %v2423
      %2430 = vrot.lane.b32.xlu0 %v2424, 94
      %v2431 = vpop.permute.xlu0 %2430
      %2432 = vrot.lane.b32.xlu0 %v2425, 94
      %v2433 = vpop.permute.xlu0 %2432
      %2434 = vrot.lane.b32.xlu0 %v2426, 94
      %v2435 = vpop.permute.xlu0 %2434
      %v2436 = vsel %vm1316, %v2431, %v2433
      %v2437 = vsel %vm1316, %v2433, %v2435
      %v2441 = vadd.f32 %v2404, %v2436
      %v2442 = vadd.f32 %v2405, %v2437
      %v2443 = vadd.f32 %v2406, %v2435
      %2444 = vset.pattern.permute.xlu0 33
      %2445 = vperm.xlu0 %2444, %v1453
      %v2446 = vpop.permute.xlu0 %2445
      %v2448 = vperm.slane %v2407, 1
      %v2449 = vperm.slane %v2407, 5
      %v2450 = vperm.slane %v2408, 1
      %v2454 = vperm.slane %v2448, 1
      %v2455 = vperm.slane %v2449, 1
      %v2456 = vperm.slane %v2450, 1
      %v2457 = vmul.f32 %v2446, %v2454
      %v2458 = vmul.f32 %v2446, %v2455
      %v2459 = vmul.f32 %v2446, %v2456
      %2463 = vrot.lane.b32.xlu0 %v2457, 94
      %v2464 = vpop.permute.xlu0 %2463
      %2465 = vrot.lane.b32.xlu0 %v2458, 94
      %v2466 = vpop.permute.xlu0 %2465
      %2467 = vrot.lane.b32.xlu0 %v2459, 94
      %v2468 = vpop.permute.xlu0 %2467
      %v2469 = vsel %vm1316, %v2464, %v2466
      %v2470 = vsel %vm1316, %v2466, %v2468
      %v2474 = vadd.f32 %v2441, %v2469
      %v2475 = vadd.f32 %v2442, %v2470
      %v2476 = vadd.f32 %v2443, %v2468
      %2477 = vset.pattern.permute.xlu0 34
      %2478 = vperm.xlu0 %2477, %v1453
      %v2479 = vpop.permute.xlu0 %2478
      %v2481 = vperm.slane %v2407, 2
      %v2482 = vperm.slane %v2407, 6
      %v2483 = vperm.slane %v2408, 2
      %v2487 = vperm.slane %v2481, 2
      %v2488 = vperm.slane %v2482, 2
      %v2489 = vperm.slane %v2483, 2
      %v2490 = vmul.f32 %v2479, %v2487
      %v2491 = vmul.f32 %v2479, %v2488
      %v2492 = vmul.f32 %v2479, %v2489
      %2496 = vrot.lane.b32.xlu0 %v2490, 94
      %v2497 = vpop.permute.xlu0 %2496
      %2498 = vrot.lane.b32.xlu0 %v2491, 94
      %v2499 = vpop.permute.xlu0 %2498
      %2500 = vrot.lane.b32.xlu0 %v2492, 94
      %v2501 = vpop.permute.xlu0 %2500
      %v2502 = vsel %vm1316, %v2497, %v2499
      %v2503 = vsel %vm1316, %v2499, %v2501
      %v2507 = vadd.f32 %v2474, %v2502
      %v2508 = vadd.f32 %v2475, %v2503
      %v2509 = vadd.f32 %v2476, %v2501
      %2510 = vset.pattern.permute.xlu0 35
      %2511 = vperm.xlu0 %2510, %v1453
      %v2512 = vpop.permute.xlu0 %2511
      %v2514 = vperm.slane %v2407, 3
      %v2515 = vperm.slane %v2407, 7
      %v2516 = vperm.slane %v2408, 3
      %v2520 = vperm.slane %v2514, 3
      %v2521 = vperm.slane %v2515, 3
      %v2522 = vperm.slane %v2516, 3
      %v2523 = vmul.f32 %v2512, %v2520
      %v2524 = vmul.f32 %v2512, %v2521
      %v2525 = vmul.f32 %v2512, %v2522
      %2529 = vrot.lane.b32.xlu0 %v2523, 94
      %v2530 = vpop.permute.xlu0 %2529
      %2531 = vrot.lane.b32.xlu0 %v2524, 94
      %v2532 = vpop.permute.xlu0 %2531
      %2533 = vrot.lane.b32.xlu0 %v2525, 94
      %v2534 = vpop.permute.xlu0 %2533
      %v2535 = vsel %vm1316, %v2530, %v2532
      %v2536 = vsel %vm1316, %v2532, %v2534
      %v2540 = vadd.f32 %v2507, %v2535
      %v2541 = vadd.f32 %v2508, %v2536
      %v2542 = vadd.f32 %v2509, %v2534
      %s2543 = scalar_lea.vmem %s3, 4
      %v2544 = vld [vmem:[%s2543] sm:$0xf]
      %2546 = vset.pattern.permute.xlu0 0
      %2547 = vperm.xlu0 %2546, %v2544
      %v2548 = vpop.permute.xlu0 %2547
      %v2550 = vadd.f32 %v2540, %v2548
      %v2551 = vadd.f32 %v2541, %v2548
      %v2552 = vadd.f32 %v2542, %v2548
      %2554 = vrot.lane.b32.xlu0 %v2550, 112
      %v2555 = vpop.permute.xlu0 %2554
      %2556 = vrot.lane.b32.xlu0 %v2550, 96
      %v2557 = vpop.permute.xlu0 %2556
      %2558 = vrot.lane.b32.xlu0 %v2550, 80
      %v2559 = vpop.permute.xlu0 %2558
      %2560 = vrot.lane.b32.xlu0 %v2550, 64
      %v2561 = vpop.permute.xlu0 %2560
      %2562 = vrot.lane.b32.xlu0 %v2550, 48
      %v2563 = vpop.permute.xlu0 %2562
      %2564 = vrot.lane.b32.xlu0 %v2550, 32
      %v2565 = vpop.permute.xlu0 %2564
      %2567 = vrot.lane.b32.xlu0 %v2550, 16
      %v2568 = vpop.permute.xlu0 %2567
      %2569 = vrot.lane.b32.xlu0 %v2551, 16
      %v2570 = vpop.permute.xlu0 %2569
      %vm2571 = vcmask 130048
      %v2572 = vsel %vm2571, %v2568, %v2570
      %2573 = vrot.lane.b32.xlu0 %v2551, 112
      %v2574 = vpop.permute.xlu0 %2573
      %2575 = vrot.lane.b32.xlu0 %v2551, 96
      %v2576 = vpop.permute.xlu0 %2575
      %2577 = vrot.lane.b32.xlu0 %v2551, 80
      %v2578 = vpop.permute.xlu0 %2577
      %2579 = vrot.lane.b32.xlu0 %v2551, 64
      %v2580 = vpop.permute.xlu0 %2579
      %2581 = vrot.lane.b32.xlu0 %v2551, 48
      %v2582 = vpop.permute.xlu0 %2581
      %2583 = vrot.lane.b32.xlu0 %v2551, 32
      %v2584 = vpop.permute.xlu0 %2583
      %2586 = vrot.lane.b32.xlu0 %v2552, 16
      %v2587 = vpop.permute.xlu0 %2586
      %v2588 = vsel %vm2571, %v2570, %v2587
      %2589 = vrot.lane.b32.xlu0 %v2550, 113
      %v2590 = vpop.permute.xlu0 %2589
      %2591 = vrot.lane.b32.xlu0 %v2555, 113
      %v2592 = vpop.permute.xlu0 %2591
      %2593 = vrot.lane.b32.xlu0 %v2557, 113
      %v2594 = vpop.permute.xlu0 %2593
      %2595 = vrot.lane.b32.xlu0 %v2559, 113
      %v2596 = vpop.permute.xlu0 %2595
      %2597 = vrot.lane.b32.xlu0 %v2561, 113
      %v2598 = vpop.permute.xlu0 %2597
      %2599 = vrot.lane.b32.xlu0 %v2563, 113
      %v2600 = vpop.permute.xlu0 %2599
      %2601 = vrot.lane.b32.xlu0 %v2565, 113
      %v2602 = vpop.permute.xlu0 %2601
      %2603 = vrot.lane.b32.xlu0 %v2572, 113
      %v2604 = vpop.permute.xlu0 %2603
      %2605 = vrot.lane.b32.xlu0 %v2551, 113
      %v2606 = vpop.permute.xlu0 %2605
      %2607 = vrot.lane.b32.xlu0 %v2574, 113
      %v2608 = vpop.permute.xlu0 %2607
      %2609 = vrot.lane.b32.xlu0 %v2576, 113
      %v2610 = vpop.permute.xlu0 %2609
      %2611 = vrot.lane.b32.xlu0 %v2578, 113
      %v2612 = vpop.permute.xlu0 %2611
      %2613 = vrot.lane.b32.xlu0 %v2580, 113
      %v2614 = vpop.permute.xlu0 %2613
      %2615 = vrot.lane.b32.xlu0 %v2582, 113
      %v2616 = vpop.permute.xlu0 %2615
      %2617 = vrot.lane.b32.xlu0 %v2584, 113
      %v2618 = vpop.permute.xlu0 %2617
      %2619 = vrot.lane.b32.xlu0 %v2588, 113
      %v2620 = vpop.permute.xlu0 %2619
      %v2637 = vrot.slane %v2594, 4
      %v2638 = vsel %vm268, %v2637, %v2590
      %v2640 = vunpack.c.l.s4 1983009808
      %v2641 = vunpack.c.0.s8 %v2640
      %v2642 = vperm.slane %v2638, %v2641
      %v2643 = vrot.slane %v2596, 4
      %v2644 = vsel %vm268, %v2643, %v2592
      %v2646 = vunpack.c.l.s4 1983009808
      %v2647 = vunpack.c.0.s8 %v2646
      %v2648 = vperm.slane %v2644, %v2647
      %v2649 = vrot.slane %v2602, 4
      %v2650 = vsel %vm268, %v2649, %v2598
      %v2652 = vunpack.c.l.s4 1983009808
      %v2653 = vunpack.c.0.s8 %v2652
      %v2654 = vperm.slane %v2650, %v2653
      %v2655 = vrot.slane %v2604, 4
      %v2656 = vsel %vm268, %v2655, %v2600
      %v2658 = vunpack.c.l.s4 1983009808
      %v2659 = vunpack.c.0.s8 %v2658
      %v2660 = vperm.slane %v2656, %v2659
      %v2661 = vrot.slane %v2648, 4
      %v2662 = vsel %vm268, %v2661, %v2642
      %v2663 = vrot.slane %v2642, 4
      %v2664 = vsel %vm268, %v2648, %v2663
      %v2666 = vunpack.c.l.s4 1934713408
      %v2667 = vunpack.c.0.s8 %v2666
      %v2668 = vperm.slane %v2662, %v2667
      %v2670 = vunpack.c.l.s4 1934713408
      %v2671 = vunpack.c.0.s8 %v2670
      %v2672 = vperm.slane %v2664, %v2671
      %v2673 = vrot.slane %v2660, 4
      %v2674 = vsel %vm268, %v2673, %v2654
      %v2675 = vrot.slane %v2654, 4
      %v2676 = vsel %vm268, %v2660, %v2675
      %v2678 = vunpack.c.l.s4 1934713408
      %v2679 = vunpack.c.0.s8 %v2678
      %v2680 = vperm.slane %v2674, %v2679
      %v2682 = vunpack.c.l.s4 1934713408
      %v2683 = vunpack.c.0.s8 %v2682
      %v2684 = vperm.slane %v2676, %v2683
      %v2685 = vrot.slane %v2680, 4
      %v2686 = vsel %vm268, %v2685, %v2668
      %v2687 = vrot.slane %v2668, 4
      %v2688 = vsel %vm268, %v2680, %v2687
      %v2689 = vrot.slane %v2684, 4
      %v2690 = vsel %vm268, %v2689, %v2672
      %v2691 = vrot.slane %v2672, 4
      %v2692 = vsel %vm268, %v2684, %v2691
      %v2693 = vrot.slane %v2610, 4
      %v2694 = vsel %vm268, %v2693, %v2606
      %v2696 = vunpack.c.l.s4 1983009808
      %v2697 = vunpack.c.0.s8 %v2696
      %v2698 = vperm.slane %v2694, %v2697
      %v2699 = vrot.slane %v2612, 4
      %v2700 = vsel %vm268, %v2699, %v2608
      %v2702 = vunpack.c.l.s4 1983009808
      %v2703 = vunpack.c.0.s8 %v2702
      %v2704 = vperm.slane %v2700, %v2703
      %v2705 = vrot.slane %v2618, 4
      %v2706 = vsel %vm268, %v2705, %v2614
      %v2708 = vunpack.c.l.s4 1983009808
      %v2709 = vunpack.c.0.s8 %v2708
      %v2710 = vperm.slane %v2706, %v2709
      %v2711 = vrot.slane %v2620, 4
      %v2712 = vsel %vm268, %v2711, %v2616
      %v2714 = vunpack.c.l.s4 1983009808
      %v2715 = vunpack.c.0.s8 %v2714
      %v2716 = vperm.slane %v2712, %v2715
      %v2717 = vrot.slane %v2704, 4
      %v2718 = vsel %vm268, %v2717, %v2698
      %v2719 = vrot.slane %v2698, 4
      %v2720 = vsel %vm268, %v2704, %v2719
      %v2722 = vunpack.c.l.s4 1934713408
      %v2723 = vunpack.c.0.s8 %v2722
      %v2724 = vperm.slane %v2718, %v2723
      %v2726 = vunpack.c.l.s4 1934713408
      %v2727 = vunpack.c.0.s8 %v2726
      %v2728 = vperm.slane %v2720, %v2727
      %v2729 = vrot.slane %v2716, 4
      %v2730 = vsel %vm268, %v2729, %v2710
      %v2731 = vrot.slane %v2710, 4
      %v2732 = vsel %vm268, %v2716, %v2731
      %v2734 = vunpack.c.l.s4 1934713408
      %v2735 = vunpack.c.0.s8 %v2734
      %v2736 = vperm.slane %v2730, %v2735
      %v2738 = vunpack.c.l.s4 1934713408
      %v2739 = vunpack.c.0.s8 %v2738
      %v2740 = vperm.slane %v2732, %v2739
      %v2741 = vrot.slane %v2736, 4
      %v2742 = vsel %vm268, %v2741, %v2724
      %v2743 = vrot.slane %v2724, 4
      %v2744 = vsel %vm268, %v2736, %v2743
      %v2745 = vrot.slane %v2740, 4
      %v2746 = vsel %vm268, %v2745, %v2728
      %v2747 = vrot.slane %v2728, 4
      %v2748 = vsel %vm268, %v2740, %v2747
      %v2749 = vsel %vm2571, %v2686, -inf
      %v2750 = vsel %vm2571, %v2688, -inf
      %v2751 = vsel %vm2571, %v2690, -inf
      %v2752 = vmax.f32 %v2749, %v2751
      %v2753 = vsel %vm2571, %v2692, -inf
      %v2754 = vmax.f32 %v2750, %v2753
      %v2755 = vmax.f32 %v2752, %v2754
      %v2756 = vsel %vm2571, %v2742, -inf
      %v2757 = vsel %vm2571, %v2744, -inf
      %v2758 = vsel %vm2571, %v2746, -inf
      %v2759 = vmax.f32 %v2756, %v2758
      %v2760 = vsel %vm2571, %v2748, -inf
      %v2761 = vmax.f32 %v2757, %v2760
      %v2762 = vmax.f32 %v2759, %v2761
      %v2763 = vsel %vm2571, %v2686, 0.0
      %v2764 = vsel %vm2571, %v2688, 0.0
      %v2765 = vadd.f32 %v2763, %v2764
      %v2766 = vsel %vm2571, %v2690, 0.0
      %v2767 = vadd.f32 %v2765, %v2766
      %v2768 = vsel %vm2571, %v2692, 0.0
      %v2769 = vadd.f32 %v2767, %v2768
      %v2770 = vsel %vm2571, %v2742, 0.0
      %v2771 = vsel %vm2571, %v2744, 0.0
      %v2772 = vadd.f32 %v2770, %v2771
      %v2773 = vsel %vm2571, %v2746, 0.0
      %v2774 = vadd.f32 %v2772, %v2773
      %v2775 = vsel %vm2571, %v2748, 0.0
      %v2776 = vadd.f32 %v2774, %v2775
      %v2777 = vrcp.pop 4.0
      %v2778 = vmul.f32 4.0, %v2777
      %v2779 = vsub.f32 1.0, %v2778
      %v2780 = vmul.f32 %v2777, %v2779
      %v2781 = vadd.f32 %v2777, %v2780
      %vm2782 = vweird.f32 %v2777
      %v2783 = vsel %vm2782, %v2777, %v2781
      %v2784 = vmul.f32 %v2769, %v2783
      %v2785 = vmul.f32 %v2776, %v2783
      %v2786 = vmax.f32 %v2749, %v2756
      %v2787 = vrot.slane %v2786, 4
      %v2788 = vmax.f32 %v2786, %v2787
      %v2789 = vrot.slane %v2788, 2
      %v2790 = vmax.f32 %v2788, %v2789
      %v2791 = vrot.slane %v2790, 1
      %v2792 = vmax.f32 %v2790, %v2791
      %v2793 = vmax.f32 %v2750, %v2757
      %v2794 = vrot.slane %v2793, 4
      %v2795 = vmax.f32 %v2793, %v2794
      %v2796 = vrot.slane %v2795, 2
      %v2797 = vmax.f32 %v2795, %v2796
      %v2798 = vrot.slane %v2797, 1
      %v2799 = vmax.f32 %v2797, %v2798
      %v2800 = vmax.f32 %v2751, %v2758
      %v2801 = vrot.slane %v2800, 4
      %v2802 = vmax.f32 %v2800, %v2801
      %v2803 = vrot.slane %v2802, 2
      %v2804 = vmax.f32 %v2802, %v2803
      %v2805 = vrot.slane %v2804, 1
      %v2806 = vmax.f32 %v2804, %v2805
      %v2807 = vmax.f32 %v2753, %v2760
      %v2808 = vrot.slane %v2807, 4
      %v2809 = vmax.f32 %v2807, %v2808
      %v2810 = vrot.slane %v2809, 2
      %v2811 = vmax.f32 %v2809, %v2810
      %v2812 = vrot.slane %v2811, 1
      %v2813 = vmax.f32 %v2811, %v2812
      %v2814 = vadd.f32 %v2763, %v2770
      %v2815 = vrot.slane %v2814, 4
      %v2816 = vadd.f32 %v2814, %v2815
      %v2817 = vrot.slane %v2816, 2
      %v2818 = vadd.f32 %v2816, %v2817
      %v2819 = vrot.slane %v2818, 1
      %v2820 = vadd.f32 %v2818, %v2819
      %v2821 = vadd.f32 %v2764, %v2771
      %v2822 = vrot.slane %v2821, 4
      %v2823 = vadd.f32 %v2821, %v2822
      %v2824 = vrot.slane %v2823, 2
      %v2825 = vadd.f32 %v2823, %v2824
      %v2826 = vrot.slane %v2825, 1
      %v2827 = vadd.f32 %v2825, %v2826
      %v2828 = vadd.f32 %v2766, %v2773
      %v2829 = vrot.slane %v2828, 4
      %v2830 = vadd.f32 %v2828, %v2829
      %v2831 = vrot.slane %v2830, 2
      %v2832 = vadd.f32 %v2830, %v2831
      %v2833 = vrot.slane %v2832, 1
      %v2834 = vadd.f32 %v2832, %v2833
      %v2835 = vadd.f32 %v2768, %v2775
      %v2836 = vrot.slane %v2835, 4
      %v2837 = vadd.f32 %v2835, %v2836
      %v2838 = vrot.slane %v2837, 2
      %v2839 = vadd.f32 %v2837, %v2838
      %v2840 = vrot.slane %v2839, 1
      %v2841 = vadd.f32 %v2839, %v2840
      %v2842 = vrcp.pop 16.0
      %v2843 = vmul.f32 16.0, %v2842
      %v2844 = vsub.f32 1.0, %v2843
      %v2845 = vmul.f32 %v2842, %v2844
      %v2846 = vadd.f32 %v2842, %v2845
      %vm2847 = vweird.f32 %v2842
      %v2848 = vsel %vm2847, %v2842, %v2846
      %v2849 = vmul.f32 %v2820, %v2848
      %v2850 = vmul.f32 %v2827, %v2848
      %v2851 = vmul.f32 %v2834, %v2848
      %v2852 = vmul.f32 %v2841, %v2848
      %2853 = vmax.xlane.f32.xlu0 %v2749
      %v2854 = vpop.xlane.xlu0 %2853
      %2855 = vmax.xlane.f32.xlu0 %v2756
      %v2856 = vpop.xlane.xlu0 %2855
      %2857 = vmax.xlane.f32.xlu0 %v2750
      %v2858 = vpop.xlane.xlu0 %2857
      %2859 = vmax.xlane.f32.xlu0 %v2757
      %v2860 = vpop.xlane.xlu0 %2859
      %2861 = vmax.xlane.f32.xlu0 %v2751
      %v2862 = vpop.xlane.xlu0 %2861
      %2863 = vmax.xlane.f32.xlu0 %v2758
      %v2864 = vpop.xlane.xlu0 %2863
      %2865 = vmax.xlane.f32.xlu0 %v2753
      %v2866 = vpop.xlane.xlu0 %2865
      %2867 = vmax.xlane.f32.xlu0 %v2760
      %v2868 = vpop.xlane.xlu0 %2867
      %2869 = vadd.xlane.f32.xlu0 %v2763
      %v2870 = vpop.xlane.xlu0 %2869
      %2871 = vadd.xlane.f32.xlu0 %v2770
      %v2872 = vpop.xlane.xlu0 %2871
      %2873 = vadd.xlane.f32.xlu0 %v2764
      %v2874 = vpop.xlane.xlu0 %2873
      %2875 = vadd.xlane.f32.xlu0 %v2771
      %v2876 = vpop.xlane.xlu0 %2875
      %2877 = vadd.xlane.f32.xlu0 %v2766
      %v2878 = vpop.xlane.xlu0 %2877
      %2879 = vadd.xlane.f32.xlu0 %v2773
      %v2880 = vpop.xlane.xlu0 %2879
      %2881 = vadd.xlane.f32.xlu0 %v2768
      %v2882 = vpop.xlane.xlu0 %2881
      %2883 = vadd.xlane.f32.xlu0 %v2775
      %v2884 = vpop.xlane.xlu0 %2883
      %v2885 = vmul.f32 %v2870, %v2848
      %v2886 = vmul.f32 %v2872, %v2848
      %v2887 = vmul.f32 %v2874, %v2848
      %v2888 = vmul.f32 %v2876, %v2848
      %v2889 = vmul.f32 %v2878, %v2848
      %v2890 = vmul.f32 %v2880, %v2848
      %v2891 = vmul.f32 %v2882, %v2848
      %v2892 = vmul.f32 %v2884, %v2848
      %2893 = vst [vmem:[#allocation3] sm:$0xff] 0.0
      %2894 = vst [vmem:[#allocation3 + $0x8] sm:$0xff] 0.0
      %2895 = vst [vmem:[#allocation3 + $0x10] sm:$0x3f] 0.0
      %2896 = vst [vmem:[#allocation3 + $0x18] sm:$0xff] 0.0
      %2897 = vst [vmem:[#allocation3 + $0x20] sm:$0xff] 0.0
      %2898 = vst [vmem:[#allocation3 + $0x28] sm:$0x3f] 0.0
      %2901 = vrot.lane.b32.xlu0 %v2755, 3
      %v2902 = vpop.permute.xlu0 %2901
      %2903 = vrot.lane.b32.xlu0 %v2762, 3
      %v2904 = vpop.permute.xlu0 %2903
      %vm2907 = vcmask 154648
      %2908 = vst.msk [vmem:[#allocation3 + $0x3] sm:$0xff] %vm2907, %v2902
      %2909 = vst.msk [vmem:[#allocation3 + $0xb] sm:$0xff] %vm2907, %v2904
      %2912 = vrot.lane.b32.xlu0 %v2784, 3
      %v2913 = vpop.permute.xlu0 %2912
      %2914 = vrot.lane.b32.xlu0 %v2785, 3
      %v2915 = vpop.permute.xlu0 %2914
      %s2918 = scalar_lea.vmem [#allocation3], 24
      %2919 = vst.msk [vmem:[%s2918 + $0x3] sm:$0xff] %vm2907, %v2913
      %2920 = vst.msk [vmem:[%s2918 + $0xb] sm:$0xff] %vm2907, %v2915
      %vm2925 = vcmask 1041409
      %v2926 = vsel %vm2925, %v2799, %v2792
      %vm2927 = vcmask 1042434
      %v2928 = vsel %vm2927, %v2806, %v2926
      %vm2929 = vcmask 1043459
      %v2930 = vsel %vm2929, %v2813, %v2928
      %2931 = vrot.lane.b32.xlu0 %v2930, 35
      %v2932 = vpop.permute.xlu0 %2931
      %vm2934 = vcmask 412952
      %2935 = vst.msk [vmem:[#allocation3 + $0x3] sm:$0xf] %vm2934, %v2932
      %v2940 = vsel %vm2925, %v2850, %v2849
      %v2941 = vsel %vm2927, %v2851, %v2940
      %v2942 = vsel %vm2929, %v2852, %v2941
      %2943 = vrot.lane.b32.xlu0 %v2942, 35
      %v2944 = vpop.permute.xlu0 %2943
      %2946 = vst.msk [vmem:[%s2918 + $0x3] sm:$0xf] %vm2934, %v2944
      %v2955 = vlaneseq
      %v2956 = vand.u32 %v2955, 127
      %v2957 = vadd.s32 %v2956, 4294967229
      %v2958 = vperm.slane %v2854, %v2957
      %v2959 = vadd.s32 %v2956, 4294967221
      %v2960 = vperm.slane %v2856, %v2959
      %vm2961 = vcmask 679512
      %v2962 = vsel %vm2961, %v2960, %v2958
      %v2963 = vperm.slane %v2858, %v2957
      %v2964 = vperm.slane %v2860, %v2959
      %v2965 = vsel %vm2961, %v2964, %v2963
      %v2966 = vperm.slane %v2862, %v2957
      %v2967 = vperm.slane %v2864, %v2959
      %v2968 = vsel %vm2961, %v2967, %v2966
      %v2969 = vperm.slane %v2866, %v2957
      %v2970 = vperm.slane %v2868, %v2959
      %v2971 = vsel %vm2961, %v2970, %v2969
      %v2972 = vsel %vm2925, %v2965, %v2962
      %v2973 = vsel %vm2927, %v2968, %v2972
      %v2974 = vsel %vm2929, %v2971, %v2973
      %vm2976 = vcmask 675352
      %2977 = vst.msk [vmem:[#allocation3 + $0x3] sm:$0xf] %vm2976, %v2974
      %v2986 = vperm.slane %v2885, %v2957
      %v2987 = vperm.slane %v2886, %v2959
      %v2988 = vsel %vm2961, %v2987, %v2986
      %v2989 = vperm.slane %v2887, %v2957
      %v2990 = vperm.slane %v2888, %v2959
      %v2991 = vsel %vm2961, %v2990, %v2989
      %v2992 = vperm.slane %v2889, %v2957
      %v2993 = vperm.slane %v2890, %v2959
      %v2994 = vsel %vm2961, %v2993, %v2992
      %v2995 = vperm.slane %v2891, %v2957
      %v2996 = vperm.slane %v2892, %v2959
      %v2997 = vsel %vm2961, %v2996, %v2995
      %v2998 = vsel %vm2925, %v2991, %v2988
      %v2999 = vsel %vm2927, %v2994, %v2998
      %v3000 = vsel %vm2929, %v2997, %v2999
      %3002 = vst.msk [vmem:[%s2918 + $0x3] sm:$0xf] %vm2976, %v3000
      %v3003 = vld [vmem:[#allocation3] sm:$0xff]
      %v3004 = vld [vmem:[#allocation3 + $0x8] sm:$0xff]
      %v3005 = vld [vmem:[#allocation3 + $0x18] sm:$0xff]
      %v3006 = vld [vmem:[#allocation3 + $0x20] sm:$0xff]
      %v3007 = vld [vmem:[%s4] sm:$0x1]
      %v3008 = vld [vmem:[%s4 + $0x1] sm:$0x1]
      %v3011 = vperm.slane %v3007, 0
      %v3012 = vperm.slane %v3008, 0
      %v3015 = vmul.f32 %v3003, %v3011
      %v3016 = vmul.f32 %v3004, %v3011
      %v3017 = vmul.f32 %v3005, %v3012
      %v3018 = vmul.f32 %v3006, %v3012
      %v3019 = vadd.f32 %v3015, 0.0
      %v3020 = vadd.f32 %v3016, 0.0
      %v3021 = vadd.f32 %v3017, 0.0
      %v3022 = vadd.f32 %v3018, 0.0
      %s3023 = scalar_lea.vmem %s4, 2
      %v3024 = vld [vmem:[%s3023] sm:$0x1]
      %v3025 = vld [vmem:[%s3023 + $0x1] sm:$0x1]
      %v3028 = vperm.slane %v3024, 0
      %v3029 = vperm.slane %v3025, 0
      %3030 = vrot.lane.b32.xlu0 %v3028, 1
      %v3031 = vpop.permute.xlu0 %3030
      %3032 = vrot.lane.b32.xlu0 %v3029, 1
      %v3033 = vpop.permute.xlu0 %3032
      %v3036 = vmul.f32 %v3003, %v3031
      %v3037 = vmul.f32 %v3004, %v3031
      %v3038 = vmul.f32 %v3005, %v3033
      %v3039 = vmul.f32 %v3006, %v3033
      %3044 = vrot.lane.b32.xlu0 %v3036, 127
      %v3045 = vpop.permute.xlu0 %3044
      %3046 = vrot.lane.b32.xlu0 %v3037, 127
      %v3047 = vpop.permute.xlu0 %3046
      %3048 = vrot.lane.b32.xlu0 %v3038, 127
      %v3049 = vpop.permute.xlu0 %3048
      %3050 = vrot.lane.b32.xlu0 %v3039, 127
      %v3051 = vpop.permute.xlu0 %3050
      %v3056 = vadd.f32 %v3019, %v3045
      %v3057 = vadd.f32 %v3020, %v3047
      %v3058 = vadd.f32 %v3021, %v3049
      %v3059 = vadd.f32 %v3022, %v3051
      %s3060 = scalar_lea.vmem %s4, 4
      %v3061 = vld [vmem:[%s3060] sm:$0x1]
      %v3062 = vld [vmem:[%s3060 + $0x1] sm:$0x1]
      %v3065 = vperm.slane %v3061, 0
      %v3066 = vperm.slane %v3062, 0
      %3067 = vrot.lane.b32.xlu0 %v3065, 2
      %v3068 = vpop.permute.xlu0 %3067
      %3069 = vrot.lane.b32.xlu0 %v3066, 2
      %v3070 = vpop.permute.xlu0 %3069
      %v3073 = vmul.f32 %v3003, %v3068
      %v3074 = vmul.f32 %v3004, %v3068
      %v3075 = vmul.f32 %v3005, %v3070
      %v3076 = vmul.f32 %v3006, %v3070
      %3081 = vrot.lane.b32.xlu0 %v3073, 126
      %v3082 = vpop.permute.xlu0 %3081
      %3083 = vrot.lane.b32.xlu0 %v3074, 126
      %v3084 = vpop.permute.xlu0 %3083
      %3085 = vrot.lane.b32.xlu0 %v3075, 126
      %v3086 = vpop.permute.xlu0 %3085
      %3087 = vrot.lane.b32.xlu0 %v3076, 126
      %v3088 = vpop.permute.xlu0 %3087
      %v3093 = vadd.f32 %v3056, %v3082
      %v3094 = vadd.f32 %v3057, %v3084
      %v3095 = vadd.f32 %v3058, %v3086
      %v3096 = vadd.f32 %v3059, %v3088
      %s3097 = scalar_lea.vmem %s4, 6
      %v3098 = vld [vmem:[%s3097] sm:$0x1]
      %v3099 = vld [vmem:[%s3097 + $0x1] sm:$0x1]
      %v3102 = vperm.slane %v3098, 0
      %v3103 = vperm.slane %v3099, 0
      %3104 = vrot.lane.b32.xlu0 %v3102, 3
      %v3105 = vpop.permute.xlu0 %3104
      %3106 = vrot.lane.b32.xlu0 %v3103, 3
      %v3107 = vpop.permute.xlu0 %3106
      %v3110 = vmul.f32 %v3003, %v3105
      %v3111 = vmul.f32 %v3004, %v3105
      %v3112 = vmul.f32 %v3005, %v3107
      %v3113 = vmul.f32 %v3006, %v3107
      %3118 = vrot.lane.b32.xlu0 %v3110, 125
      %v3119 = vpop.permute.xlu0 %3118
      %3120 = vrot.lane.b32.xlu0 %v3111, 125
      %v3121 = vpop.permute.xlu0 %3120
      %3122 = vrot.lane.b32.xlu0 %v3112, 125
      %v3123 = vpop.permute.xlu0 %3122
      %3124 = vrot.lane.b32.xlu0 %v3113, 125
      %v3125 = vpop.permute.xlu0 %3124
      %v3130 = vadd.f32 %v3093, %v3119
      %v3131 = vadd.f32 %v3094, %v3121
      %v3132 = vadd.f32 %v3095, %v3123
      %v3133 = vadd.f32 %v3096, %v3125
      %s3134 = scalar_lea.vmem %s4, 8
      %v3135 = vld [vmem:[%s3134] sm:$0x1]
      %v3136 = vld [vmem:[%s3134 + $0x1] sm:$0x1]
      %v3139 = vperm.slane %v3135, 0
      %v3140 = vperm.slane %v3136, 0
      %3141 = vrot.lane.b32.xlu0 %v3139, 4
      %v3142 = vpop.permute.xlu0 %3141
      %3143 = vrot.lane.b32.xlu0 %v3140, 4
      %v3144 = vpop.permute.xlu0 %3143
      %v3147 = vmul.f32 %v3003, %v3142
      %v3148 = vmul.f32 %v3004, %v3142
      %v3149 = vmul.f32 %v3005, %v3144
      %v3150 = vmul.f32 %v3006, %v3144
      %3155 = vrot.lane.b32.xlu0 %v3147, 124
      %v3156 = vpop.permute.xlu0 %3155
      %3157 = vrot.lane.b32.xlu0 %v3148, 124
      %v3158 = vpop.permute.xlu0 %3157
      %3159 = vrot.lane.b32.xlu0 %v3149, 124
      %v3160 = vpop.permute.xlu0 %3159
      %3161 = vrot.lane.b32.xlu0 %v3150, 124
      %v3162 = vpop.permute.xlu0 %3161
      %v3167 = vadd.f32 %v3130, %v3156
      %v3168 = vadd.f32 %v3131, %v3158
      %v3169 = vadd.f32 %v3132, %v3160
      %v3170 = vadd.f32 %v3133, %v3162
      %s3171 = scalar_lea.vmem %s4, 10
      %v3172 = vld [vmem:[%s3171] sm:$0x1]
      %v3173 = vld [vmem:[%s3171 + $0x1] sm:$0x1]
      %v3176 = vperm.slane %v3172, 0
      %v3177 = vperm.slane %v3173, 0
      %3178 = vrot.lane.b32.xlu0 %v3176, 5
      %v3179 = vpop.permute.xlu0 %3178
      %3180 = vrot.lane.b32.xlu0 %v3177, 5
      %v3181 = vpop.permute.xlu0 %3180
      %v3184 = vmul.f32 %v3003, %v3179
      %v3185 = vmul.f32 %v3004, %v3179
      %v3186 = vmul.f32 %v3005, %v3181
      %v3187 = vmul.f32 %v3006, %v3181
      %3192 = vrot.lane.b32.xlu0 %v3184, 123
      %v3193 = vpop.permute.xlu0 %3192
      %3194 = vrot.lane.b32.xlu0 %v3185, 123
      %v3195 = vpop.permute.xlu0 %3194
      %3196 = vrot.lane.b32.xlu0 %v3186, 123
      %v3197 = vpop.permute.xlu0 %3196
      %3198 = vrot.lane.b32.xlu0 %v3187, 123
      %v3199 = vpop.permute.xlu0 %3198
      %v3204 = vadd.f32 %v3167, %v3193
      %v3205 = vadd.f32 %v3168, %v3195
      %v3206 = vadd.f32 %v3169, %v3197
      %v3207 = vadd.f32 %v3170, %v3199
      %s3208 = scalar_lea.vmem %s4, 12
      %v3209 = vld [vmem:[%s3208] sm:$0x1]
      %v3210 = vld [vmem:[%s3208 + $0x1] sm:$0x1]
      %v3213 = vperm.slane %v3209, 0
      %v3214 = vperm.slane %v3210, 0
      %3215 = vrot.lane.b32.xlu0 %v3213, 6
      %v3216 = vpop.permute.xlu0 %3215
      %3217 = vrot.lane.b32.xlu0 %v3214, 6
      %v3218 = vpop.permute.xlu0 %3217
      %v3221 = vmul.f32 %v3003, %v3216
      %v3222 = vmul.f32 %v3004, %v3216
      %v3223 = vmul.f32 %v3005, %v3218
      %v3224 = vmul.f32 %v3006, %v3218
      %3229 = vrot.lane.b32.xlu0 %v3221, 122
      %v3230 = vpop.permute.xlu0 %3229
      %3231 = vrot.lane.b32.xlu0 %v3222, 122
      %v3232 = vpop.permute.xlu0 %3231
      %3233 = vrot.lane.b32.xlu0 %v3223, 122
      %v3234 = vpop.permute.xlu0 %3233
      %3235 = vrot.lane.b32.xlu0 %v3224, 122
      %v3236 = vpop.permute.xlu0 %3235
      %v3241 = vadd.f32 %v3204, %v3230
      %v3242 = vadd.f32 %v3205, %v3232
      %v3243 = vadd.f32 %v3206, %v3234
      %v3244 = vadd.f32 %v3207, %v3236
      %v3245 = vld [vmem:[#allocation3 + $0x1] sm:$0xff]
      %v3246 = vld [vmem:[#allocation3 + $0x9] sm:$0xff]
      %v3247 = vld [vmem:[#allocation3 + $0x19] sm:$0xff]
      %v3248 = vld [vmem:[#allocation3 + $0x21] sm:$0xff]
      %s3249 = scalar_lea.vmem %s4, 14
      %v3250 = vld [vmem:[%s3249] sm:$0x1]
      %v3251 = vld [vmem:[%s3249 + $0x1] sm:$0x1]
      %v3254 = vperm.slane %v3250, 0
      %v3255 = vperm.slane %v3251, 0
      %v3258 = vmul.f32 %v3245, %v3254
      %v3259 = vmul.f32 %v3246, %v3254
      %v3260 = vmul.f32 %v3247, %v3255
      %v3261 = vmul.f32 %v3248, %v3255
      %v3262 = vadd.f32 %v3241, %v3258
      %v3263 = vadd.f32 %v3242, %v3259
      %v3264 = vadd.f32 %v3243, %v3260
      %v3265 = vadd.f32 %v3244, %v3261
      %s3266 = scalar_lea.vmem %s4, 16
      %v3267 = vld [vmem:[%s3266] sm:$0x1]
      %v3268 = vld [vmem:[%s3266 + $0x1] sm:$0x1]
      %v3271 = vperm.slane %v3267, 0
      %v3272 = vperm.slane %v3268, 0
      %3273 = vrot.lane.b32.xlu0 %v3271, 1
      %v3274 = vpop.permute.xlu0 %3273
      %3275 = vrot.lane.b32.xlu0 %v3272, 1
      %v3276 = vpop.permute.xlu0 %3275
      %v3279 = vmul.f32 %v3245, %v3274
      %v3280 = vmul.f32 %v3246, %v3274
      %v3281 = vmul.f32 %v3247, %v3276
      %v3282 = vmul.f32 %v3248, %v3276
      %3287 = vrot.lane.b32.xlu0 %v3279, 127
      %v3288 = vpop.permute.xlu0 %3287
      %3289 = vrot.lane.b32.xlu0 %v3280, 127
      %v3290 = vpop.permute.xlu0 %3289
      %3291 = vrot.lane.b32.xlu0 %v3281, 127
      %v3292 = vpop.permute.xlu0 %3291
      %3293 = vrot.lane.b32.xlu0 %v3282, 127
      %v3294 = vpop.permute.xlu0 %3293
      %v3299 = vadd.f32 %v3262, %v3288
      %v3300 = vadd.f32 %v3263, %v3290
      %v3301 = vadd.f32 %v3264, %v3292
      %v3302 = vadd.f32 %v3265, %v3294
      %s3303 = scalar_lea.vmem %s4, 18
      %v3304 = vld [vmem:[%s3303] sm:$0x1]
      %v3305 = vld [vmem:[%s3303 + $0x1] sm:$0x1]
      %v3308 = vperm.slane %v3304, 0
      %v3309 = vperm.slane %v3305, 0
      %3310 = vrot.lane.b32.xlu0 %v3308, 2
      %v3311 = vpop.permute.xlu0 %3310
      %3312 = vrot.lane.b32.xlu0 %v3309, 2
      %v3313 = vpop.permute.xlu0 %3312
      %v3316 = vmul.f32 %v3245, %v3311
      %v3317 = vmul.f32 %v3246, %v3311
      %v3318 = vmul.f32 %v3247, %v3313
      %v3319 = vmul.f32 %v3248, %v3313
      %3324 = vrot.lane.b32.xlu0 %v3316, 126
      %v3325 = vpop.permute.xlu0 %3324
      %3326 = vrot.lane.b32.xlu0 %v3317, 126
      %v3327 = vpop.permute.xlu0 %3326
      %3328 = vrot.lane.b32.xlu0 %v3318, 126
      %v3329 = vpop.permute.xlu0 %3328
      %3330 = vrot.lane.b32.xlu0 %v3319, 126
      %v3331 = vpop.permute.xlu0 %3330
      %v3336 = vadd.f32 %v3299, %v3325
      %v3337 = vadd.f32 %v3300, %v3327
      %v3338 = vadd.f32 %v3301, %v3329
      %v3339 = vadd.f32 %v3302, %v3331
      %s3340 = scalar_lea.vmem %s4, 20
      %v3341 = vld [vmem:[%s3340] sm:$0x1]
      %v3342 = vld [vmem:[%s3340 + $0x1] sm:$0x1]
      %v3345 = vperm.slane %v3341, 0
      %v3346 = vperm.slane %v3342, 0
      %3347 = vrot.lane.b32.xlu0 %v3345, 3
      %v3348 = vpop.permute.xlu0 %3347
      %3349 = vrot.lane.b32.xlu0 %v3346, 3
      %v3350 = vpop.permute.xlu0 %3349
      %v3353 = vmul.f32 %v3245, %v3348
      %v3354 = vmul.f32 %v3246, %v3348
      %v3355 = vmul.f32 %v3247, %v3350
      %v3356 = vmul.f32 %v3248, %v3350
      %3361 = vrot.lane.b32.xlu0 %v3353, 125
      %v3362 = vpop.permute.xlu0 %3361
      %3363 = vrot.lane.b32.xlu0 %v3354, 125
      %v3364 = vpop.permute.xlu0 %3363
      %3365 = vrot.lane.b32.xlu0 %v3355, 125
      %v3366 = vpop.permute.xlu0 %3365
      %3367 = vrot.lane.b32.xlu0 %v3356, 125
      %v3368 = vpop.permute.xlu0 %3367
      %v3373 = vadd.f32 %v3336, %v3362
      %v3374 = vadd.f32 %v3337, %v3364
      %v3375 = vadd.f32 %v3338, %v3366
      %v3376 = vadd.f32 %v3339, %v3368
      %s3377 = scalar_lea.vmem %s4, 22
      %v3378 = vld [vmem:[%s3377] sm:$0x1]
      %v3379 = vld [vmem:[%s3377 + $0x1] sm:$0x1]
      %v3382 = vperm.slane %v3378, 0
      %v3383 = vperm.slane %v3379, 0
      %3384 = vrot.lane.b32.xlu0 %v3382, 4
      %v3385 = vpop.permute.xlu0 %3384
      %3386 = vrot.lane.b32.xlu0 %v3383, 4
      %v3387 = vpop.permute.xlu0 %3386
      %v3390 = vmul.f32 %v3245, %v3385
      %v3391 = vmul.f32 %v3246, %v3385
      %v3392 = vmul.f32 %v3247, %v3387
      %v3393 = vmul.f32 %v3248, %v3387
      %3398 = vrot.lane.b32.xlu0 %v3390, 124
      %v3399 = vpop.permute.xlu0 %3398
      %3400 = vrot.lane.b32.xlu0 %v3391, 124
      %v3401 = vpop.permute.xlu0 %3400
      %3402 = vrot.lane.b32.xlu0 %v3392, 124
      %v3403 = vpop.permute.xlu0 %3402
      %3404 = vrot.lane.b32.xlu0 %v3393, 124
      %v3405 = vpop.permute.xlu0 %3404
      %v3410 = vadd.f32 %v3373, %v3399
      %v3411 = vadd.f32 %v3374, %v3401
      %v3412 = vadd.f32 %v3375, %v3403
      %v3413 = vadd.f32 %v3376, %v3405
      %s3414 = scalar_lea.vmem %s4, 24
      %v3415 = vld [vmem:[%s3414] sm:$0x1]
      %v3416 = vld [vmem:[%s3414 + $0x1] sm:$0x1]
      %v3419 = vperm.slane %v3415, 0
      %v3420 = vperm.slane %v3416, 0
      %3421 = vrot.lane.b32.xlu0 %v3419, 5
      %v3422 = vpop.permute.xlu0 %3421
      %3423 = vrot.lane.b32.xlu0 %v3420, 5
      %v3424 = vpop.permute.xlu0 %3423
      %v3427 = vmul.f32 %v3245, %v3422
      %v3428 = vmul.f32 %v3246, %v3422
      %v3429 = vmul.f32 %v3247, %v3424
      %v3430 = vmul.f32 %v3248, %v3424
      %3435 = vrot.lane.b32.xlu0 %v3427, 123
      %v3436 = vpop.permute.xlu0 %3435
      %3437 = vrot.lane.b32.xlu0 %v3428, 123
      %v3438 = vpop.permute.xlu0 %3437
      %3439 = vrot.lane.b32.xlu0 %v3429, 123
      %v3440 = vpop.permute.xlu0 %3439
      %3441 = vrot.lane.b32.xlu0 %v3430, 123
      %v3442 = vpop.permute.xlu0 %3441
      %v3447 = vadd.f32 %v3410, %v3436
      %v3448 = vadd.f32 %v3411, %v3438
      %v3449 = vadd.f32 %v3412, %v3440
      %v3450 = vadd.f32 %v3413, %v3442
      %s3451 = scalar_lea.vmem %s4, 26
      %v3452 = vld [vmem:[%s3451] sm:$0x1]
      %v3453 = vld [vmem:[%s3451 + $0x1] sm:$0x1]
      %v3456 = vperm.slane %v3452, 0
      %v3457 = vperm.slane %v3453, 0
      %3458 = vrot.lane.b32.xlu0 %v3456, 6
      %v3459 = vpop.permute.xlu0 %3458
      %3460 = vrot.lane.b32.xlu0 %v3457, 6
      %v3461 = vpop.permute.xlu0 %3460
      %v3464 = vmul.f32 %v3245, %v3459
      %v3465 = vmul.f32 %v3246, %v3459
      %v3466 = vmul.f32 %v3247, %v3461
      %v3467 = vmul.f32 %v3248, %v3461
      %3472 = vrot.lane.b32.xlu0 %v3464, 122
      %v3473 = vpop.permute.xlu0 %3472
      %3474 = vrot.lane.b32.xlu0 %v3465, 122
      %v3475 = vpop.permute.xlu0 %3474
      %3476 = vrot.lane.b32.xlu0 %v3466, 122
      %v3477 = vpop.permute.xlu0 %3476
      %3478 = vrot.lane.b32.xlu0 %v3467, 122
      %v3479 = vpop.permute.xlu0 %3478
      %v3484 = vadd.f32 %v3447, %v3473
      %v3485 = vadd.f32 %v3448, %v3475
      %v3486 = vadd.f32 %v3449, %v3477
      %v3487 = vadd.f32 %v3450, %v3479
      %v3488 = vld [vmem:[#allocation3 + $0x2] sm:$0xff]
      %v3489 = vld [vmem:[#allocation3 + $0xa] sm:$0xff]
      %v3490 = vld [vmem:[#allocation3 + $0x1a] sm:$0xff]
      %v3491 = vld [vmem:[#allocation3 + $0x22] sm:$0xff]
      %s3492 = scalar_lea.vmem %s4, 28
      %v3493 = vld [vmem:[%s3492] sm:$0x1]
      %v3494 = vld [vmem:[%s3492 + $0x1] sm:$0x1]
      %v3497 = vperm.slane %v3493, 0
      %v3498 = vperm.slane %v3494, 0
      %v3501 = vmul.f32 %v3488, %v3497
      %v3502 = vmul.f32 %v3489, %v3497
      %v3503 = vmul.f32 %v3490, %v3498
      %v3504 = vmul.f32 %v3491, %v3498
      %v3505 = vadd.f32 %v3484, %v3501
      %v3506 = vadd.f32 %v3485, %v3502
      %v3507 = vadd.f32 %v3486, %v3503
      %v3508 = vadd.f32 %v3487, %v3504
      %s3509 = scalar_lea.vmem %s4, 30
      %v3510 = vld [vmem:[%s3509] sm:$0x1]
      %v3511 = vld [vmem:[%s3509 + $0x1] sm:$0x1]
      %v3514 = vperm.slane %v3510, 0
      %v3515 = vperm.slane %v3511, 0
      %3516 = vrot.lane.b32.xlu0 %v3514, 1
      %v3517 = vpop.permute.xlu0 %3516
      %3518 = vrot.lane.b32.xlu0 %v3515, 1
      %v3519 = vpop.permute.xlu0 %3518
      %v3522 = vmul.f32 %v3488, %v3517
      %v3523 = vmul.f32 %v3489, %v3517
      %v3524 = vmul.f32 %v3490, %v3519
      %v3525 = vmul.f32 %v3491, %v3519
      %3530 = vrot.lane.b32.xlu0 %v3522, 127
      %v3531 = vpop.permute.xlu0 %3530
      %3532 = vrot.lane.b32.xlu0 %v3523, 127
      %v3533 = vpop.permute.xlu0 %3532
      %3534 = vrot.lane.b32.xlu0 %v3524, 127
      %v3535 = vpop.permute.xlu0 %3534
      %3536 = vrot.lane.b32.xlu0 %v3525, 127
      %v3537 = vpop.permute.xlu0 %3536
      %v3542 = vadd.f32 %v3505, %v3531
      %v3543 = vadd.f32 %v3506, %v3533
      %v3544 = vadd.f32 %v3507, %v3535
      %v3545 = vadd.f32 %v3508, %v3537
      %s3546 = scalar_lea.vmem %s4, 32
      %v3547 = vld [vmem:[%s3546] sm:$0x1]
      %v3548 = vld [vmem:[%s3546 + $0x1] sm:$0x1]
      %v3551 = vperm.slane %v3547, 0
      %v3552 = vperm.slane %v3548, 0
      %3553 = vrot.lane.b32.xlu0 %v3551, 2
      %v3554 = vpop.permute.xlu0 %3553
      %3555 = vrot.lane.b32.xlu0 %v3552, 2
      %v3556 = vpop.permute.xlu0 %3555
      %v3559 = vmul.f32 %v3488, %v3554
      %v3560 = vmul.f32 %v3489, %v3554
      %v3561 = vmul.f32 %v3490, %v3556
      %v3562 = vmul.f32 %v3491, %v3556
      %3567 = vrot.lane.b32.xlu0 %v3559, 126
      %v3568 = vpop.permute.xlu0 %3567
      %3569 = vrot.lane.b32.xlu0 %v3560, 126
      %v3570 = vpop.permute.xlu0 %3569
      %3571 = vrot.lane.b32.xlu0 %v3561, 126
      %v3572 = vpop.permute.xlu0 %3571
      %3573 = vrot.lane.b32.xlu0 %v3562, 126
      %v3574 = vpop.permute.xlu0 %3573
      %v3579 = vadd.f32 %v3542, %v3568
      %v3580 = vadd.f32 %v3543, %v3570
      %v3581 = vadd.f32 %v3544, %v3572
      %v3582 = vadd.f32 %v3545, %v3574
      %s3583 = scalar_lea.vmem %s4, 34
      %v3584 = vld [vmem:[%s3583] sm:$0x1]
      %v3585 = vld [vmem:[%s3583 + $0x1] sm:$0x1]
      %v3588 = vperm.slane %v3584, 0
      %v3589 = vperm.slane %v3585, 0
      %3590 = vrot.lane.b32.xlu0 %v3588, 3
      %v3591 = vpop.permute.xlu0 %3590
      %3592 = vrot.lane.b32.xlu0 %v3589, 3
      %v3593 = vpop.permute.xlu0 %3592
      %v3596 = vmul.f32 %v3488, %v3591
      %v3597 = vmul.f32 %v3489, %v3591
      %v3598 = vmul.f32 %v3490, %v3593
      %v3599 = vmul.f32 %v3491, %v3593
      %3604 = vrot.lane.b32.xlu0 %v3596, 125
      %v3605 = vpop.permute.xlu0 %3604
      %3606 = vrot.lane.b32.xlu0 %v3597, 125
      %v3607 = vpop.permute.xlu0 %3606
      %3608 = vrot.lane.b32.xlu0 %v3598, 125
      %v3609 = vpop.permute.xlu0 %3608
      %3610 = vrot.lane.b32.xlu0 %v3599, 125
      %v3611 = vpop.permute.xlu0 %3610
      %v3616 = vadd.f32 %v3579, %v3605
      %v3617 = vadd.f32 %v3580, %v3607
      %v3618 = vadd.f32 %v3581, %v3609
      %v3619 = vadd.f32 %v3582, %v3611
      %s3620 = scalar_lea.vmem %s4, 36
      %v3621 = vld [vmem:[%s3620] sm:$0x1]
      %v3622 = vld [vmem:[%s3620 + $0x1] sm:$0x1]
      %v3625 = vperm.slane %v3621, 0
      %v3626 = vperm.slane %v3622, 0
      %3627 = vrot.lane.b32.xlu0 %v3625, 4
      %v3628 = vpop.permute.xlu0 %3627
      %3629 = vrot.lane.b32.xlu0 %v3626, 4
      %v3630 = vpop.permute.xlu0 %3629
      %v3633 = vmul.f32 %v3488, %v3628
      %v3634 = vmul.f32 %v3489, %v3628
      %v3635 = vmul.f32 %v3490, %v3630
      %v3636 = vmul.f32 %v3491, %v3630
      %3641 = vrot.lane.b32.xlu0 %v3633, 124
      %v3642 = vpop.permute.xlu0 %3641
      %3643 = vrot.lane.b32.xlu0 %v3634, 124
      %v3644 = vpop.permute.xlu0 %3643
      %3645 = vrot.lane.b32.xlu0 %v3635, 124
      %v3646 = vpop.permute.xlu0 %3645
      %3647 = vrot.lane.b32.xlu0 %v3636, 124
      %v3648 = vpop.permute.xlu0 %3647
      %v3653 = vadd.f32 %v3616, %v3642
      %v3654 = vadd.f32 %v3617, %v3644
      %v3655 = vadd.f32 %v3618, %v3646
      %v3656 = vadd.f32 %v3619, %v3648
      %s3657 = scalar_lea.vmem %s4, 38
      %v3658 = vld [vmem:[%s3657] sm:$0x1]
      %v3659 = vld [vmem:[%s3657 + $0x1] sm:$0x1]
      %v3662 = vperm.slane %v3658, 0
      %v3663 = vperm.slane %v3659, 0
      %3664 = vrot.lane.b32.xlu0 %v3662, 5
      %v3665 = vpop.permute.xlu0 %3664
      %3666 = vrot.lane.b32.xlu0 %v3663, 5
      %v3667 = vpop.permute.xlu0 %3666
      %v3670 = vmul.f32 %v3488, %v3665
      %v3671 = vmul.f32 %v3489, %v3665
      %v3672 = vmul.f32 %v3490, %v3667
      %v3673 = vmul.f32 %v3491, %v3667
      %3678 = vrot.lane.b32.xlu0 %v3670, 123
      %v3679 = vpop.permute.xlu0 %3678
      %3680 = vrot.lane.b32.xlu0 %v3671, 123
      %v3681 = vpop.permute.xlu0 %3680
      %3682 = vrot.lane.b32.xlu0 %v3672, 123
      %v3683 = vpop.permute.xlu0 %3682
      %3684 = vrot.lane.b32.xlu0 %v3673, 123
      %v3685 = vpop.permute.xlu0 %3684
      %v3690 = vadd.f32 %v3653, %v3679
      %v3691 = vadd.f32 %v3654, %v3681
      %v3692 = vadd.f32 %v3655, %v3683
      %v3693 = vadd.f32 %v3656, %v3685
      %s3694 = scalar_lea.vmem %s4, 40
      %v3695 = vld [vmem:[%s3694] sm:$0x1]
      %v3696 = vld [vmem:[%s3694 + $0x1] sm:$0x1]
      %v3699 = vperm.slane %v3695, 0
      %v3700 = vperm.slane %v3696, 0
      %3701 = vrot.lane.b32.xlu0 %v3699, 6
      %v3702 = vpop.permute.xlu0 %3701
      %3703 = vrot.lane.b32.xlu0 %v3700, 6
      %v3704 = vpop.permute.xlu0 %3703
      %v3707 = vmul.f32 %v3488, %v3702
      %v3708 = vmul.f32 %v3489, %v3702
      %v3709 = vmul.f32 %v3490, %v3704
      %v3710 = vmul.f32 %v3491, %v3704
      %3715 = vrot.lane.b32.xlu0 %v3707, 122
      %v3716 = vpop.permute.xlu0 %3715
      %3717 = vrot.lane.b32.xlu0 %v3708, 122
      %v3718 = vpop.permute.xlu0 %3717
      %3719 = vrot.lane.b32.xlu0 %v3709, 122
      %v3720 = vpop.permute.xlu0 %3719
      %3721 = vrot.lane.b32.xlu0 %v3710, 122
      %v3722 = vpop.permute.xlu0 %3721
      %v3727 = vadd.f32 %v3690, %v3716
      %v3728 = vadd.f32 %v3691, %v3718
      %v3729 = vadd.f32 %v3692, %v3720
      %v3730 = vadd.f32 %v3693, %v3722
      %v3731 = vld [vmem:[#allocation3 + $0x3] sm:$0xff]
      %v3732 = vld [vmem:[#allocation3 + $0xb] sm:$0xff]
      %v3733 = vld [vmem:[#allocation3 + $0x1b] sm:$0xff]
      %v3734 = vld [vmem:[#allocation3 + $0x23] sm:$0xff]
      %s3735 = scalar_lea.vmem %s4, 42
      %v3736 = vld [vmem:[%s3735] sm:$0x1]
      %v3737 = vld [vmem:[%s3735 + $0x1] sm:$0x1]
      %v3740 = vperm.slane %v3736, 0
      %v3741 = vperm.slane %v3737, 0
      %v3744 = vmul.f32 %v3731, %v3740
      %v3745 = vmul.f32 %v3732, %v3740
      %v3746 = vmul.f32 %v3733, %v3741
      %v3747 = vmul.f32 %v3734, %v3741
      %v3748 = vadd.f32 %v3727, %v3744
      %v3749 = vadd.f32 %v3728, %v3745
      %v3750 = vadd.f32 %v3729, %v3746
      %v3751 = vadd.f32 %v3730, %v3747
      %s3752 = scalar_lea.vmem %s4, 44
      %v3753 = vld [vmem:[%s3752] sm:$0x1]
      %v3754 = vld [vmem:[%s3752 + $0x1] sm:$0x1]
      %v3757 = vperm.slane %v3753, 0
      %v3758 = vperm.slane %v3754, 0
      %3759 = vrot.lane.b32.xlu0 %v3757, 1
      %v3760 = vpop.permute.xlu0 %3759
      %3761 = vrot.lane.b32.xlu0 %v3758, 1
      %v3762 = vpop.permute.xlu0 %3761
      %v3765 = vmul.f32 %v3731, %v3760
      %v3766 = vmul.f32 %v3732, %v3760
      %v3767 = vmul.f32 %v3733, %v3762
      %v3768 = vmul.f32 %v3734, %v3762
      %3773 = vrot.lane.b32.xlu0 %v3765, 127
      %v3774 = vpop.permute.xlu0 %3773
      %3775 = vrot.lane.b32.xlu0 %v3766, 127
      %v3776 = vpop.permute.xlu0 %3775
      %3777 = vrot.lane.b32.xlu0 %v3767, 127
      %v3778 = vpop.permute.xlu0 %3777
      %3779 = vrot.lane.b32.xlu0 %v3768, 127
      %v3780 = vpop.permute.xlu0 %3779
      %v3785 = vadd.f32 %v3748, %v3774
      %v3786 = vadd.f32 %v3749, %v3776
      %v3787 = vadd.f32 %v3750, %v3778
      %v3788 = vadd.f32 %v3751, %v3780
      %s3789 = scalar_lea.vmem %s4, 46
      %v3790 = vld [vmem:[%s3789] sm:$0x1]
      %v3791 = vld [vmem:[%s3789 + $0x1] sm:$0x1]
      %v3794 = vperm.slane %v3790, 0
      %v3795 = vperm.slane %v3791, 0
      %3796 = vrot.lane.b32.xlu0 %v3794, 2
      %v3797 = vpop.permute.xlu0 %3796
      %3798 = vrot.lane.b32.xlu0 %v3795, 2
      %v3799 = vpop.permute.xlu0 %3798
      %v3802 = vmul.f32 %v3731, %v3797
      %v3803 = vmul.f32 %v3732, %v3797
      %v3804 = vmul.f32 %v3733, %v3799
      %v3805 = vmul.f32 %v3734, %v3799
      %3810 = vrot.lane.b32.xlu0 %v3802, 126
      %v3811 = vpop.permute.xlu0 %3810
      %3812 = vrot.lane.b32.xlu0 %v3803, 126
      %v3813 = vpop.permute.xlu0 %3812
      %3814 = vrot.lane.b32.xlu0 %v3804, 126
      %v3815 = vpop.permute.xlu0 %3814
      %3816 = vrot.lane.b32.xlu0 %v3805, 126
      %v3817 = vpop.permute.xlu0 %3816
      %v3822 = vadd.f32 %v3785, %v3811
      %v3823 = vadd.f32 %v3786, %v3813
      %v3824 = vadd.f32 %v3787, %v3815
      %v3825 = vadd.f32 %v3788, %v3817
      %s3826 = scalar_lea.vmem %s4, 48
      %v3827 = vld [vmem:[%s3826] sm:$0x1]
      %v3828 = vld [vmem:[%s3826 + $0x1] sm:$0x1]
      %v3831 = vperm.slane %v3827, 0
      %v3832 = vperm.slane %v3828, 0
      %3833 = vrot.lane.b32.xlu0 %v3831, 3
      %v3834 = vpop.permute.xlu0 %3833
      %3835 = vrot.lane.b32.xlu0 %v3832, 3
      %v3836 = vpop.permute.xlu0 %3835
      %v3839 = vmul.f32 %v3731, %v3834
      %v3840 = vmul.f32 %v3732, %v3834
      %v3841 = vmul.f32 %v3733, %v3836
      %v3842 = vmul.f32 %v3734, %v3836
      %3847 = vrot.lane.b32.xlu0 %v3839, 125
      %v3848 = vpop.permute.xlu0 %3847
      %3849 = vrot.lane.b32.xlu0 %v3840, 125
      %v3850 = vpop.permute.xlu0 %3849
      %3851 = vrot.lane.b32.xlu0 %v3841, 125
      %v3852 = vpop.permute.xlu0 %3851
      %3853 = vrot.lane.b32.xlu0 %v3842, 125
      %v3854 = vpop.permute.xlu0 %3853
      %v3859 = vadd.f32 %v3822, %v3848
      %v3860 = vadd.f32 %v3823, %v3850
      %v3861 = vadd.f32 %v3824, %v3852
      %v3862 = vadd.f32 %v3825, %v3854
      %s3863 = scalar_lea.vmem %s4, 50
      %v3864 = vld [vmem:[%s3863] sm:$0x1]
      %v3865 = vld [vmem:[%s3863 + $0x1] sm:$0x1]
      %v3868 = vperm.slane %v3864, 0
      %v3869 = vperm.slane %v3865, 0
      %3870 = vrot.lane.b32.xlu0 %v3868, 4
      %v3871 = vpop.permute.xlu0 %3870
      %3872 = vrot.lane.b32.xlu0 %v3869, 4
      %v3873 = vpop.permute.xlu0 %3872
      %v3876 = vmul.f32 %v3731, %v3871
      %v3877 = vmul.f32 %v3732, %v3871
      %v3878 = vmul.f32 %v3733, %v3873
      %v3879 = vmul.f32 %v3734, %v3873
      %3884 = vrot.lane.b32.xlu0 %v3876, 124
      %v3885 = vpop.permute.xlu0 %3884
      %3886 = vrot.lane.b32.xlu0 %v3877, 124
      %v3887 = vpop.permute.xlu0 %3886
      %3888 = vrot.lane.b32.xlu0 %v3878, 124
      %v3889 = vpop.permute.xlu0 %3888
      %3890 = vrot.lane.b32.xlu0 %v3879, 124
      %v3891 = vpop.permute.xlu0 %3890
      %v3896 = vadd.f32 %v3859, %v3885
      %v3897 = vadd.f32 %v3860, %v3887
      %v3898 = vadd.f32 %v3861, %v3889
      %v3899 = vadd.f32 %v3862, %v3891
      %s3900 = scalar_lea.vmem %s4, 52
      %v3901 = vld [vmem:[%s3900] sm:$0x1]
      %v3902 = vld [vmem:[%s3900 + $0x1] sm:$0x1]
      %v3905 = vperm.slane %v3901, 0
      %v3906 = vperm.slane %v3902, 0
      %3907 = vrot.lane.b32.xlu0 %v3905, 5
      %v3908 = vpop.permute.xlu0 %3907
      %3909 = vrot.lane.b32.xlu0 %v3906, 5
      %v3910 = vpop.permute.xlu0 %3909
      %v3913 = vmul.f32 %v3731, %v3908
      %v3914 = vmul.f32 %v3732, %v3908
      %v3915 = vmul.f32 %v3733, %v3910
      %v3916 = vmul.f32 %v3734, %v3910
      %3921 = vrot.lane.b32.xlu0 %v3913, 123
      %v3922 = vpop.permute.xlu0 %3921
      %3923 = vrot.lane.b32.xlu0 %v3914, 123
      %v3924 = vpop.permute.xlu0 %3923
      %3925 = vrot.lane.b32.xlu0 %v3915, 123
      %v3926 = vpop.permute.xlu0 %3925
      %3927 = vrot.lane.b32.xlu0 %v3916, 123
      %v3928 = vpop.permute.xlu0 %3927
      %v3933 = vadd.f32 %v3896, %v3922
      %v3934 = vadd.f32 %v3897, %v3924
      %v3935 = vadd.f32 %v3898, %v3926
      %v3936 = vadd.f32 %v3899, %v3928
      %s3937 = scalar_lea.vmem %s4, 54
      %v3938 = vld [vmem:[%s3937] sm:$0x1]
      %v3939 = vld [vmem:[%s3937 + $0x1] sm:$0x1]
      %v3942 = vperm.slane %v3938, 0
      %v3943 = vperm.slane %v3939, 0
      %3944 = vrot.lane.b32.xlu0 %v3942, 6
      %v3945 = vpop.permute.xlu0 %3944
      %3946 = vrot.lane.b32.xlu0 %v3943, 6
      %v3947 = vpop.permute.xlu0 %3946
      %v3950 = vmul.f32 %v3731, %v3945
      %v3951 = vmul.f32 %v3732, %v3945
      %v3952 = vmul.f32 %v3733, %v3947
      %v3953 = vmul.f32 %v3734, %v3947
      %3958 = vrot.lane.b32.xlu0 %v3950, 122
      %v3959 = vpop.permute.xlu0 %3958
      %3960 = vrot.lane.b32.xlu0 %v3951, 122
      %v3961 = vpop.permute.xlu0 %3960
      %3962 = vrot.lane.b32.xlu0 %v3952, 122
      %v3963 = vpop.permute.xlu0 %3962
      %3964 = vrot.lane.b32.xlu0 %v3953, 122
      %v3965 = vpop.permute.xlu0 %3964
      %v3970 = vadd.f32 %v3933, %v3959
      %v3971 = vadd.f32 %v3934, %v3961
      %v3972 = vadd.f32 %v3935, %v3963
      %v3973 = vadd.f32 %v3936, %v3965
      %v3974 = vld [vmem:[#allocation3 + $0x4] sm:$0xff]
      %v3975 = vld [vmem:[#allocation3 + $0xc] sm:$0xff]
      %v3976 = vld [vmem:[#allocation3 + $0x1c] sm:$0xff]
      %v3977 = vld [vmem:[#allocation3 + $0x24] sm:$0xff]
      %s3978 = scalar_lea.vmem %s4, 56
      %v3979 = vld [vmem:[%s3978] sm:$0x1]
      %v3980 = vld [vmem:[%s3978 + $0x1] sm:$0x1]
      %v3983 = vperm.slane %v3979, 0
      %v3984 = vperm.slane %v3980, 0
      %v3987 = vmul.f32 %v3974, %v3983
      %v3988 = vmul.f32 %v3975, %v3983
      %v3989 = vmul.f32 %v3976, %v3984
      %v3990 = vmul.f32 %v3977, %v3984
      %v3991 = vadd.f32 %v3970, %v3987
      %v3992 = vadd.f32 %v3971, %v3988
      %v3993 = vadd.f32 %v3972, %v3989
      %v3994 = vadd.f32 %v3973, %v3990
      %s3995 = scalar_lea.vmem %s4, 58
      %v3996 = vld [vmem:[%s3995] sm:$0x1]
      %v3997 = vld [vmem:[%s3995 + $0x1] sm:$0x1]
      %v4000 = vperm.slane %v3996, 0
      %v4001 = vperm.slane %v3997, 0
      %4002 = vrot.lane.b32.xlu0 %v4000, 1
      %v4003 = vpop.permute.xlu0 %4002
      %4004 = vrot.lane.b32.xlu0 %v4001, 1
      %v4005 = vpop.permute.xlu0 %4004
      %v4008 = vmul.f32 %v3974, %v4003
      %v4009 = vmul.f32 %v3975, %v4003
      %v4010 = vmul.f32 %v3976, %v4005
      %v4011 = vmul.f32 %v3977, %v4005
      %4016 = vrot.lane.b32.xlu0 %v4008, 127
      %v4017 = vpop.permute.xlu0 %4016
      %4018 = vrot.lane.b32.xlu0 %v4009, 127
      %v4019 = vpop.permute.xlu0 %4018
      %4020 = vrot.lane.b32.xlu0 %v4010, 127
      %v4021 = vpop.permute.xlu0 %4020
      %4022 = vrot.lane.b32.xlu0 %v4011, 127
      %v4023 = vpop.permute.xlu0 %4022
      %v4028 = vadd.f32 %v3991, %v4017
      %v4029 = vadd.f32 %v3992, %v4019
      %v4030 = vadd.f32 %v3993, %v4021
      %v4031 = vadd.f32 %v3994, %v4023
      %s4032 = scalar_lea.vmem %s4, 60
      %v4033 = vld [vmem:[%s4032] sm:$0x1]
      %v4034 = vld [vmem:[%s4032 + $0x1] sm:$0x1]
      %v4037 = vperm.slane %v4033, 0
      %v4038 = vperm.slane %v4034, 0
      %4039 = vrot.lane.b32.xlu0 %v4037, 2
      %v4040 = vpop.permute.xlu0 %4039
      %4041 = vrot.lane.b32.xlu0 %v4038, 2
      %v4042 = vpop.permute.xlu0 %4041
      %v4045 = vmul.f32 %v3974, %v4040
      %v4046 = vmul.f32 %v3975, %v4040
      %v4047 = vmul.f32 %v3976, %v4042
      %v4048 = vmul.f32 %v3977, %v4042
      %4053 = vrot.lane.b32.xlu0 %v4045, 126
      %v4054 = vpop.permute.xlu0 %4053
      %4055 = vrot.lane.b32.xlu0 %v4046, 126
      %v4056 = vpop.permute.xlu0 %4055
      %4057 = vrot.lane.b32.xlu0 %v4047, 126
      %v4058 = vpop.permute.xlu0 %4057
      %4059 = vrot.lane.b32.xlu0 %v4048, 126
      %v4060 = vpop.permute.xlu0 %4059
      %v4065 = vadd.f32 %v4028, %v4054
      %v4066 = vadd.f32 %v4029, %v4056
      %v4067 = vadd.f32 %v4030, %v4058
      %v4068 = vadd.f32 %v4031, %v4060
      %s4069 = scalar_lea.vmem %s4, 62
      %v4070 = vld [vmem:[%s4069] sm:$0x1]
      %v4071 = vld [vmem:[%s4069 + $0x1] sm:$0x1]
      %v4074 = vperm.slane %v4070, 0
      %v4075 = vperm.slane %v4071, 0
      %4076 = vrot.lane.b32.xlu0 %v4074, 3
      %v4077 = vpop.permute.xlu0 %4076
      %4078 = vrot.lane.b32.xlu0 %v4075, 3
      %v4079 = vpop.permute.xlu0 %4078
      %v4082 = vmul.f32 %v3974, %v4077
      %v4083 = vmul.f32 %v3975, %v4077
      %v4084 = vmul.f32 %v3976, %v4079
      %v4085 = vmul.f32 %v3977, %v4079
      %4090 = vrot.lane.b32.xlu0 %v4082, 125
      %v4091 = vpop.permute.xlu0 %4090
      %4092 = vrot.lane.b32.xlu0 %v4083, 125
      %v4093 = vpop.permute.xlu0 %4092
      %4094 = vrot.lane.b32.xlu0 %v4084, 125
      %v4095 = vpop.permute.xlu0 %4094
      %4096 = vrot.lane.b32.xlu0 %v4085, 125
      %v4097 = vpop.permute.xlu0 %4096
      %v4102 = vadd.f32 %v4065, %v4091
      %v4103 = vadd.f32 %v4066, %v4093
      %v4104 = vadd.f32 %v4067, %v4095
      %v4105 = vadd.f32 %v4068, %v4097
      %s4106 = scalar_lea.vmem %s4, 64
      %v4107 = vld [vmem:[%s4106] sm:$0x1]
      %v4108 = vld [vmem:[%s4106 + $0x1] sm:$0x1]
      %v4111 = vperm.slane %v4107, 0
      %v4112 = vperm.slane %v4108, 0
      %4113 = vrot.lane.b32.xlu0 %v4111, 4
      %v4114 = vpop.permute.xlu0 %4113
      %4115 = vrot.lane.b32.xlu0 %v4112, 4
      %v4116 = vpop.permute.xlu0 %4115
      %v4119 = vmul.f32 %v3974, %v4114
      %v4120 = vmul.f32 %v3975, %v4114
      %v4121 = vmul.f32 %v3976, %v4116
      %v4122 = vmul.f32 %v3977, %v4116
      %4127 = vrot.lane.b32.xlu0 %v4119, 124
      %v4128 = vpop.permute.xlu0 %4127
      %4129 = vrot.lane.b32.xlu0 %v4120, 124
      %v4130 = vpop.permute.xlu0 %4129
      %4131 = vrot.lane.b32.xlu0 %v4121, 124
      %v4132 = vpop.permute.xlu0 %4131
      %4133 = vrot.lane.b32.xlu0 %v4122, 124
      %v4134 = vpop.permute.xlu0 %4133
      %v4139 = vadd.f32 %v4102, %v4128
      %v4140 = vadd.f32 %v4103, %v4130
      %v4141 = vadd.f32 %v4104, %v4132
      %v4142 = vadd.f32 %v4105, %v4134
      %s4143 = scalar_lea.vmem %s4, 66
      %v4144 = vld [vmem:[%s4143] sm:$0x1]
      %v4145 = vld [vmem:[%s4143 + $0x1] sm:$0x1]
      %v4148 = vperm.slane %v4144, 0
      %v4149 = vperm.slane %v4145, 0
      %4150 = vrot.lane.b32.xlu0 %v4148, 5
      %v4151 = vpop.permute.xlu0 %4150
      %4152 = vrot.lane.b32.xlu0 %v4149, 5
      %v4153 = vpop.permute.xlu0 %4152
      %v4156 = vmul.f32 %v3974, %v4151
      %v4157 = vmul.f32 %v3975, %v4151
      %v4158 = vmul.f32 %v3976, %v4153
      %v4159 = vmul.f32 %v3977, %v4153
      %4164 = vrot.lane.b32.xlu0 %v4156, 123
      %v4165 = vpop.permute.xlu0 %4164
      %4166 = vrot.lane.b32.xlu0 %v4157, 123
      %v4167 = vpop.permute.xlu0 %4166
      %4168 = vrot.lane.b32.xlu0 %v4158, 123
      %v4169 = vpop.permute.xlu0 %4168
      %4170 = vrot.lane.b32.xlu0 %v4159, 123
      %v4171 = vpop.permute.xlu0 %4170
      %v4176 = vadd.f32 %v4139, %v4165
      %v4177 = vadd.f32 %v4140, %v4167
      %v4178 = vadd.f32 %v4141, %v4169
      %v4179 = vadd.f32 %v4142, %v4171
      %s4180 = scalar_lea.vmem %s4, 68
      %v4181 = vld [vmem:[%s4180] sm:$0x1]
      %v4182 = vld [vmem:[%s4180 + $0x1] sm:$0x1]
      %v4185 = vperm.slane %v4181, 0
      %v4186 = vperm.slane %v4182, 0
      %4187 = vrot.lane.b32.xlu0 %v4185, 6
      %v4188 = vpop.permute.xlu0 %4187
      %4189 = vrot.lane.b32.xlu0 %v4186, 6
      %v4190 = vpop.permute.xlu0 %4189
      %v4193 = vmul.f32 %v3974, %v4188
      %v4194 = vmul.f32 %v3975, %v4188
      %v4195 = vmul.f32 %v3976, %v4190
      %v4196 = vmul.f32 %v3977, %v4190
      %4201 = vrot.lane.b32.xlu0 %v4193, 122
      %v4202 = vpop.permute.xlu0 %4201
      %4203 = vrot.lane.b32.xlu0 %v4194, 122
      %v4204 = vpop.permute.xlu0 %4203
      %4205 = vrot.lane.b32.xlu0 %v4195, 122
      %v4206 = vpop.permute.xlu0 %4205
      %4207 = vrot.lane.b32.xlu0 %v4196, 122
      %v4208 = vpop.permute.xlu0 %4207
      %v4213 = vadd.f32 %v4176, %v4202
      %v4214 = vadd.f32 %v4177, %v4204
      %v4215 = vadd.f32 %v4178, %v4206
      %v4216 = vadd.f32 %v4179, %v4208
      %v4217 = vld [vmem:[#allocation3 + $0x5] sm:$0xff]
      %v4218 = vld [vmem:[#allocation3 + $0xd] sm:$0xff]
      %v4219 = vld [vmem:[#allocation3 + $0x1d] sm:$0xff]
      %v4220 = vld [vmem:[#allocation3 + $0x25] sm:$0xff]
      %s4221 = scalar_lea.vmem %s4, 70
      %v4222 = vld [vmem:[%s4221] sm:$0x1]
      %v4223 = vld [vmem:[%s4221 + $0x1] sm:$0x1]
      %v4226 = vperm.slane %v4222, 0
      %v4227 = vperm.slane %v4223, 0
      %v4230 = vmul.f32 %v4217, %v4226
      %v4231 = vmul.f32 %v4218, %v4226
      %v4232 = vmul.f32 %v4219, %v4227
      %v4233 = vmul.f32 %v4220, %v4227
      %v4234 = vadd.f32 %v4213, %v4230
      %v4235 = vadd.f32 %v4214, %v4231
      %v4236 = vadd.f32 %v4215, %v4232
      %v4237 = vadd.f32 %v4216, %v4233
      %s4238 = scalar_lea.vmem %s4, 72
      %v4239 = vld [vmem:[%s4238] sm:$0x1]
      %v4240 = vld [vmem:[%s4238 + $0x1] sm:$0x1]
      %v4243 = vperm.slane %v4239, 0
      %v4244 = vperm.slane %v4240, 0
      %4245 = vrot.lane.b32.xlu0 %v4243, 1
      %v4246 = vpop.permute.xlu0 %4245
      %4247 = vrot.lane.b32.xlu0 %v4244, 1
      %v4248 = vpop.permute.xlu0 %4247
      %v4251 = vmul.f32 %v4217, %v4246
      %v4252 = vmul.f32 %v4218, %v4246
      %v4253 = vmul.f32 %v4219, %v4248
      %v4254 = vmul.f32 %v4220, %v4248
      %4259 = vrot.lane.b32.xlu0 %v4251, 127
      %v4260 = vpop.permute.xlu0 %4259
      %4261 = vrot.lane.b32.xlu0 %v4252, 127
      %v4262 = vpop.permute.xlu0 %4261
      %4263 = vrot.lane.b32.xlu0 %v4253, 127
      %v4264 = vpop.permute.xlu0 %4263
      %4265 = vrot.lane.b32.xlu0 %v4254, 127
      %v4266 = vpop.permute.xlu0 %4265
      %v4271 = vadd.f32 %v4234, %v4260
      %v4272 = vadd.f32 %v4235, %v4262
      %v4273 = vadd.f32 %v4236, %v4264
      %v4274 = vadd.f32 %v4237, %v4266
      %s4275 = scalar_lea.vmem %s4, 74
      %v4276 = vld [vmem:[%s4275] sm:$0x1]
      %v4277 = vld [vmem:[%s4275 + $0x1] sm:$0x1]
      %v4280 = vperm.slane %v4276, 0
      %v4281 = vperm.slane %v4277, 0
      %4282 = vrot.lane.b32.xlu0 %v4280, 2
      %v4283 = vpop.permute.xlu0 %4282
      %4284 = vrot.lane.b32.xlu0 %v4281, 2
      %v4285 = vpop.permute.xlu0 %4284
      %v4288 = vmul.f32 %v4217, %v4283
      %v4289 = vmul.f32 %v4218, %v4283
      %v4290 = vmul.f32 %v4219, %v4285
      %v4291 = vmul.f32 %v4220, %v4285
      %4296 = vrot.lane.b32.xlu0 %v4288, 126
      %v4297 = vpop.permute.xlu0 %4296
      %4298 = vrot.lane.b32.xlu0 %v4289, 126
      %v4299 = vpop.permute.xlu0 %4298
      %4300 = vrot.lane.b32.xlu0 %v4290, 126
      %v4301 = vpop.permute.xlu0 %4300
      %4302 = vrot.lane.b32.xlu0 %v4291, 126
      %v4303 = vpop.permute.xlu0 %4302
      %v4308 = vadd.f32 %v4271, %v4297
      %v4309 = vadd.f32 %v4272, %v4299
      %v4310 = vadd.f32 %v4273, %v4301
      %v4311 = vadd.f32 %v4274, %v4303
      %s4312 = scalar_lea.vmem %s4, 76
      %v4313 = vld [vmem:[%s4312] sm:$0x1]
      %v4314 = vld [vmem:[%s4312 + $0x1] sm:$0x1]
      %v4317 = vperm.slane %v4313, 0
      %v4318 = vperm.slane %v4314, 0
      %4319 = vrot.lane.b32.xlu0 %v4317, 3
      %v4320 = vpop.permute.xlu0 %4319
      %4321 = vrot.lane.b32.xlu0 %v4318, 3
      %v4322 = vpop.permute.xlu0 %4321
      %v4325 = vmul.f32 %v4217, %v4320
      %v4326 = vmul.f32 %v4218, %v4320
      %v4327 = vmul.f32 %v4219, %v4322
      %v4328 = vmul.f32 %v4220, %v4322
      %4333 = vrot.lane.b32.xlu0 %v4325, 125
      %v4334 = vpop.permute.xlu0 %4333
      %4335 = vrot.lane.b32.xlu0 %v4326, 125
      %v4336 = vpop.permute.xlu0 %4335
      %4337 = vrot.lane.b32.xlu0 %v4327, 125
      %v4338 = vpop.permute.xlu0 %4337
      %4339 = vrot.lane.b32.xlu0 %v4328, 125
      %v4340 = vpop.permute.xlu0 %4339
      %v4345 = vadd.f32 %v4308, %v4334
      %v4346 = vadd.f32 %v4309, %v4336
      %v4347 = vadd.f32 %v4310, %v4338
      %v4348 = vadd.f32 %v4311, %v4340
      %s4349 = scalar_lea.vmem %s4, 78
      %v4350 = vld [vmem:[%s4349] sm:$0x1]
      %v4351 = vld [vmem:[%s4349 + $0x1] sm:$0x1]
      %v4354 = vperm.slane %v4350, 0
      %v4355 = vperm.slane %v4351, 0
      %4356 = vrot.lane.b32.xlu0 %v4354, 4
      %v4357 = vpop.permute.xlu0 %4356
      %4358 = vrot.lane.b32.xlu0 %v4355, 4
      %v4359 = vpop.permute.xlu0 %4358
      %v4362 = vmul.f32 %v4217, %v4357
      %v4363 = vmul.f32 %v4218, %v4357
      %v4364 = vmul.f32 %v4219, %v4359
      %v4365 = vmul.f32 %v4220, %v4359
      %4370 = vrot.lane.b32.xlu0 %v4362, 124
      %v4371 = vpop.permute.xlu0 %4370
      %4372 = vrot.lane.b32.xlu0 %v4363, 124
      %v4373 = vpop.permute.xlu0 %4372
      %4374 = vrot.lane.b32.xlu0 %v4364, 124
      %v4375 = vpop.permute.xlu0 %4374
      %4376 = vrot.lane.b32.xlu0 %v4365, 124
      %v4377 = vpop.permute.xlu0 %4376
      %v4382 = vadd.f32 %v4345, %v4371
      %v4383 = vadd.f32 %v4346, %v4373
      %v4384 = vadd.f32 %v4347, %v4375
      %v4385 = vadd.f32 %v4348, %v4377
      %s4386 = scalar_lea.vmem %s4, 80
      %v4387 = vld [vmem:[%s4386] sm:$0x1]
      %v4388 = vld [vmem:[%s4386 + $0x1] sm:$0x1]
      %v4391 = vperm.slane %v4387, 0
      %v4392 = vperm.slane %v4388, 0
      %4393 = vrot.lane.b32.xlu0 %v4391, 5
      %v4394 = vpop.permute.xlu0 %4393
      %4395 = vrot.lane.b32.xlu0 %v4392, 5
      %v4396 = vpop.permute.xlu0 %4395
      %v4399 = vmul.f32 %v4217, %v4394
      %v4400 = vmul.f32 %v4218, %v4394
      %v4401 = vmul.f32 %v4219, %v4396
      %v4402 = vmul.f32 %v4220, %v4396
      %4407 = vrot.lane.b32.xlu0 %v4399, 123
      %v4408 = vpop.permute.xlu0 %4407
      %4409 = vrot.lane.b32.xlu0 %v4400, 123
      %v4410 = vpop.permute.xlu0 %4409
      %4411 = vrot.lane.b32.xlu0 %v4401, 123
      %v4412 = vpop.permute.xlu0 %4411
      %4413 = vrot.lane.b32.xlu0 %v4402, 123
      %v4414 = vpop.permute.xlu0 %4413
      %v4419 = vadd.f32 %v4382, %v4408
      %v4420 = vadd.f32 %v4383, %v4410
      %v4421 = vadd.f32 %v4384, %v4412
      %v4422 = vadd.f32 %v4385, %v4414
      %s4423 = scalar_lea.vmem %s4, 82
      %v4424 = vld [vmem:[%s4423] sm:$0x1]
      %v4425 = vld [vmem:[%s4423 + $0x1] sm:$0x1]
      %v4428 = vperm.slane %v4424, 0
      %v4429 = vperm.slane %v4425, 0
      %4430 = vrot.lane.b32.xlu0 %v4428, 6
      %v4431 = vpop.permute.xlu0 %4430
      %4432 = vrot.lane.b32.xlu0 %v4429, 6
      %v4433 = vpop.permute.xlu0 %4432
      %v4436 = vmul.f32 %v4217, %v4431
      %v4437 = vmul.f32 %v4218, %v4431
      %v4438 = vmul.f32 %v4219, %v4433
      %v4439 = vmul.f32 %v4220, %v4433
      %4444 = vrot.lane.b32.xlu0 %v4436, 122
      %v4445 = vpop.permute.xlu0 %4444
      %4446 = vrot.lane.b32.xlu0 %v4437, 122
      %v4447 = vpop.permute.xlu0 %4446
      %4448 = vrot.lane.b32.xlu0 %v4438, 122
      %v4449 = vpop.permute.xlu0 %4448
      %4450 = vrot.lane.b32.xlu0 %v4439, 122
      %v4451 = vpop.permute.xlu0 %4450
      %v4456 = vadd.f32 %v4419, %v4445
      %v4457 = vadd.f32 %v4420, %v4447
      %v4458 = vadd.f32 %v4421, %v4449
      %v4459 = vadd.f32 %v4422, %v4451
      %v4460 = vld [vmem:[#allocation3 + $0x6] sm:$0xff]
      %v4461 = vld [vmem:[#allocation3 + $0xe] sm:$0xff]
      %v4462 = vld [vmem:[#allocation3 + $0x1e] sm:$0xff]
      %v4463 = vld [vmem:[#allocation3 + $0x26] sm:$0xff]
      %s4464 = scalar_lea.vmem %s4, 84
      %v4465 = vld [vmem:[%s4464] sm:$0x1]
      %v4466 = vld [vmem:[%s4464 + $0x1] sm:$0x1]
      %v4469 = vperm.slane %v4465, 0
      %v4470 = vperm.slane %v4466, 0
      %v4473 = vmul.f32 %v4460, %v4469
      %v4474 = vmul.f32 %v4461, %v4469
      %v4475 = vmul.f32 %v4462, %v4470
      %v4476 = vmul.f32 %v4463, %v4470
      %v4477 = vadd.f32 %v4456, %v4473
      %v4478 = vadd.f32 %v4457, %v4474
      %v4479 = vadd.f32 %v4458, %v4475
      %v4480 = vadd.f32 %v4459, %v4476
      %s4481 = scalar_lea.vmem %s4, 86
      %v4482 = vld [vmem:[%s4481] sm:$0x1]
      %v4483 = vld [vmem:[%s4481 + $0x1] sm:$0x1]
      %v4486 = vperm.slane %v4482, 0
      %v4487 = vperm.slane %v4483, 0
      %4488 = vrot.lane.b32.xlu0 %v4486, 1
      %v4489 = vpop.permute.xlu0 %4488
      %4490 = vrot.lane.b32.xlu0 %v4487, 1
      %v4491 = vpop.permute.xlu0 %4490
      %v4494 = vmul.f32 %v4460, %v4489
      %v4495 = vmul.f32 %v4461, %v4489
      %v4496 = vmul.f32 %v4462, %v4491
      %v4497 = vmul.f32 %v4463, %v4491
      %4502 = vrot.lane.b32.xlu0 %v4494, 127
      %v4503 = vpop.permute.xlu0 %4502
      %4504 = vrot.lane.b32.xlu0 %v4495, 127
      %v4505 = vpop.permute.xlu0 %4504
      %4506 = vrot.lane.b32.xlu0 %v4496, 127
      %v4507 = vpop.permute.xlu0 %4506
      %4508 = vrot.lane.b32.xlu0 %v4497, 127
      %v4509 = vpop.permute.xlu0 %4508
      %v4514 = vadd.f32 %v4477, %v4503
      %v4515 = vadd.f32 %v4478, %v4505
      %v4516 = vadd.f32 %v4479, %v4507
      %v4517 = vadd.f32 %v4480, %v4509
      %s4518 = scalar_lea.vmem %s4, 88
      %v4519 = vld [vmem:[%s4518] sm:$0x1]
      %v4520 = vld [vmem:[%s4518 + $0x1] sm:$0x1]
      %v4523 = vperm.slane %v4519, 0
      %v4524 = vperm.slane %v4520, 0
      %4525 = vrot.lane.b32.xlu0 %v4523, 2
      %v4526 = vpop.permute.xlu0 %4525
      %4527 = vrot.lane.b32.xlu0 %v4524, 2
      %v4528 = vpop.permute.xlu0 %4527
      %v4531 = vmul.f32 %v4460, %v4526
      %v4532 = vmul.f32 %v4461, %v4526
      %v4533 = vmul.f32 %v4462, %v4528
      %v4534 = vmul.f32 %v4463, %v4528
      %4539 = vrot.lane.b32.xlu0 %v4531, 126
      %v4540 = vpop.permute.xlu0 %4539
      %4541 = vrot.lane.b32.xlu0 %v4532, 126
      %v4542 = vpop.permute.xlu0 %4541
      %4543 = vrot.lane.b32.xlu0 %v4533, 126
      %v4544 = vpop.permute.xlu0 %4543
      %4545 = vrot.lane.b32.xlu0 %v4534, 126
      %v4546 = vpop.permute.xlu0 %4545
      %v4551 = vadd.f32 %v4514, %v4540
      %v4552 = vadd.f32 %v4515, %v4542
      %v4553 = vadd.f32 %v4516, %v4544
      %v4554 = vadd.f32 %v4517, %v4546
      %s4555 = scalar_lea.vmem %s4, 90
      %v4556 = vld [vmem:[%s4555] sm:$0x1]
      %v4557 = vld [vmem:[%s4555 + $0x1] sm:$0x1]
      %v4560 = vperm.slane %v4556, 0
      %v4561 = vperm.slane %v4557, 0
      %4562 = vrot.lane.b32.xlu0 %v4560, 3
      %v4563 = vpop.permute.xlu0 %4562
      %4564 = vrot.lane.b32.xlu0 %v4561, 3
      %v4565 = vpop.permute.xlu0 %4564
      %v4568 = vmul.f32 %v4460, %v4563
      %v4569 = vmul.f32 %v4461, %v4563
      %v4570 = vmul.f32 %v4462, %v4565
      %v4571 = vmul.f32 %v4463, %v4565
      %4576 = vrot.lane.b32.xlu0 %v4568, 125
      %v4577 = vpop.permute.xlu0 %4576
      %4578 = vrot.lane.b32.xlu0 %v4569, 125
      %v4579 = vpop.permute.xlu0 %4578
      %4580 = vrot.lane.b32.xlu0 %v4570, 125
      %v4581 = vpop.permute.xlu0 %4580
      %4582 = vrot.lane.b32.xlu0 %v4571, 125
      %v4583 = vpop.permute.xlu0 %4582
      %v4588 = vadd.f32 %v4551, %v4577
      %v4589 = vadd.f32 %v4552, %v4579
      %v4590 = vadd.f32 %v4553, %v4581
      %v4591 = vadd.f32 %v4554, %v4583
      %s4592 = scalar_lea.vmem %s4, 92
      %v4593 = vld [vmem:[%s4592] sm:$0x1]
      %v4594 = vld [vmem:[%s4592 + $0x1] sm:$0x1]
      %v4597 = vperm.slane %v4593, 0
      %v4598 = vperm.slane %v4594, 0
      %4599 = vrot.lane.b32.xlu0 %v4597, 4
      %v4600 = vpop.permute.xlu0 %4599
      %4601 = vrot.lane.b32.xlu0 %v4598, 4
      %v4602 = vpop.permute.xlu0 %4601
      %v4605 = vmul.f32 %v4460, %v4600
      %v4606 = vmul.f32 %v4461, %v4600
      %v4607 = vmul.f32 %v4462, %v4602
      %v4608 = vmul.f32 %v4463, %v4602
      %4613 = vrot.lane.b32.xlu0 %v4605, 124
      %v4614 = vpop.permute.xlu0 %4613
      %4615 = vrot.lane.b32.xlu0 %v4606, 124
      %v4616 = vpop.permute.xlu0 %4615
      %4617 = vrot.lane.b32.xlu0 %v4607, 124
      %v4618 = vpop.permute.xlu0 %4617
      %4619 = vrot.lane.b32.xlu0 %v4608, 124
      %v4620 = vpop.permute.xlu0 %4619
      %v4625 = vadd.f32 %v4588, %v4614
      %v4626 = vadd.f32 %v4589, %v4616
      %v4627 = vadd.f32 %v4590, %v4618
      %v4628 = vadd.f32 %v4591, %v4620
      %s4629 = scalar_lea.vmem %s4, 94
      %v4630 = vld [vmem:[%s4629] sm:$0x1]
      %v4631 = vld [vmem:[%s4629 + $0x1] sm:$0x1]
      %v4634 = vperm.slane %v4630, 0
      %v4635 = vperm.slane %v4631, 0
      %4636 = vrot.lane.b32.xlu0 %v4634, 5
      %v4637 = vpop.permute.xlu0 %4636
      %4638 = vrot.lane.b32.xlu0 %v4635, 5
      %v4639 = vpop.permute.xlu0 %4638
      %v4642 = vmul.f32 %v4460, %v4637
      %v4643 = vmul.f32 %v4461, %v4637
      %v4644 = vmul.f32 %v4462, %v4639
      %v4645 = vmul.f32 %v4463, %v4639
      %4650 = vrot.lane.b32.xlu0 %v4642, 123
      %v4651 = vpop.permute.xlu0 %4650
      %4652 = vrot.lane.b32.xlu0 %v4643, 123
      %v4653 = vpop.permute.xlu0 %4652
      %4654 = vrot.lane.b32.xlu0 %v4644, 123
      %v4655 = vpop.permute.xlu0 %4654
      %4656 = vrot.lane.b32.xlu0 %v4645, 123
      %v4657 = vpop.permute.xlu0 %4656
      %v4662 = vadd.f32 %v4625, %v4651
      %v4663 = vadd.f32 %v4626, %v4653
      %v4664 = vadd.f32 %v4627, %v4655
      %v4665 = vadd.f32 %v4628, %v4657
      %s4666 = scalar_lea.vmem %s4, 96
      %v4667 = vld [vmem:[%s4666] sm:$0x1]
      %v4668 = vld [vmem:[%s4666 + $0x1] sm:$0x1]
      %v4671 = vperm.slane %v4667, 0
      %v4672 = vperm.slane %v4668, 0
      %4673 = vrot.lane.b32.xlu0 %v4671, 6
      %v4674 = vpop.permute.xlu0 %4673
      %4675 = vrot.lane.b32.xlu0 %v4672, 6
      %v4676 = vpop.permute.xlu0 %4675
      %v4679 = vmul.f32 %v4460, %v4674
      %v4680 = vmul.f32 %v4461, %v4674
      %v4681 = vmul.f32 %v4462, %v4676
      %v4682 = vmul.f32 %v4463, %v4676
      %4687 = vrot.lane.b32.xlu0 %v4679, 122
      %v4688 = vpop.permute.xlu0 %4687
      %4689 = vrot.lane.b32.xlu0 %v4680, 122
      %v4690 = vpop.permute.xlu0 %4689
      %4691 = vrot.lane.b32.xlu0 %v4681, 122
      %v4692 = vpop.permute.xlu0 %4691
      %4693 = vrot.lane.b32.xlu0 %v4682, 122
      %v4694 = vpop.permute.xlu0 %4693
      %v4699 = vadd.f32 %v4662, %v4688
      %v4700 = vadd.f32 %v4663, %v4690
      %v4701 = vadd.f32 %v4664, %v4692
      %v4702 = vadd.f32 %v4665, %v4694
      %v4703 = vadd.f32 %v4699, %v4701
      %v4704 = vadd.f32 %v4700, %v4702
      %v4705 = vld [vmem:[%s5] sm:$0x1]
      %v4707 = vperm.slane %v4705, 0
      %v4709 = vadd.f32 %v4703, %v4707
      %v4710 = vadd.f32 %v4704, %v4707
      %v4711 = vsub.f32 0.0, %v4709
      %v4712 = vsub.f32 0.0, %v4710
      %v4713 = vmul.f32 %v4711, 1.442695
      %v4714 = vpow.pop %v4713
      %v4715 = vmul.f32 %v4712, 1.442695
      %v4716 = vpow.pop %v4715
      %v4717 = vadd.f32 %v4714, 1.0
      %v4718 = vadd.f32 %v4716, 1.0
      %v4719 = vrcp.pop %v4717
      %v4720 = vrcp.pop %v4718
      %v4722 = vrot.slane %v4719, 1
      %v4723 = vrot.slane %v4719, 2
      %v4724 = vrot.slane %v4719, 3
      %v4725 = vperm.slane %v4719, 0
      %v4726 = vperm.slane %v4722, 0
      %v4727 = vperm.slane %v4723, 0
      %v4728 = vperm.slane %v4724, 0
      %4729 = vrot.lane.b32.xlu0 %v4725, 96
      %v4730 = vpop.permute.xlu0 %4729
      %4731 = vrot.lane.b32.xlu0 %v4726, 96
      %v4732 = vpop.permute.xlu0 %4731
      %4733 = vrot.lane.b32.xlu0 %v4727, 96
      %v4734 = vpop.permute.xlu0 %4733
      %4735 = vrot.lane.b32.xlu0 %v4728, 96
      %v4736 = vpop.permute.xlu0 %4735
      %v4741 = vadd.f32 %v4719, %v4730
      %v4742 = vadd.f32 %v4720, %v4730
      %v4743 = vadd.f32 %v4719, %v4732
      %v4744 = vadd.f32 %v4720, %v4732
      %v4745 = vadd.f32 %v4719, %v4734
      %v4746 = vadd.f32 %v4720, %v4734
      %v4747 = vadd.f32 %v4719, %v4736
      %v4748 = vadd.f32 %v4720, %v4736
      %v4749 = vperm.slane %v4719, 0
      %v4750 = vlaneseq
      %v4751 = vshrl.u32 %v4750, 7
      %v4752 = vadd.s32 %v4751, 64
      %4753 = vset.pattern.permute.xlu0 %v4752
      %4754 = vperm.xlu0 %4753, %v4749
      %v4755 = vpop.permute.xlu0 %4754
      %v4756 = vlaneseq
      %v4757 = vshrl.u32 %v4756, 7
      %v4758 = vadd.s32 %v4757, 72
      %4759 = vset.pattern.permute.xlu0 %v4758
      %4760 = vperm.xlu0 %4759, %v4749
      %v4761 = vpop.permute.xlu0 %4760
      %v4762 = vperm.slane %v4719, 1
      %v4763 = vlaneseq
      %v4764 = vshrl.u32 %v4763, 7
      %v4765 = vadd.s32 %v4764, 64
      %4766 = vset.pattern.permute.xlu0 %v4765
      %4767 = vperm.xlu0 %4766, %v4762
      %v4768 = vpop.permute.xlu0 %4767
      %v4769 = vlaneseq
      %v4770 = vshrl.u32 %v4769, 7
      %v4771 = vadd.s32 %v4770, 72
      %4772 = vset.pattern.permute.xlu0 %v4771
      %4773 = vperm.xlu0 %4772, %v4762
      %v4774 = vpop.permute.xlu0 %4773
      %v4775 = vperm.slane %v4719, 2
      %v4776 = vlaneseq
      %v4777 = vshrl.u32 %v4776, 7
      %v4778 = vadd.s32 %v4777, 64
      %4779 = vset.pattern.permute.xlu0 %v4778
      %4780 = vperm.xlu0 %4779, %v4775
      %v4781 = vpop.permute.xlu0 %4780
      %v4782 = vlaneseq
      %v4783 = vshrl.u32 %v4782, 7
      %v4784 = vadd.s32 %v4783, 72
      %4785 = vset.pattern.permute.xlu0 %v4784
      %4786 = vperm.xlu0 %4785, %v4775
      %v4787 = vpop.permute.xlu0 %4786
      %v4788 = vperm.slane %v4719, 3
      %v4789 = vlaneseq
      %v4790 = vshrl.u32 %v4789, 7
      %v4791 = vadd.s32 %v4790, 64
      %4792 = vset.pattern.permute.xlu0 %v4791
      %4793 = vperm.xlu0 %4792, %v4788
      %v4794 = vpop.permute.xlu0 %4793
      %v4795 = vlaneseq
      %v4796 = vshrl.u32 %v4795, 7
      %v4797 = vadd.s32 %v4796, 72
      %4798 = vset.pattern.permute.xlu0 %v4797
      %4799 = vperm.xlu0 %4798, %v4788
      %v4800 = vpop.permute.xlu0 %4799
      %v4801 = vadd.f32 %v4741, %v4755
      %v4802 = vadd.f32 %v4742, %v4761
      %v4803 = vadd.f32 %v4743, %v4768
      %v4804 = vadd.f32 %v4744, %v4774
      %v4805 = vadd.f32 %v4745, %v4781
      %v4806 = vadd.f32 %v4746, %v4787
      %v4807 = vadd.f32 %v4747, %v4794
      %v4808 = vadd.f32 %v4748, %v4800
      %v4809 = vrot.slane %v4805, 4
      %v4810 = vsel %vm268, %v4809, %v4801
      %v4811 = vrot.slane %v4801, 4
      %v4812 = vsel %vm268, %v4805, %v4811
      %v4814 = vunpack.c.l.s4 1983009808
      %v4815 = vunpack.c.0.s8 %v4814
      %v4816 = vperm.slane %v4810, %v4815
      %v4818 = vunpack.c.l.s4 1983009808
      %v4819 = vunpack.c.0.s8 %v4818
      %v4820 = vperm.slane %v4812, %v4819
      %v4821 = vrot.slane %v4807, 4
      %v4822 = vsel %vm268, %v4821, %v4803
      %v4823 = vrot.slane %v4803, 4
      %v4824 = vsel %vm268, %v4807, %v4823
      %v4826 = vunpack.c.l.s4 1983009808
      %v4827 = vunpack.c.0.s8 %v4826
      %v4828 = vperm.slane %v4822, %v4827
      %v4830 = vunpack.c.l.s4 1983009808
      %v4831 = vunpack.c.0.s8 %v4830
      %v4832 = vperm.slane %v4824, %v4831
      %v4833 = vrot.slane %v4828, 4
      %v4834 = vsel %vm268, %v4833, %v4816
      %v4835 = vrot.slane %v4816, 4
      %v4836 = vsel %vm268, %v4828, %v4835
      %v4838 = vunpack.c.l.s4 1934713408
      %v4839 = vunpack.c.0.s8 %v4838
      %v4840 = vperm.slane %v4834, %v4839
      %v4842 = vunpack.c.l.s4 1934713408
      %v4843 = vunpack.c.0.s8 %v4842
      %v4844 = vperm.slane %v4836, %v4843
      %v4845 = vrot.slane %v4832, 4
      %v4846 = vsel %vm268, %v4845, %v4820
      %v4847 = vrot.slane %v4820, 4
      %v4848 = vsel %vm268, %v4832, %v4847
      %v4850 = vunpack.c.l.s4 1934713408
      %v4851 = vunpack.c.0.s8 %v4850
      %v4852 = vperm.slane %v4846, %v4851
      %v4854 = vunpack.c.l.s4 1934713408
      %v4855 = vunpack.c.0.s8 %v4854
      %v4856 = vperm.slane %v4848, %v4855
      %v4857 = vrot.slane %v4840, 4
      %v4858 = vsel %vm268, 0.0, %v4857
      %v4859 = vrot.slane %v4844, 4
      %v4860 = vsel %vm268, 0.0, %v4859
      %v4861 = vrot.slane %v4852, 4
      %v4862 = vsel %vm268, 0.0, %v4861
      %v4863 = vrot.slane %v4856, 4
      %v4864 = vsel %vm268, 0.0, %v4863
      %v4865 = vrot.slane %v4806, 4
      %v4866 = vsel %vm268, %v4865, %v4802
      %v4867 = vrot.slane %v4802, 4
      %v4868 = vsel %vm268, %v4806, %v4867
      %v4870 = vunpack.c.l.s4 1983009808
      %v4871 = vunpack.c.0.s8 %v4870
      %v4872 = vperm.slane %v4866, %v4871
      %v4874 = vunpack.c.l.s4 1983009808
      %v4875 = vunpack.c.0.s8 %v4874
      %v4876 = vperm.slane %v4868, %v4875
      %v4877 = vrot.slane %v4808, 4
      %v4878 = vsel %vm268, %v4877, %v4804
      %v4879 = vrot.slane %v4804, 4
      %v4880 = vsel %vm268, %v4808, %v4879
      %v4882 = vunpack.c.l.s4 1983009808
      %v4883 = vunpack.c.0.s8 %v4882
      %v4884 = vperm.slane %v4878, %v4883
      %v4886 = vunpack.c.l.s4 1983009808
      %v4887 = vunpack.c.0.s8 %v4886
      %v4888 = vperm.slane %v4880, %v4887
      %v4889 = vrot.slane %v4884, 4
      %v4890 = vsel %vm268, %v4889, %v4872
      %v4891 = vrot.slane %v4872, 4
      %v4892 = vsel %vm268, %v4884, %v4891
      %v4894 = vunpack.c.l.s4 1934713408
      %v4895 = vunpack.c.0.s8 %v4894
      %v4896 = vperm.slane %v4890, %v4895
      %v4898 = vunpack.c.l.s4 1934713408
      %v4899 = vunpack.c.0.s8 %v4898
      %v4900 = vperm.slane %v4892, %v4899
      %v4901 = vrot.slane %v4888, 4
      %v4902 = vsel %vm268, %v4901, %v4876
      %v4903 = vrot.slane %v4876, 4
      %v4904 = vsel %vm268, %v4888, %v4903
      %v4906 = vunpack.c.l.s4 1934713408
      %v4907 = vunpack.c.0.s8 %v4906
      %v4908 = vperm.slane %v4902, %v4907
      %v4910 = vunpack.c.l.s4 1934713408
      %v4911 = vunpack.c.0.s8 %v4910
      %v4912 = vperm.slane %v4904, %v4911
      %v4913 = vrot.slane %v4896, 4
      %v4914 = vsel %vm268, 0.0, %v4913
      %v4915 = vrot.slane %v4900, 4
      %v4916 = vsel %vm268, 0.0, %v4915
      %v4917 = vrot.slane %v4908, 4
      %v4918 = vsel %vm268, 0.0, %v4917
      %v4919 = vrot.slane %v4912, 4
      %v4920 = vsel %vm268, 0.0, %v4919
      %4922 = vrot.lane.b32.xlu0 %v4858, 16
      %v4923 = vpop.permute.xlu0 %4922
      %4926 = vrot.lane.b32.xlu0 %v4844, 32
      %v4927 = vpop.permute.xlu0 %4926
      %4930 = vrot.lane.b32.xlu0 %v4860, 48
      %v4931 = vpop.permute.xlu0 %4930
      %4934 = vrot.lane.b32.xlu0 %v4852, 64
      %v4935 = vpop.permute.xlu0 %4934
      %4938 = vrot.lane.b32.xlu0 %v4862, 80
      %v4939 = vpop.permute.xlu0 %4938
      %4942 = vrot.lane.b32.xlu0 %v4856, 96
      %v4943 = vpop.permute.xlu0 %4942
      %4946 = vrot.lane.b32.xlu0 %v4864, 112
      %v4947 = vpop.permute.xlu0 %4946
      %4950 = vrot.lane.b32.xlu0 %v4914, 16
      %v4951 = vpop.permute.xlu0 %4950
      %4954 = vrot.lane.b32.xlu0 %v4900, 32
      %v4955 = vpop.permute.xlu0 %4954
      %4958 = vrot.lane.b32.xlu0 %v4916, 48
      %v4959 = vpop.permute.xlu0 %4958
      %4962 = vrot.lane.b32.xlu0 %v4908, 64
      %v4963 = vpop.permute.xlu0 %4962
      %4966 = vrot.lane.b32.xlu0 %v4918, 80
      %v4967 = vpop.permute.xlu0 %4966
      %4970 = vrot.lane.b32.xlu0 %v4912, 96
      %v4971 = vpop.permute.xlu0 %4970
      %4974 = vrot.lane.b32.xlu0 %v4920, 112
      %v4975 = vpop.permute.xlu0 %4974
      %v4977 = vsel %vm2571, %v4840, %v4923
      %v4978 = vsel %vm263, %v4977, %v4927
      %vm4979 = vcmask 392192
      %v4980 = vsel %vm4979, %v4978, %v4931
      %vm4981 = vcmask 523264
      %v4982 = vsel %vm4981, %v4980, %v4935
      %vm4983 = vcmask 654336
      %v4984 = vsel %vm4983, %v4982, %v4939
      %v4985 = vsel %vm1075, %v4984, %v4943
      %v4986 = vsel %vm690, %v4985, %v4947
      %v4987 = vsel %vm2571, %v4896, %v4951
      %v4988 = vsel %vm263, %v4987, %v4955
      %v4989 = vsel %vm4979, %v4988, %v4959
      %v4990 = vsel %vm4981, %v4989, %v4963
      %v4991 = vsel %vm4983, %v4990, %v4967
      %v4992 = vsel %vm1075, %v4991, %v4971
      %v4993 = vsel %vm690, %v4992, %v4975
      %4996 = vrot.lane.b32.xlu0 %v4986, 15
      %v4997 = vpop.permute.xlu0 %4996
      %4998 = vrot.lane.b32.xlu0 %v4993, 15
      %v4999 = vpop.permute.xlu0 %4998
      %v5000 = vsel %vm285, %v4997, %v4999
      %v5004 = vmul.f32 %v2550, %v4997
      %v5005 = vmul.f32 %v2551, %v5000
      %v5006 = vmul.f32 %v2552, %v4999
      %v5007 = vmul.f32 %v5004, 0.33333334
      %v5008 = vmul.f32 %v5005, 0.33333334
      %v5009 = vmul.f32 %v5006, 0.33333334
      %5010 = vst [vmem:[#allocation1] ss:$2 sm:$0xff] %v252
      %v5011 = vld.sshfl [vmem:[#allocation1] sm:$0xff pattern:$0x75316420]
      %v5012 = vld.sshfl [vmem:[#allocation1 + $0x8] sm:$0xff pattern:$0x75316420]
      %5013 = vrot.lane.b32.xlu0 %v5011, 15
      %v5014 = vpop.permute.xlu0 %5013
      %5015 = vrot.lane.b32.xlu0 %v5012, 15
      %v5016 = vpop.permute.xlu0 %5015
      %v5017 = vsel %vm285, %v5014, %v5016
      %v5021 = vadd.f32 %v5007, %v5014
      %v5022 = vadd.f32 %v5008, %v5017
      %v5023 = vadd.f32 %v5009, %v5016
      %v5024 = vmax.f32 %v5021, 0.0
      %v5025 = vmax.f32 %v5022, 0.0
      %v5026 = vmax.f32 %v5023, 0.0
      %v5030 = vrot.slane %v5025, 4
      %v5031 = vsel %vm280, %v5024, %v5030
      %5032 = vrot.lane.b32.xlu0 %v5031, 113
      %v5033 = vpop.permute.xlu0 %5032
      %5034 = vrot.lane.b32.xlu0 %v5026, 113
      %v5035 = vpop.permute.xlu0 %5034
      %v5036 = vrot.slane %v5033, 4
      %v5037 = vrot.slane %v5035, 4
      %v5038 = vsel %vm280, %v5036, %v5037
      %vm5039 = vcmask 924672
      %v5040 = vsel %vm5039, %v5033, %v5038
      %5042 = vst [vmem:[%s251] sm:$0xff] %v5040
      %p5043 = scmp.lt.s32.totalorder %s17, 1
      %s5044 = scalar_select %p5043, %s17, 1
      %s5045 = smul.addr %s5044, 2
      %s5046 = smul.addr %s5045, 4
      %s5047 = scalar_lea.vmem %s6, %s5046
      // Predicated region
      $region45: #{basic_block_triplet_attention.1} parent=43 // pred_check
        %p5048 = pneg %p166
      $region46: #{basic_block_triplet_attention.1} parent=43 // pred_check_branch
        %5050 = sbr.rel (%p5048) target = $region48
      $region47: #{basic_block_triplet_attention.1} parent=43 // pred_region
        _
      $region48: #{basic_block_triplet_attention.1} parent=43 // pred_fallthru
        _
    $region44: #{basic_block_triplet_attention.1} parent=5 // pred_fallthru
      _
    %p5051 = scmp.le.s32.totalorder 2, %s12
    // Predicated region
    $region49: #{basic_block_triplet_attention.1} parent=5 // pred_check
      %p5052 = pneg %p5051
    $region50: #{basic_block_triplet_attention.1} parent=5 // pred_check_branch
      %5054 = sbr.rel (%p5052) target = $region52
    $region51: #{basic_block_triplet_attention.1} parent=5 // pred_region
      %s5055 = ssub.s32 %s12, 2
      // Predicated region
      $region53: #{basic_block_triplet_attention.1} parent=51 // pred_check
        %p5056 = pneg %p172
      $region54: #{basic_block_triplet_attention.1} parent=51 // pred_check_branch
        %5058 = sbr.rel (%p5056) target = $region56
      $region55: #{basic_block_triplet_attention.1} parent=51 // pred_region
        %p5059 = scmp.lt.s32.totalorder %s18, 1
        %s5060 = scalar_select %p5059, %s18, 1
        %s5061 = smul.addr %s5060, 2
        %s5062 = smul.addr %s5061, 4
        %s5063 = scalar_lea.vmem %s6, %s5062
      $region56: #{basic_block_triplet_attention.1} parent=51 // pred_fallthru
        _
    $region52: #{basic_block_triplet_attention.1} parent=5 // pred_fallthru
      _
  $region6: #{basic_block_triplet_attention.1} parent=0 // loop_footer
    %s16 = sadd.s32 1, %s12
  $region7: #{basic_block_triplet_attention.1} parent=0 // loop_footer_branch
    %11 = sbr.rel target = $region3
  $region8: #{basic_block_triplet_attention.1} parent=0 // loop_exit
    _

</llo_original>
